<compile_context>
chip_gen: v5e
topology: v5e:2x2
jax: 0.10.0
libtpu: 0.0.40
codegen_flags: <defaults>
</compile_context>

<pallas_src>
import functools
import math

import jax
import jax.numpy as jnp
from jax import lax
from jax.experimental import pallas as pl
from jax.experimental.pallas import tpu as pltpu


def _round_up(x, m):
    return ((x + m - 1) // m) * m


def _const_spec(shape):
    """BlockSpec for a grid-invariant (constant-index) operand.

    Single-buffered (pl.Buffered(1)): the weights are resident ONCE in VMEM
    instead of the default double buffer, halving weight VMEM (critical for
    realistic H on v7x's 64 MiB VMEM).  Falls back to a plain spec if this JAX
    version does not accept pipeline_mode.
    """
    index_map = lambda *_: (0,) * len(shape)
    if hasattr(pl, "Buffered"):
        try:
            return pl.BlockSpec(shape, index_map, pipeline_mode=pl.Buffered(1))
        except (TypeError, ValueError):
            pass
    return pl.BlockSpec(shape, index_map)


def _vmem_estimate_bytes(t_block, b_tile, I_pad, H_pad, out_dim, with_head,
                         x_itemsize, w_itemsize, out_itemsize, xproj_itemsize):
    """Rough per-grid-step VMEM residency of one layer's pallas_call."""
    H4 = 4 * H_pad
    est = 0
    est += 2 * t_block * b_tile * I_pad * x_itemsize            # x (double buffer)
    est += 2 * t_block * b_tile * out_dim * out_itemsize        # out (double buffer)
    est += (I_pad * H4 + H_pad * H4 + H4) * w_itemsize          # weights (Buffered(1))
    if with_head:
        est += (H_pad * out_dim + out_dim) * w_itemsize
    est += 2 * b_tile * H_pad * 4                               # h, c carries (f32)
    est += t_block * b_tile * H4 * xproj_itemsize               # xproj scratch
    if with_head:
        est += t_block * b_tile * H_pad * 4                     # hbuf scratch (f32)
    return est


# ---------------------------------------------------------------------------
# LSTM chunk kernel: one grid step = one (batch_tile, time_chunk) pair.
# h/c carried in VMEM scratch across the (sequential) time-chunk axis.
# ---------------------------------------------------------------------------
def _lstm_chunk_kernel(*refs, with_head, unroll, carry_in_vregs):
    if with_head:
        (x_ref, w_ih_ref, w_hh_ref, b_ref, lin_w_ref, lin_b_ref,
         out_ref, h_ref, c_ref, xproj_ref, hbuf_ref) = refs
    else:
        (x_ref, w_ih_ref, w_hh_ref, b_ref,
         out_ref, h_ref, c_ref, xproj_ref) = refs
        hbuf_ref = out_ref

    # NOTE: this reset relies on the time-chunk axis being the LAST (innermost,
    # "arbitrary"/sequential) grid dimension so every batch tile sees its time
    # chunks back-to-back on one core.  Do not reorder the grid.
    t_chunk = pl.program_id(1)

    @pl.when(t_chunk == 0)
    def _():
        h_ref[...] = jnp.zeros_like(h_ref)
        c_ref[...] = jnp.zeros_like(c_ref)

    T, Bt, I_pad = x_ref.shape
    H_pad = h_ref.shape[-1]
    mxu_dt = w_ih_ref.dtype  # bf16 on the default fast path, f32 if requested.

    # --- Input projection for the whole chunk, hoisted out of the recurrence:
    # one (T*Bt, I_pad) x (I_pad, 4*H_pad) MXU GEMM, bias folded in once.
    x_rows = x_ref[...].reshape(T * Bt, I_pad)
    xproj_ref[...] = (
        jnp.dot(x_rows.astype(mxu_dt), w_ih_ref[...],
                preferred_element_type=jnp.float32)
        + b_ref[...]
    ).astype(xproj_ref.dtype)

    def gate_math(h, c, t):
        row0 = pl.multiple_of(t * Bt, 8)
        gates = xproj_ref[pl.ds(row0, Bt), :].astype(jnp.float32) + jnp.dot(
            h.astype(mxu_dt), w_hh_ref[...],
            preferred_element_type=jnp.float32)
        # Gate slabs are lane-aligned (each H_pad wide, offsets multiples of
        # 128): pure vreg slices, no XLU relayout.
        i_g = jax.nn.sigmoid(gates[:, 0 * H_pad:1 * H_pad])
        f_g = jax.nn.sigmoid(gates[:, 1 * H_pad:2 * H_pad])
        g_g = jnp.tanh(gates[:, 2 * H_pad:3 * H_pad])
        o_g = jax.nn.sigmoid(gates[:, 3 * H_pad:4 * H_pad])
        c_new = f_g * c + i_g * g_g
        h_new = o_g * jnp.tanh(c_new)
        return h_new, c_new

    # TODO(synk): on v6e/v7x, hold W_hh resident in the MXU across the time
    # loop (pltpu.matmul_push_rhs once per chunk in <=256-wide N slabs, then
    # matmul_acc_lhs/matmul_pop per step) to remove the per-step weight push at
    # small b_tile; and fuse layers into one kernel to drop the remaining
    # inter-layer HBM round trip.
    if carry_in_vregs:
        def step(t, carry):
            h, c = carry
            h_new, c_new = gate_math(h, c, t)
            hbuf_ref[t] = h_new.astype(hbuf_ref.dtype)
            return h_new, c_new

        h_fin, c_fin = lax.fori_loop(0, T, step, (h_ref[...], c_ref[...]),
                                     unroll=unroll)
        h_ref[...] = h_fin
        c_ref[...] = c_fin
    else:
        # Large b_tile*H_pad: keep h/c in VMEM scratch inside the loop so the
        # unrolled iterations do not spill the 64-vreg file.
        def step(t, _):
            h_new, c_new = gate_math(h_ref[...], c_ref[...], t)
            h_ref[...] = h_new
            c_ref[...] = c_new
            hbuf_ref[t] = h_new.astype(hbuf_ref.dtype)
            return 0

        lax.fori_loop(0, T, step, 0, unroll=unroll)

    if with_head:
        # --- Fused Softplus + Linear head over the whole chunk (lane-dense).
        hs = hbuf_ref[...].reshape(T * Bt, H_pad)
        # PyTorch Softplus(beta=1, threshold=20): identity above the threshold.
        sp = jnp.where(hs > 20.0, hs, jnp.log1p(jnp.exp(jnp.minimum(hs, 20.0))))
        head = jnp.dot(sp.astype(lin_w_ref.dtype), lin_w_ref[...],
                       preferred_element_type=jnp.float32) + lin_b_ref[...]
        out_ref[...] = head.reshape(T, Bt, lin_w_ref.shape[1]).astype(out_ref.dtype)


def _lstm_layer(x, w_ih, w_hh, b, *, lin_w, lin_b, t_block, b_tile,
                out_dtype, xproj_dtype):
    """x: (S_pad, B_pad, I_pad). Returns (S_pad, B_pad, H_pad) (intermediate
    layer, dtype=out_dtype) or (S_pad, B_pad, O_pad) f32 if the head is fused."""
    S_pad, B_pad, I_pad = x.shape
    H_pad = w_hh.shape[0]
    H4 = w_hh.shape[1]
    with_head = lin_w is not None
    out_dim = lin_w.shape[1] if with_head else H_pad
    assert S_pad % t_block == 0 and B_pad % b_tile == 0

    # Time chunks must stay the innermost (sequential) grid axis.
    grid = (B_pad // b_tile, S_pad // t_block)

    in_specs = [
        pl.BlockSpec((t_block, b_tile, I_pad), lambda bt, tc: (tc, bt, 0)),
        _const_spec((I_pad, H4)),
        _const_spec((H_pad, H4)),
        _const_spec((1, H4)),
    ]
    args = [x, w_ih, w_hh, b]
    if with_head:
        in_specs += [_const_spec((H_pad, out_dim)), _const_spec((1, out_dim))]
        args += [lin_w, lin_b]

    scratch = [
        pltpu.VMEM((b_tile, H_pad), jnp.float32),               # h carry (f32)
        pltpu.VMEM((b_tile, H_pad), jnp.float32),               # c carry (f32)
        pltpu.VMEM((t_block * b_tile, H4), xproj_dtype),        # chunk x-projection
    ]
    if with_head:
        scratch.append(pltpu.VMEM((t_block, b_tile, H_pad), jnp.float32))

    # Vreg-pressure heuristic: gates + h + c live values ~ 24*b_tile*H_pad B.
    carry_in_vregs = 24 * b_tile * H_pad <= 128 * 1024
    unroll = True if t_block <= 8 else 4

    est = _vmem_estimate_bytes(
        t_block, b_tile, I_pad, H_pad, out_dim, with_head,
        x_itemsize=jnp.dtype(x.dtype).itemsize,
        w_itemsize=jnp.dtype(w_ih.dtype).itemsize,
        out_itemsize=jnp.dtype(out_dtype).itemsize,
        xproj_itemsize=jnp.dtype(xproj_dtype).itemsize)
    # Explicit scoped-VMEM limit sized to the actual buffers (+50% headroom),
    # floored at 32 MiB and capped below v5e/v6e's 128 MiB; the tile chooser
    # keeps `est` small enough that the limit also fits v7x's 64 MiB VMEM.
    vmem_limit = int(min(max(est * 3 // 2 + (8 << 20), 32 << 20), 100 << 20))

    kernel = functools.partial(_lstm_chunk_kernel, with_head=with_head,
                               unroll=unroll, carry_in_vregs=carry_in_vregs)

    return pl.pallas_call(
        kernel,
        out_shape=jax.ShapeDtypeStruct((S_pad, B_pad, out_dim), out_dtype),
        grid_spec=pltpu.PrefetchScalarGridSpec(
            num_scalar_prefetch=0,
            grid=grid,
            in_specs=in_specs,
            out_specs=pl.BlockSpec((t_block, b_tile, out_dim),
                                   lambda bt, tc: (tc, bt, 0)),
            scratch_shapes=scratch,
        ),
        compiler_params=pltpu.CompilerParams(
            # Batch tiles are independent ("parallel": v7x can split them
            # across its two TensorCores); the time-chunk axis is a recurrence
            # -> "arbitrary"/sequential and must remain innermost.
            dimension_semantics=("parallel", "arbitrary"),
            vmem_limit_bytes=vmem_limit,
        ),
    )(*args)


# ---------------------------------------------------------------------------
# Full LstmRNN forward.
# ---------------------------------------------------------------------------
def lstm_rnn_forward(x, kparams, *, t_block=None, b_tile=None,
                     vmem_budget_bytes=36 << 20, min_batch_tiles=1):
    """x: (S, B, input_size) float32 -> (S, B, output_size) float32.

    min_batch_tiles=2 is recommended on v7x (2 TensorCores/chip) when the real
    batch is large enough; on v5e/v6e prefer fewer, fatter batch tiles.
    """
    S, B, I = x.shape
    layers = kparams["lstm"]
    n_layers = len(layers)
    H_pad = layers[0][1].shape[0]
    I_pad0 = layers[0][0].shape[0]
    O_pad = kparams["lin_w"].shape[1]
    w_itemsize = jnp.dtype(layers[0][0].dtype).itemsize
    act_dtype = kparams["act_dtype"]
    xproj_dtype = act_dtype  # bf16 halves the biggest scratch on the fast path.

    if b_tile is None:
        # Fatten b_tile toward the MXU height (<=256) before making more batch
        # tiles (the recurrent h@W_hh GEMM has M = b_tile).
        b_tile = min(_round_up(B, 8), 256)
        while (min_batch_tiles > 1 and b_tile > 8
               and _round_up(B, b_tile) // b_tile < min_batch_tiles):
            b_tile = _round_up(max(b_tile // 2, 8), 8)
    B_pad = _round_up(B, b_tile)

    if t_block is None:
        # Large time chunks amortize per-grid-step overhead (~0.35us) and give
        # the hoisted xproj GEMM M = t_block*b_tile >= 256; shrink until the
        # worst layer's VMEM estimate fits the budget (default 36 MiB, which
        # also keeps the derived vmem_limit under v7x's 64 MiB VMEM).
        t_block = min(_round_up(S, 8), 64)
        while t_block > 8:
            worst = 0
            for li in range(n_layers):
                I_pad = I_pad0 if li == 0 else H_pad
                with_head = li == n_layers - 1
                out_dim = O_pad if with_head else H_pad
                x_isz = 4 if li == 0 else jnp.dtype(act_dtype).itemsize
                o_isz = 4 if with_head else jnp.dtype(act_dtype).itemsize
                worst = max(worst, _vmem_estimate_bytes(
                    t_block, b_tile, I_pad, H_pad, out_dim, with_head,
                    x_itemsize=x_isz, w_itemsize=w_itemsize,
                    out_itemsize=o_isz,
                    xproj_itemsize=jnp.dtype(xproj_dtype).itemsize))
            if worst <= vmem_budget_bytes:
                break
            t_block = max(8, t_block // 2)
    S_pad = _round_up(S, t_block)

    # Zero-pad time / batch / feature dims to (8, 128)-friendly sizes.  Padded
    # lanes/rows stay exactly zero through the recurrence and are sliced off.
    xp = jnp.zeros((S_pad, B_pad, I_pad0), jnp.float32)
    xp = xp.at[:S, :B, :I].set(x.astype(jnp.float32))

    h = xp
    for li, (w_ih, w_hh, b) in enumerate(layers):
        last = li == n_layers - 1
        h = _lstm_layer(
            h, w_ih, w_hh, b,
            lin_w=kparams["lin_w"] if last else None,
            lin_b=kparams["lin_b"] if last else None,
            t_block=t_block, b_tile=b_tile,
            # Intermediate activations are emitted in the weight dtype (bf16 on
            # the default path): the next layer casts to it anyway and it
            # halves inter-layer HBM traffic.  Final output stays f32.
            out_dtype=jnp.float32 if last else act_dtype,
            xproj_dtype=xproj_dtype)

    return h[:S, :B, :kparams["out_dim"]].astype(jnp.float32)


# ---------------------------------------------------------------------------
# Parameter init (PyTorch-style uniform ranges) + kernel-layout preparation.
# ---------------------------------------------------------------------------
def init_params(key, input_size, hidden_size, output_size, num_layers):
    """Raw PyTorch-shaped parameters (used by the pure-JAX reference)."""
    params = {"lstm": []}
    k = 1.0 / math.sqrt(hidden_size)
    for layer in range(num_layers):
        in_sz = input_size if layer == 0 else hidden_size
        key, k1, k2, k3, k4 = jax.random.split(key, 5)
        w_ih = jax.random.uniform(k1, (4 * hidden_size, in_sz), jnp.float32, -k, k)
        w_hh = jax.random.uniform(k2, (4 * hidden_size, hidden_size), jnp.float32, -k, k)
        b_ih = jax.random.uniform(k3, (4 * hidden_size,), jnp.float32, -k, k)
        b_hh = jax.random.uniform(k4, (4 * hidden_size,), jnp.float32, -k, k)
        params["lstm"].append((w_ih, w_hh, b_ih, b_hh))
    key, k5, k6 = jax.random.split(key, 3)
    params["lin_w"] = jax.random.uniform(k5, (output_size, hidden_size), jnp.float32, -k, k)
    params["lin_b"] = jax.random.uniform(k6, (output_size,), jnp.float32, -k, k)
    return params


def _pad_gate_lanes(w, H, H_pad):
    """(rows, 4H) with gate order [i|f|g|o] -> (rows, 4*H_pad) with each gate
    slab starting at a 128-aligned lane offset (zero padding elsewhere).
    For H that is a multiple of 128 this is a no-op layout; for small/odd H it
    trades one-time padding for inflated MXU/DMA work (acceptable at demo H)."""
    rows = w.shape[0]
    out = jnp.zeros((rows, 4 * H_pad), w.dtype)
    for g in range(4):
        out = out.at[:, g * H_pad:g * H_pad + H].set(w[:, g * H:(g + 1) * H])
    return out


def prepare_kernel_params(params, dtype=jnp.bfloat16):
    """Transpose / zero-pad params into the lane-aligned kernel layout.

    Default dtype=bfloat16: native MXU dtype on v5e/v6e/v7x, halves weight
    VMEM/DMA and inter-layer activation traffic (accumulation stays f32).
    Pass dtype=jnp.float32 to reproduce PyTorch numerics exactly."""
    H = params["lstm"][0][1].shape[1]
    O = params["lin_w"].shape[0]
    H_pad = _round_up(H, 128)
    O_pad = _round_up(O, 128)
    is_bf16 = jnp.dtype(dtype) == jnp.dtype(jnp.bfloat16)

    layers = []
    for (w_ih, w_hh, b_ih, b_hh) in params["lstm"]:
        in_sz = w_ih.shape[1]
        in_pad = _round_up(in_sz, 128)
        w_ih_t = jnp.zeros((in_pad, 4 * H), jnp.float32).at[:in_sz, :].set(w_ih.T)
        w_ih_t = _pad_gate_lanes(w_ih_t, H, H_pad)            # (in_pad, 4*H_pad)
        w_hh_t = jnp.zeros((H_pad, 4 * H), jnp.float32).at[:H, :].set(w_hh.T)
        w_hh_t = _pad_gate_lanes(w_hh_t, H, H_pad)            # (H_pad, 4*H_pad)
        b = _pad_gate_lanes((b_ih + b_hh).reshape(1, 4 * H), H, H_pad)
        layers.append((w_ih_t.astype(dtype), w_hh_t.astype(dtype),
                       b.astype(jnp.float32)))

    lin_w = jnp.zeros((H_pad, O_pad), jnp.float32).at[:H, :O].set(params["lin_w"].T)
    lin_b = jnp.zeros((1, O_pad), jnp.float32).at[0, :O].set(params["lin_b"])
    return {"lstm": layers,
            "lin_w": lin_w.astype(dtype),
            "lin_b": lin_b,
            "act_dtype": jnp.bfloat16 if is_bf16 else jnp.float32,
            "H_pad": H_pad, "O_pad": O_pad, "out_dim": O}


# ---------------------------------------------------------------------------
# Pure-JAX reference with identical (f32, PyTorch) semantics.
# ---------------------------------------------------------------------------
def reference_forward(x, params):
    S, B, _ = x.shape
    h_seq = x
    for (w_ih, w_hh, b_ih, b_hh) in params["lstm"]:
        H = w_hh.shape[1]
        h = jnp.zeros((B, H), jnp.float32)
        c = jnp.zeros((B, H), jnp.float32)
        outs = []
        for t in range(S):
            gates = h_seq[t] @ w_ih.T + h @ w_hh.T + b_ih + b_hh
            i_g = jax.nn.sigmoid(gates[:, 0:H])
            f_g = jax.nn.sigmoid(gates[:, H:2 * H])
            g_g = jnp.tanh(gates[:, 2 * H:3 * H])
            o_g = jax.nn.sigmoid(gates[:, 3 * H:4 * H])
            c = f_g * c + i_g * g_g
            h = o_g * jnp.tanh(c)
            outs.append(h)
        h_seq = jnp.stack(outs, axis=0)
    y = h_seq
    sp = jnp.where(y > 20.0, y, jnp.log1p(jnp.exp(jnp.minimum(y, 20.0))))
    return sp @ params["lin_w"].T + params["lin_b"]


if __name__ == "__main__":
    input_size, hidden_size, output_size, num_layers = 4, 32, 1, 2
    seq_len, batch = 8, 2

    key = jax.random.PRNGKey(0)
    key, kx = jax.random.split(key)
    x = jax.random.normal(kx, (seq_len, batch, input_size), jnp.float32)

    params = init_params(key, input_size, hidden_size, output_size, num_layers)
    ref = reference_forward(x, params)

    # f32-weight config: exact PyTorch numerics (verification path).
    kparams_f32 = prepare_kernel_params(params, dtype=jnp.float32)
    out_f32 = jax.block_until_ready(
        jax.jit(lambda xx: lstm_rnn_forward(xx, kparams_f32))(x))
    assert out_f32.shape == (seq_len, batch, output_size), out_f32.shape
    err_f32 = float(jnp.max(jnp.abs(out_f32 - ref)))
    assert jnp.allclose(out_f32, ref, rtol=1e-4, atol=1e-4), err_f32

    # bf16-weight config: the default fast-MXU / low-VMEM path for v5e/v6e/v7x
    # (loose tolerance: bf16 operands, f32 accumulation).
    kparams_bf16 = prepare_kernel_params(params)  # dtype=bfloat16 by default
    out_bf16 = jax.block_until_ready(
        jax.jit(lambda xx: lstm_rnn_forward(xx, kparams_bf16))(x))
    err_bf16 = float(jnp.max(jnp.abs(out_bf16 - ref)))
    assert err_bf16 < 5e-2, err_bf16

    print("KERNEL_OK")
</pallas_src>

<mosaic_0001>
module attributes {stable_mosaic.version = 11 : i64} {
  func.func @_lstm_chunk_kernel(%arg0: i32, %arg1: i32, %arg2: memref<8x8x128xf32, #tpu.memory_space<vmem>>, %arg3: memref<128x512xf32, #tpu.memory_space<vmem>>, %arg4: memref<128x512xf32, #tpu.memory_space<vmem>>, %arg5: memref<1x512xf32, #tpu.memory_space<vmem>>, %arg6: memref<128x128xf32, #tpu.memory_space<vmem>>, %arg7: memref<1x128xf32, #tpu.memory_space<vmem>>, %arg8: memref<8x8x128xf32, #tpu.memory_space<vmem>>, %arg9: memref<8x128xf32, #tpu.memory_space<vmem>>, %arg10: memref<8x128xf32, #tpu.memory_space<vmem>>, %arg11: memref<64x512xf32, #tpu.memory_space<vmem>>, %arg12: memref<8x8x128xf32, #tpu.memory_space<vmem>>) attributes {dimension_semantics = [#tpu.dimension_semantics<parallel>, #tpu.dimension_semantics<arbitrary>], iteration_bounds = array<i64: 1, 1>, scalar_prefetch = 0 : i64, scratch_operands = 4 : i64, tpu.core_type = #tpu.core_type<tc>, window_params = [{transform_indices = @transform_0, window_bounds = array<i64: 8, 8, 128>}, {pipeline_mode = #tpu.pipeline_mode<synchronous>, transform_indices = @transform_1, window_bounds = array<i64: 128, 512>}, {pipeline_mode = #tpu.pipeline_mode<synchronous>, transform_indices = @transform_2, window_bounds = array<i64: 128, 512>}, {pipeline_mode = #tpu.pipeline_mode<synchronous>, transform_indices = @transform_3, window_bounds = array<i64: 1, 512>}, {pipeline_mode = #tpu.pipeline_mode<synchronous>, transform_indices = @transform_4, window_bounds = array<i64: 128, 128>}, {pipeline_mode = #tpu.pipeline_mode<synchronous>, transform_indices = @transform_5, window_bounds = array<i64: 1, 128>}, {transform_indices = @transform_6, window_bounds = array<i64: 8, 8, 128>}]} {
    %c0_i32 = arith.constant 0 : i32
    %0 = arith.cmpi eq, %arg1, %c0_i32 : i32
    %1 = arith.extui %0 : i1 to i32
    %c0_i32_0 = arith.constant 0 : i32
    %2 = arith.cmpi ne, %1, %c0_i32_0 : i32
    scf.if %2 {
      %cst_111 = arith.constant 0.000000e+00 : f32
      %319 = vector.broadcast %cst_111 : f32 to vector<8x128xf32>
      %c0_112 = arith.constant 0 : index
      %c0_113 = arith.constant 0 : index
      %320 = vector.load %arg9[%c0_112, %c0_113] : memref<8x128xf32, #tpu.memory_space<vmem>>, vector<8x128xf32>
      tpu.vector_store %arg9[%c0_112, %c0_113], %319 {strides = array<i32>} : memref<8x128xf32, #tpu.memory_space<vmem>>, vector<8x128xf32>,
      %cst_114 = arith.constant 0.000000e+00 : f32
      %321 = vector.broadcast %cst_114 : f32 to vector<8x128xf32>
      %c0_115 = arith.constant 0 : index
      %c0_116 = arith.constant 0 : index
      %322 = vector.load %arg10[%c0_115, %c0_116] : memref<8x128xf32, #tpu.memory_space<vmem>>, vector<8x128xf32>
      tpu.vector_store %arg10[%c0_115, %c0_116], %321 {strides = array<i32>} : memref<8x128xf32, #tpu.memory_space<vmem>>, vector<8x128xf32>,
    } else {
    }
    %c0 = arith.constant 0 : index
    %c0_1 = arith.constant 0 : index
    %c0_2 = arith.constant 0 : index
    %3 = vector.load %arg2[%c0, %c0_1, %c0_2] : memref<8x8x128xf32, #tpu.memory_space<vmem>>, vector<8x8x128xf32>
    %4 = vector.shape_cast %3 : vector<8x8x128xf32> to vector<64x128xf32>
    %c0_3 = arith.constant 0 : index
    %c0_4 = arith.constant 0 : index
    %5 = vector.load %arg3[%c0_3, %c0_4] : memref<128x512xf32, #tpu.memory_space<vmem>>, vector<128x512xf32>
    %cst = arith.constant dense<0.000000e+00> : vector<64x512xf32>
    %6 = tpu.matmul %4, %5, %cst {dimension_numbers = #tpu.dot_dimension_numbers<[1], [0], [0], [1], [0, 0, 1, 1], [], []>} : vector<64x128xf32>, vector<128x512xf32>, vector<64x512xf32> -> vector<64x512xf32>
    %c0_5 = arith.constant 0 : index
    %c0_6 = arith.constant 0 : index
    %7 = vector.load %arg5[%c0_5, %c0_6] : memref<1x512xf32, #tpu.memory_space<vmem>>, vector<1x512xf32>
    %8 = vector.broadcast %7 : vector<1x512xf32> to vector<64x512xf32>
    %9 = arith.addf %6, %8 : vector<64x512xf32>
    %c0_7 = arith.constant 0 : index
    %c0_8 = arith.constant 0 : index
    %10 = vector.load %arg11[%c0_7, %c0_8] : memref<64x512xf32, #tpu.memory_space<vmem>>, vector<64x512xf32>
    tpu.vector_store %arg11[%c0_7, %c0_8], %9 {strides = array<i32>} : memref<64x512xf32, #tpu.memory_space<vmem>>, vector<64x512xf32>,
    %c0_9 = arith.constant 0 : index
    %c0_10 = arith.constant 0 : index
    %11 = vector.load %arg9[%c0_9, %c0_10] : memref<8x128xf32, #tpu.memory_space<vmem>>, vector<8x128xf32>
    %c0_11 = arith.constant 0 : index
    %c0_12 = arith.constant 0 : index
    %12 = vector.load %arg10[%c0_11, %c0_12] : memref<8x128xf32, #tpu.memory_space<vmem>>, vector<8x128xf32>
    %c0_i32_13 = arith.constant 0 : i32
    %c8_i32 = arith.constant 8 : i32
    %13 = arith.muli %c0_i32_13, %c8_i32 : i32
    %14 = tpu.assume_multiple %13, 8 : i32
    %15 = arith.index_cast %14 : i32 to index
    %c0_14 = arith.constant 0 : index
    %16 = vector.load %arg11[%15, %c0_14] : memref<64x512xf32, #tpu.memory_space<vmem>>, vector<8x512xf32>
    %c0_15 = arith.constant 0 : index
    %c0_16 = arith.constant 0 : index
    %17 = vector.load %arg4[%c0_15, %c0_16] : memref<128x512xf32, #tpu.memory_space<vmem>>, vector<128x512xf32>
    %cst_17 = arith.constant dense<0.000000e+00> : vector<8x512xf32>
    %18 = tpu.matmul %11, %17, %cst_17 {dimension_numbers = #tpu.dot_dimension_numbers<[1], [0], [0], [1], [0, 0, 1, 1], [], []>} : vector<8x128xf32>, vector<128x512xf32>, vector<8x512xf32> -> vector<8x512xf32>
    %19 = arith.addf %16, %18 : vector<8x512xf32>
    %20 = vector.extract_strided_slice %19 {offsets = [0, 0], sizes = [8, 128], strides = [1, 1]} : vector<8x512xf32> to vector<8x128xf32>
    %21 = arith.negf %20 : vector<8x128xf32>
    %22 = math.exp %21 : vector<8x128xf32>
    %cst_18 = arith.constant 1.000000e+00 : f32
    %23 = vector.broadcast %cst_18 : f32 to vector<8x128xf32>
    %24 = arith.addf %23, %22 : vector<8x128xf32>
    %25 = arith.divf %23, %24 : vector<8x128xf32>
    %26 = vector.extract_strided_slice %19 {offsets = [0, 128], sizes = [8, 128], strides = [1, 1]} : vector<8x512xf32> to vector<8x128xf32>
    %27 = arith.negf %26 : vector<8x128xf32>
    %28 = math.exp %27 : vector<8x128xf32>
    %cst_19 = arith.constant 1.000000e+00 : f32
    %29 = vector.broadcast %cst_19 : f32 to vector<8x128xf32>
    %30 = arith.addf %29, %28 : vector<8x128xf32>
    %31 = arith.divf %29, %30 : vector<8x128xf32>
    %32 = vector.extract_strided_slice %19 {offsets = [0, 256], sizes = [8, 128], strides = [1, 1]} : vector<8x512xf32> to vector<8x128xf32>
    %33 = math.tanh %32 : vector<8x128xf32>
    %34 = vector.extract_strided_slice %19 {offsets = [0, 384], sizes = [8, 128], strides = [1, 1]} : vector<8x512xf32> to vector<8x128xf32>
    %35 = arith.negf %34 : vector<8x128xf32>
    %36 = math.exp %35 : vector<8x128xf32>
    %cst_20 = arith.constant 1.000000e+00 : f32
    %37 = vector.broadcast %cst_20 : f32 to vector<8x128xf32>
    %38 = arith.addf %37, %36 : vector<8x128xf32>
    %39 = arith.divf %37, %38 : vector<8x128xf32>
    %40 = arith.mulf %31, %12 : vector<8x128xf32>
    %41 = arith.mulf %25, %33 : vector<8x128xf32>
    %42 = arith.addf %40, %41 : vector<8x128xf32>
    %43 = math.tanh %42 : vector<8x128xf32>
    %44 = arith.mulf %39, %43 : vector<8x128xf32>
    %45 = arith.index_cast %c0_i32_13 : i32 to index
    %c0_21 = arith.constant 0 : index
    %c0_22 = arith.constant 0 : index
    %46 = vector.load %arg12[%45, %c0_21, %c0_22] : memref<8x8x128xf32, #tpu.memory_space<vmem>>, vector<1x8x128xf32>
    %47 = vector.shape_cast %46 : vector<1x8x128xf32> to vector<8x128xf32>
    %48 = vector.shape_cast %44 : vector<8x128xf32> to vector<1x8x128xf32>
    tpu.vector_store %arg12[%45, %c0_21, %c0_22], %48 {strides = array<i32>} : memref<8x8x128xf32, #tpu.memory_space<vmem>>, vector<1x8x128xf32>,
    %c1_i32 = arith.constant 1 : i32
    %c8_i32_23 = arith.constant 8 : i32
    %49 = arith.muli %c1_i32, %c8_i32_23 : i32
    %50 = tpu.assume_multiple %49, 8 : i32
    %51 = arith.index_cast %50 : i32 to index
    %c0_24 = arith.constant 0 : index
    %52 = vector.load %arg11[%51, %c0_24] : memref<64x512xf32, #tpu.memory_space<vmem>>, vector<8x512xf32>
    %c0_25 = arith.constant 0 : index
    %c0_26 = arith.constant 0 : index
    %53 = vector.load %arg4[%c0_25, %c0_26] : memref<128x512xf32, #tpu.memory_space<vmem>>, vector<128x512xf32>
    %cst_27 = arith.constant dense<0.000000e+00> : vector<8x512xf32>
    %54 = tpu.matmul %44, %53, %cst_27 {dimension_numbers = #tpu.dot_dimension_numbers<[1], [0], [0], [1], [0, 0, 1, 1], [], []>} : vector<8x128xf32>, vector<128x512xf32>, vector<8x512xf32> -> vector<8x512xf32>
    %55 = arith.addf %52, %54 : vector<8x512xf32>
    %56 = vector.extract_strided_slice %55 {offsets = [0, 0], sizes = [8, 128], strides = [1, 1]} : vector<8x512xf32> to vector<8x128xf32>
    %57 = arith.negf %56 : vector<8x128xf32>
    %58 = math.exp %57 : vector<8x128xf32>
    %cst_28 = arith.constant 1.000000e+00 : f32
    %59 = vector.broadcast %cst_28 : f32 to vector<8x128xf32>
    %60 = arith.addf %59, %58 : vector<8x128xf32>
    %61 = arith.divf %59, %60 : vector<8x128xf32>
    %62 = vector.extract_strided_slice %55 {offsets = [0, 128], sizes = [8, 128], strides = [1, 1]} : vector<8x512xf32> to vector<8x128xf32>
    %63 = arith.negf %62 : vector<8x128xf32>
    %64 = math.exp %63 : vector<8x128xf32>
    %cst_29 = arith.constant 1.000000e+00 : f32
    %65 = vector.broadcast %cst_29 : f32 to vector<8x128xf32>
    %66 = arith.addf %65, %64 : vector<8x128xf32>
    %67 = arith.divf %65, %66 : vector<8x128xf32>
    %68 = vector.extract_strided_slice %55 {offsets = [0, 256], sizes = [8, 128], strides = [1, 1]} : vector<8x512xf32> to vector<8x128xf32>
    %69 = math.tanh %68 : vector<8x128xf32>
    %70 = vector.extract_strided_slice %55 {offsets = [0, 384], sizes = [8, 128], strides = [1, 1]} : vector<8x512xf32> to vector<8x128xf32>
    %71 = arith.negf %70 : vector<8x128xf32>
    %72 = math.exp %71 : vector<8x128xf32>
    %cst_30 = arith.constant 1.000000e+00 : f32
    %73 = vector.broadcast %cst_30 : f32 to vector<8x128xf32>
    %74 = arith.addf %73, %72 : vector<8x128xf32>
    %75 = arith.divf %73, %74 : vector<8x128xf32>
    %76 = arith.mulf %67, %42 : vector<8x128xf32>
    %77 = arith.mulf %61, %69 : vector<8x128xf32>
    %78 = arith.addf %76, %77 : vector<8x128xf32>
    %79 = math.tanh %78 : vector<8x128xf32>
    %80 = arith.mulf %75, %79 : vector<8x128xf32>
    %81 = arith.index_cast %c1_i32 : i32 to index
    %c0_31 = arith.constant 0 : index
    %c0_32 = arith.constant 0 : index
    %82 = vector.load %arg12[%81, %c0_31, %c0_32] : memref<8x8x128xf32, #tpu.memory_space<vmem>>, vector<1x8x128xf32>
    %83 = vector.shape_cast %82 : vector<1x8x128xf32> to vector<8x128xf32>
    %84 = vector.shape_cast %80 : vector<8x128xf32> to vector<1x8x128xf32>
    tpu.vector_store %arg12[%81, %c0_31, %c0_32], %84 {strides = array<i32>} : memref<8x8x128xf32, #tpu.memory_space<vmem>>, vector<1x8x128xf32>,
    %c2_i32 = arith.constant 2 : i32
    %c8_i32_33 = arith.constant 8 : i32
    %85 = arith.muli %c2_i32, %c8_i32_33 : i32
    %86 = tpu.assume_multiple %85, 8 : i32
    %87 = arith.index_cast %86 : i32 to index
    %c0_34 = arith.constant 0 : index
    %88 = vector.load %arg11[%87, %c0_34] : memref<64x512xf32, #tpu.memory_space<vmem>>, vector<8x512xf32>
    %c0_35 = arith.constant 0 : index
    %c0_36 = arith.constant 0 : index
    %89 = vector.load %arg4[%c0_35, %c0_36] : memref<128x512xf32, #tpu.memory_space<vmem>>, vector<128x512xf32>
    %cst_37 = arith.constant dense<0.000000e+00> : vector<8x512xf32>
    %90 = tpu.matmul %80, %89, %cst_37 {dimension_numbers = #tpu.dot_dimension_numbers<[1], [0], [0], [1], [0, 0, 1, 1], [], []>} : vector<8x128xf32>, vector<128x512xf32>, vector<8x512xf32> -> vector<8x512xf32>
    %91 = arith.addf %88, %90 : vector<8x512xf32>
    %92 = vector.extract_strided_slice %91 {offsets = [0, 0], sizes = [8, 128], strides = [1, 1]} : vector<8x512xf32> to vector<8x128xf32>
    %93 = arith.negf %92 : vector<8x128xf32>
    %94 = math.exp %93 : vector<8x128xf32>
    %cst_38 = arith.constant 1.000000e+00 : f32
    %95 = vector.broadcast %cst_38 : f32 to vector<8x128xf32>
    %96 = arith.addf %95, %94 : vector<8x128xf32>
    %97 = arith.divf %95, %96 : vector<8x128xf32>
    %98 = vector.extract_strided_slice %91 {offsets = [0, 128], sizes = [8, 128], strides = [1, 1]} : vector<8x512xf32> to vector<8x128xf32>
    %99 = arith.negf %98 : vector<8x128xf32>
    %100 = math.exp %99 : vector<8x128xf32>
    %cst_39 = arith.constant 1.000000e+00 : f32
    %101 = vector.broadcast %cst_39 : f32 to vector<8x128xf32>
    %102 = arith.addf %101, %100 : vector<8x128xf32>
    %103 = arith.divf %101, %102 : vector<8x128xf32>
    %104 = vector.extract_strided_slice %91 {offsets = [0, 256], sizes = [8, 128], strides = [1, 1]} : vector<8x512xf32> to vector<8x128xf32>
    %105 = math.tanh %104 : vector<8x128xf32>
    %106 = vector.extract_strided_slice %91 {offsets = [0, 384], sizes = [8, 128], strides = [1, 1]} : vector<8x512xf32> to vector<8x128xf32>
    %107 = arith.negf %106 : vector<8x128xf32>
    %108 = math.exp %107 : vector<8x128xf32>
    %cst_40 = arith.constant 1.000000e+00 : f32
    %109 = vector.broadcast %cst_40 : f32 to vector<8x128xf32>
    %110 = arith.addf %109, %108 : vector<8x128xf32>
    %111 = arith.divf %109, %110 : vector<8x128xf32>
    %112 = arith.mulf %103, %78 : vector<8x128xf32>
    %113 = arith.mulf %97, %105 : vector<8x128xf32>
    %114 = arith.addf %112, %113 : vector<8x128xf32>
    %115 = math.tanh %114 : vector<8x128xf32>
    %116 = arith.mulf %111, %115 : vector<8x128xf32>
    %117 = arith.index_cast %c2_i32 : i32 to index
    %c0_41 = arith.constant 0 : index
    %c0_42 = arith.constant 0 : index
    %118 = vector.load %arg12[%117, %c0_41, %c0_42] : memref<8x8x128xf32, #tpu.memory_space<vmem>>, vector<1x8x128xf32>
    %119 = vector.shape_cast %118 : vector<1x8x128xf32> to vector<8x128xf32>
    %120 = vector.shape_cast %116 : vector<8x128xf32> to vector<1x8x128xf32>
    tpu.vector_store %arg12[%117, %c0_41, %c0_42], %120 {strides = array<i32>} : memref<8x8x128xf32, #tpu.memory_space<vmem>>, vector<1x8x128xf32>,
    %c3_i32 = arith.constant 3 : i32
    %c8_i32_43 = arith.constant 8 : i32
    %121 = arith.muli %c3_i32, %c8_i32_43 : i32
    %122 = tpu.assume_multiple %121, 8 : i32
    %123 = arith.index_cast %122 : i32 to index
    %c0_44 = arith.constant 0 : index
    %124 = vector.load %arg11[%123, %c0_44] : memref<64x512xf32, #tpu.memory_space<vmem>>, vector<8x512xf32>
    %c0_45 = arith.constant 0 : index
    %c0_46 = arith.constant 0 : index
    %125 = vector.load %arg4[%c0_45, %c0_46] : memref<128x512xf32, #tpu.memory_space<vmem>>, vector<128x512xf32>
    %cst_47 = arith.constant dense<0.000000e+00> : vector<8x512xf32>
    %126 = tpu.matmul %116, %125, %cst_47 {dimension_numbers = #tpu.dot_dimension_numbers<[1], [0], [0], [1], [0, 0, 1, 1], [], []>} : vector<8x128xf32>, vector<128x512xf32>, vector<8x512xf32> -> vector<8x512xf32>
    %127 = arith.addf %124, %126 : vector<8x512xf32>
    %128 = vector.extract_strided_slice %127 {offsets = [0, 0], sizes = [8, 128], strides = [1, 1]} : vector<8x512xf32> to vector<8x128xf32>
    %129 = arith.negf %128 : vector<8x128xf32>
    %130 = math.exp %129 : vector<8x128xf32>
    %cst_48 = arith.constant 1.000000e+00 : f32
    %131 = vector.broadcast %cst_48 : f32 to vector<8x128xf32>
    %132 = arith.addf %131, %130 : vector<8x128xf32>
    %133 = arith.divf %131, %132 : vector<8x128xf32>
    %134 = vector.extract_strided_slice %127 {offsets = [0, 128], sizes = [8, 128], strides = [1, 1]} : vector<8x512xf32> to vector<8x128xf32>
    %135 = arith.negf %134 : vector<8x128xf32>
    %136 = math.exp %135 : vector<8x128xf32>
    %cst_49 = arith.constant 1.000000e+00 : f32
    %137 = vector.broadcast %cst_49 : f32 to vector<8x128xf32>
    %138 = arith.addf %137, %136 : vector<8x128xf32>
    %139 = arith.divf %137, %138 : vector<8x128xf32>
    %140 = vector.extract_strided_slice %127 {offsets = [0, 256], sizes = [8, 128], strides = [1, 1]} : vector<8x512xf32> to vector<8x128xf32>
    %141 = math.tanh %140 : vector<8x128xf32>
    %142 = vector.extract_strided_slice %127 {offsets = [0, 384], sizes = [8, 128], strides = [1, 1]} : vector<8x512xf32> to vector<8x128xf32>
    %143 = arith.negf %142 : vector<8x128xf32>
    %144 = math.exp %143 : vector<8x128xf32>
    %cst_50 = arith.constant 1.000000e+00 : f32
    %145 = vector.broadcast %cst_50 : f32 to vector<8x128xf32>
    %146 = arith.addf %145, %144 : vector<8x128xf32>
    %147 = arith.divf %145, %146 : vector<8x128xf32>
    %148 = arith.mulf %139, %114 : vector<8x128xf32>
    %149 = arith.mulf %133, %141 : vector<8x128xf32>
    %150 = arith.addf %148, %149 : vector<8x128xf32>
    %151 = math.tanh %150 : vector<8x128xf32>
    %152 = arith.mulf %147, %151 : vector<8x128xf32>
    %153 = arith.index_cast %c3_i32 : i32 to index
    %c0_51 = arith.constant 0 : index
    %c0_52 = arith.constant 0 : index
    %154 = vector.load %arg12[%153, %c0_51, %c0_52] : memref<8x8x128xf32, #tpu.memory_space<vmem>>, vector<1x8x128xf32>
    %155 = vector.shape_cast %154 : vector<1x8x128xf32> to vector<8x128xf32>
    %156 = vector.shape_cast %152 : vector<8x128xf32> to vector<1x8x128xf32>
    tpu.vector_store %arg12[%153, %c0_51, %c0_52], %156 {strides = array<i32>} : memref<8x8x128xf32, #tpu.memory_space<vmem>>, vector<1x8x128xf32>,
    %c4_i32 = arith.constant 4 : i32
    %c8_i32_53 = arith.constant 8 : i32
    %157 = arith.muli %c4_i32, %c8_i32_53 : i32
    %158 = tpu.assume_multiple %157, 8 : i32
    %159 = arith.index_cast %158 : i32 to index
    %c0_54 = arith.constant 0 : index
    %160 = vector.load %arg11[%159, %c0_54] : memref<64x512xf32, #tpu.memory_space<vmem>>, vector<8x512xf32>
    %c0_55 = arith.constant 0 : index
    %c0_56 = arith.constant 0 : index
    %161 = vector.load %arg4[%c0_55, %c0_56] : memref<128x512xf32, #tpu.memory_space<vmem>>, vector<128x512xf32>
    %cst_57 = arith.constant dense<0.000000e+00> : vector<8x512xf32>
    %162 = tpu.matmul %152, %161, %cst_57 {dimension_numbers = #tpu.dot_dimension_numbers<[1], [0], [0], [1], [0, 0, 1, 1], [], []>} : vector<8x128xf32>, vector<128x512xf32>, vector<8x512xf32> -> vector<8x512xf32>
    %163 = arith.addf %160, %162 : vector<8x512xf32>
    %164 = vector.extract_strided_slice %163 {offsets = [0, 0], sizes = [8, 128], strides = [1, 1]} : vector<8x512xf32> to vector<8x128xf32>
    %165 = arith.negf %164 : vector<8x128xf32>
    %166 = math.exp %165 : vector<8x128xf32>
    %cst_58 = arith.constant 1.000000e+00 : f32
    %167 = vector.broadcast %cst_58 : f32 to vector<8x128xf32>
    %168 = arith.addf %167, %166 : vector<8x128xf32>
    %169 = arith.divf %167, %168 : vector<8x128xf32>
    %170 = vector.extract_strided_slice %163 {offsets = [0, 128], sizes = [8, 128], strides = [1, 1]} : vector<8x512xf32> to vector<8x128xf32>
    %171 = arith.negf %170 : vector<8x128xf32>
    %172 = math.exp %171 : vector<8x128xf32>
    %cst_59 = arith.constant 1.000000e+00 : f32
    %173 = vector.broadcast %cst_59 : f32 to vector<8x128xf32>
    %174 = arith.addf %173, %172 : vector<8x128xf32>
    %175 = arith.divf %173, %174 : vector<8x128xf32>
    %176 = vector.extract_strided_slice %163 {offsets = [0, 256], sizes = [8, 128], strides = [1, 1]} : vector<8x512xf32> to vector<8x128xf32>
    %177 = math.tanh %176 : vector<8x128xf32>
    %178 = vector.extract_strided_slice %163 {offsets = [0, 384], sizes = [8, 128], strides = [1, 1]} : vector<8x512xf32> to vector<8x128xf32>
    %179 = arith.negf %178 : vector<8x128xf32>
    %180 = math.exp %179 : vector<8x128xf32>
    %cst_60 = arith.constant 1.000000e+00 : f32
    %181 = vector.broadcast %cst_60 : f32 to vector<8x128xf32>
    %182 = arith.addf %181, %180 : vector<8x128xf32>
    %183 = arith.divf %181, %182 : vector<8x128xf32>
    %184 = arith.mulf %175, %150 : vector<8x128xf32>
    %185 = arith.mulf %169, %177 : vector<8x128xf32>
    %186 = arith.addf %184, %185 : vector<8x128xf32>
    %187 = math.tanh %186 : vector<8x128xf32>
    %188 = arith.mulf %183, %187 : vector<8x128xf32>
    %189 = arith.index_cast %c4_i32 : i32 to index
    %c0_61 = arith.constant 0 : index
    %c0_62 = arith.constant 0 : index
    %190 = vector.load %arg12[%189, %c0_61, %c0_62] : memref<8x8x128xf32, #tpu.memory_space<vmem>>, vector<1x8x128xf32>
    %191 = vector.shape_cast %190 : vector<1x8x128xf32> to vector<8x128xf32>
    %192 = vector.shape_cast %188 : vector<8x128xf32> to vector<1x8x128xf32>
    tpu.vector_store %arg12[%189, %c0_61, %c0_62], %192 {strides = array<i32>} : memref<8x8x128xf32, #tpu.memory_space<vmem>>, vector<1x8x128xf32>,
    %c5_i32 = arith.constant 5 : i32
    %c8_i32_63 = arith.constant 8 : i32
    %193 = arith.muli %c5_i32, %c8_i32_63 : i32
    %194 = tpu.assume_multiple %193, 8 : i32
    %195 = arith.index_cast %194 : i32 to index
    %c0_64 = arith.constant 0 : index
    %196 = vector.load %arg11[%195, %c0_64] : memref<64x512xf32, #tpu.memory_space<vmem>>, vector<8x512xf32>
    %c0_65 = arith.constant 0 : index
    %c0_66 = arith.constant 0 : index
    %197 = vector.load %arg4[%c0_65, %c0_66] : memref<128x512xf32, #tpu.memory_space<vmem>>, vector<128x512xf32>
    %cst_67 = arith.constant dense<0.000000e+00> : vector<8x512xf32>
    %198 = tpu.matmul %188, %197, %cst_67 {dimension_numbers = #tpu.dot_dimension_numbers<[1], [0], [0], [1], [0, 0, 1, 1], [], []>} : vector<8x128xf32>, vector<128x512xf32>, vector<8x512xf32> -> vector<8x512xf32>
    %199 = arith.addf %196, %198 : vector<8x512xf32>
    %200 = vector.extract_strided_slice %199 {offsets = [0, 0], sizes = [8, 128], strides = [1, 1]} : vector<8x512xf32> to vector<8x128xf32>
    %201 = arith.negf %200 : vector<8x128xf32>
    %202 = math.exp %201 : vector<8x128xf32>
    %cst_68 = arith.constant 1.000000e+00 : f32
    %203 = vector.broadcast %cst_68 : f32 to vector<8x128xf32>
    %204 = arith.addf %203, %202 : vector<8x128xf32>
    %205 = arith.divf %203, %204 : vector<8x128xf32>
    %206 = vector.extract_strided_slice %199 {offsets = [0, 128], sizes = [8, 128], strides = [1, 1]} : vector<8x512xf32> to vector<8x128xf32>
    %207 = arith.negf %206 : vector<8x128xf32>
    %208 = math.exp %207 : vector<8x128xf32>
    %cst_69 = arith.constant 1.000000e+00 : f32
    %209 = vector.broadcast %cst_69 : f32 to vector<8x128xf32>
    %210 = arith.addf %209, %208 : vector<8x128xf32>
    %211 = arith.divf %209, %210 : vector<8x128xf32>
    %212 = vector.extract_strided_slice %199 {offsets = [0, 256], sizes = [8, 128], strides = [1, 1]} : vector<8x512xf32> to vector<8x128xf32>
    %213 = math.tanh %212 : vector<8x128xf32>
    %214 = vector.extract_strided_slice %199 {offsets = [0, 384], sizes = [8, 128], strides = [1, 1]} : vector<8x512xf32> to vector<8x128xf32>
    %215 = arith.negf %214 : vector<8x128xf32>
    %216 = math.exp %215 : vector<8x128xf32>
    %cst_70 = arith.constant 1.000000e+00 : f32
    %217 = vector.broadcast %cst_70 : f32 to vector<8x128xf32>
    %218 = arith.addf %217, %216 : vector<8x128xf32>
    %219 = arith.divf %217, %218 : vector<8x128xf32>
    %220 = arith.mulf %211, %186 : vector<8x128xf32>
    %221 = arith.mulf %205, %213 : vector<8x128xf32>
    %222 = arith.addf %220, %221 : vector<8x128xf32>
    %223 = math.tanh %222 : vector<8x128xf32>
    %224 = arith.mulf %219, %223 : vector<8x128xf32>
    %225 = arith.index_cast %c5_i32 : i32 to index
    %c0_71 = arith.constant 0 : index
    %c0_72 = arith.constant 0 : index
    %226 = vector.load %arg12[%225, %c0_71, %c0_72] : memref<8x8x128xf32, #tpu.memory_space<vmem>>, vector<1x8x128xf32>
    %227 = vector.shape_cast %226 : vector<1x8x128xf32> to vector<8x128xf32>
    %228 = vector.shape_cast %224 : vector<8x128xf32> to vector<1x8x128xf32>
    tpu.vector_store %arg12[%225, %c0_71, %c0_72], %228 {strides = array<i32>} : memref<8x8x128xf32, #tpu.memory_space<vmem>>, vector<1x8x128xf32>,
    %c6_i32 = arith.constant 6 : i32
    %c8_i32_73 = arith.constant 8 : i32
    %229 = arith.muli %c6_i32, %c8_i32_73 : i32
    %230 = tpu.assume_multiple %229, 8 : i32
    %231 = arith.index_cast %230 : i32 to index
    %c0_74 = arith.constant 0 : index
    %232 = vector.load %arg11[%231, %c0_74] : memref<64x512xf32, #tpu.memory_space<vmem>>, vector<8x512xf32>
    %c0_75 = arith.constant 0 : index
    %c0_76 = arith.constant 0 : index
    %233 = vector.load %arg4[%c0_75, %c0_76] : memref<128x512xf32, #tpu.memory_space<vmem>>, vector<128x512xf32>
    %cst_77 = arith.constant dense<0.000000e+00> : vector<8x512xf32>
    %234 = tpu.matmul %224, %233, %cst_77 {dimension_numbers = #tpu.dot_dimension_numbers<[1], [0], [0], [1], [0, 0, 1, 1], [], []>} : vector<8x128xf32>, vector<128x512xf32>, vector<8x512xf32> -> vector<8x512xf32>
    %235 = arith.addf %232, %234 : vector<8x512xf32>
    %236 = vector.extract_strided_slice %235 {offsets = [0, 0], sizes = [8, 128], strides = [1, 1]} : vector<8x512xf32> to vector<8x128xf32>
    %237 = arith.negf %236 : vector<8x128xf32>
    %238 = math.exp %237 : vector<8x128xf32>
    %cst_78 = arith.constant 1.000000e+00 : f32
    %239 = vector.broadcast %cst_78 : f32 to vector<8x128xf32>
    %240 = arith.addf %239, %238 : vector<8x128xf32>
    %241 = arith.divf %239, %240 : vector<8x128xf32>
    %242 = vector.extract_strided_slice %235 {offsets = [0, 128], sizes = [8, 128], strides = [1, 1]} : vector<8x512xf32> to vector<8x128xf32>
    %243 = arith.negf %242 : vector<8x128xf32>
    %244 = math.exp %243 : vector<8x128xf32>
    %cst_79 = arith.constant 1.000000e+00 : f32
    %245 = vector.broadcast %cst_79 : f32 to vector<8x128xf32>
    %246 = arith.addf %245, %244 : vector<8x128xf32>
    %247 = arith.divf %245, %246 : vector<8x128xf32>
    %248 = vector.extract_strided_slice %235 {offsets = [0, 256], sizes = [8, 128], strides = [1, 1]} : vector<8x512xf32> to vector<8x128xf32>
    %249 = math.tanh %248 : vector<8x128xf32>
    %250 = vector.extract_strided_slice %235 {offsets = [0, 384], sizes = [8, 128], strides = [1, 1]} : vector<8x512xf32> to vector<8x128xf32>
    %251 = arith.negf %250 : vector<8x128xf32>
    %252 = math.exp %251 : vector<8x128xf32>
    %cst_80 = arith.constant 1.000000e+00 : f32
    %253 = vector.broadcast %cst_80 : f32 to vector<8x128xf32>
    %254 = arith.addf %253, %252 : vector<8x128xf32>
    %255 = arith.divf %253, %254 : vector<8x128xf32>
    %256 = arith.mulf %247, %222 : vector<8x128xf32>
    %257 = arith.mulf %241, %249 : vector<8x128xf32>
    %258 = arith.addf %256, %257 : vector<8x128xf32>
    %259 = math.tanh %258 : vector<8x128xf32>
    %260 = arith.mulf %255, %259 : vector<8x128xf32>
    %261 = arith.index_cast %c6_i32 : i32 to index
    %c0_81 = arith.constant 0 : index
    %c0_82 = arith.constant 0 : index
    %262 = vector.load %arg12[%261, %c0_81, %c0_82] : memref<8x8x128xf32, #tpu.memory_space<vmem>>, vector<1x8x128xf32>
    %263 = vector.shape_cast %262 : vector<1x8x128xf32> to vector<8x128xf32>
    %264 = vector.shape_cast %260 : vector<8x128xf32> to vector<1x8x128xf32>
    tpu.vector_store %arg12[%261, %c0_81, %c0_82], %264 {strides = array<i32>} : memref<8x8x128xf32, #tpu.memory_space<vmem>>, vector<1x8x128xf32>,
    %c7_i32 = arith.constant 7 : i32
    %c8_i32_83 = arith.constant 8 : i32
    %265 = arith.muli %c7_i32, %c8_i32_83 : i32
    %266 = tpu.assume_multiple %265, 8 : i32
    %267 = arith.index_cast %266 : i32 to index
    %c0_84 = arith.constant 0 : index
    %268 = vector.load %arg11[%267, %c0_84] : memref<64x512xf32, #tpu.memory_space<vmem>>, vector<8x512xf32>
    %c0_85 = arith.constant 0 : index
    %c0_86 = arith.constant 0 : index
    %269 = vector.load %arg4[%c0_85, %c0_86] : memref<128x512xf32, #tpu.memory_space<vmem>>, vector<128x512xf32>
    %cst_87 = arith.constant dense<0.000000e+00> : vector<8x512xf32>
    %270 = tpu.matmul %260, %269, %cst_87 {dimension_numbers = #tpu.dot_dimension_numbers<[1], [0], [0], [1], [0, 0, 1, 1], [], []>} : vector<8x128xf32>, vector<128x512xf32>, vector<8x512xf32> -> vector<8x512xf32>
    %271 = arith.addf %268, %270 : vector<8x512xf32>
    %272 = vector.extract_strided_slice %271 {offsets = [0, 0], sizes = [8, 128], strides = [1, 1]} : vector<8x512xf32> to vector<8x128xf32>
    %273 = arith.negf %272 : vector<8x128xf32>
    %274 = math.exp %273 : vector<8x128xf32>
    %cst_88 = arith.constant 1.000000e+00 : f32
    %275 = vector.broadcast %cst_88 : f32 to vector<8x128xf32>
    %276 = arith.addf %275, %274 : vector<8x128xf32>
    %277 = arith.divf %275, %276 : vector<8x128xf32>
    %278 = vector.extract_strided_slice %271 {offsets = [0, 128], sizes = [8, 128], strides = [1, 1]} : vector<8x512xf32> to vector<8x128xf32>
    %279 = arith.negf %278 : vector<8x128xf32>
    %280 = math.exp %279 : vector<8x128xf32>
    %cst_89 = arith.constant 1.000000e+00 : f32
    %281 = vector.broadcast %cst_89 : f32 to vector<8x128xf32>
    %282 = arith.addf %281, %280 : vector<8x128xf32>
    %283 = arith.divf %281, %282 : vector<8x128xf32>
    %284 = vector.extract_strided_slice %271 {offsets = [0, 256], sizes = [8, 128], strides = [1, 1]} : vector<8x512xf32> to vector<8x128xf32>
    %285 = math.tanh %284 : vector<8x128xf32>
    %286 = vector.extract_strided_slice %271 {offsets = [0, 384], sizes = [8, 128], strides = [1, 1]} : vector<8x512xf32> to vector<8x128xf32>
    %287 = arith.negf %286 : vector<8x128xf32>
    %288 = math.exp %287 : vector<8x128xf32>
    %cst_90 = arith.constant 1.000000e+00 : f32
    %289 = vector.broadcast %cst_90 : f32 to vector<8x128xf32>
    %290 = arith.addf %289, %288 : vector<8x128xf32>
    %291 = arith.divf %289, %290 : vector<8x128xf32>
    %292 = arith.mulf %283, %258 : vector<8x128xf32>
    %293 = arith.mulf %277, %285 : vector<8x128xf32>
    %294 = arith.addf %292, %293 : vector<8x128xf32>
    %295 = math.tanh %294 : vector<8x128xf32>
    %296 = arith.mulf %291, %295 : vector<8x128xf32>
    %297 = arith.index_cast %c7_i32 : i32 to index
    %c0_91 = arith.constant 0 : index
    %c0_92 = arith.constant 0 : index
    %298 = vector.load %arg12[%297, %c0_91, %c0_92] : memref<8x8x128xf32, #tpu.memory_space<vmem>>, vector<1x8x128xf32>
    %299 = vector.shape_cast %298 : vector<1x8x128xf32> to vector<8x128xf32>
    %300 = vector.shape_cast %296 : vector<8x128xf32> to vector<1x8x128xf32>
    tpu.vector_store %arg12[%297, %c0_91, %c0_92], %300 {strides = array<i32>} : memref<8x8x128xf32, #tpu.memory_space<vmem>>, vector<1x8x128xf32>,
    %c8_i32_93 = arith.constant 8 : i32
    %c0_94 = arith.constant 0 : index
    %c0_95 = arith.constant 0 : index
    %301 = vector.load %arg9[%c0_94, %c0_95] : memref<8x128xf32, #tpu.memory_space<vmem>>, vector<8x128xf32>
    tpu.vector_store %arg9[%c0_94, %c0_95], %296 {strides = array<i32>} : memref<8x128xf32, #tpu.memory_space<vmem>>, vector<8x128xf32>,
    %c0_96 = arith.constant 0 : index
    %c0_97 = arith.constant 0 : index
    %302 = vector.load %arg10[%c0_96, %c0_97] : memref<8x128xf32, #tpu.memory_space<vmem>>, vector<8x128xf32>
    tpu.vector_store %arg10[%c0_96, %c0_97], %294 {strides = array<i32>} : memref<8x128xf32, #tpu.memory_space<vmem>>, vector<8x128xf32>,
    %c0_98 = arith.constant 0 : index
    %c0_99 = arith.constant 0 : index
    %c0_100 = arith.constant 0 : index
    %303 = vector.load %arg12[%c0_98, %c0_99, %c0_100] : memref<8x8x128xf32, #tpu.memory_space<vmem>>, vector<8x8x128xf32>
    %304 = vector.shape_cast %303 : vector<8x8x128xf32> to vector<64x128xf32>
    %cst_101 = arith.constant 2.000000e+01 : f32
    %305 = vector.broadcast %cst_101 : f32 to vector<64x128xf32>
    %306 = arith.cmpf ogt, %304, %305 : vector<64x128xf32>
    %cst_102 = arith.constant 2.000000e+01 : f32
    %307 = vector.broadcast %cst_102 : f32 to vector<64x128xf32>
    %308 = arith.minimumf %304, %307 : vector<64x128xf32>
    %309 = math.exp %308 : vector<64x128xf32>
    %310 = math.log1p %309 : vector<64x128xf32>
    %311 = arith.select %306, %304, %310 : vector<64x128xi1>, vector<64x128xf32>
    %c0_103 = arith.constant 0 : index
    %c0_104 = arith.constant 0 : index
    %312 = vector.load %arg6[%c0_103, %c0_104] : memref<128x128xf32, #tpu.memory_space<vmem>>, vector<128x128xf32>
    %cst_105 = arith.constant dense<0.000000e+00> : vector<64x128xf32>
    %313 = tpu.matmul %311, %312, %cst_105 {dimension_numbers = #tpu.dot_dimension_numbers<[1], [0], [0], [1], [0, 0, 1, 1], [], []>} : vector<64x128xf32>, vector<128x128xf32>, vector<64x128xf32> -> vector<64x128xf32>
    %c0_106 = arith.constant 0 : index
    %c0_107 = arith.constant 0 : index
    %314 = vector.load %arg7[%c0_106, %c0_107] : memref<1x128xf32, #tpu.memory_space<vmem>>, vector<1x128xf32>
    %315 = vector.broadcast %314 : vector<1x128xf32> to vector<64x128xf32>
    %316 = arith.addf %313, %315 : vector<64x128xf32>
    %317 = vector.shape_cast %316 : vector<64x128xf32> to vector<8x8x128xf32>
    %c0_108 = arith.constant 0 : index
    %c0_109 = arith.constant 0 : index
    %c0_110 = arith.constant 0 : index
    %318 = vector.load %arg8[%c0_108, %c0_109, %c0_110] : memref<8x8x128xf32, #tpu.memory_space<vmem>>, vector<8x8x128xf32>
    tpu.vector_store %arg8[%c0_108, %c0_109, %c0_110], %317 {strides = array<i32>} : memref<8x8x128xf32, #tpu.memory_space<vmem>>, vector<8x8x128xf32>,
    return
  }
  func.func @transform_0(%arg0: i32, %arg1: i32) -> (i32, i32, i32) {
    %c0_i32 = arith.constant 0 : i32
    %c0_i32_0 = arith.constant 0 : i32
    return %arg1, %arg0, %c0_i32 : i32, i32, i32
  }
  func.func @transform_1(%arg0: i32, %arg1: i32) -> (i32, i32) {
    %c0_i32 = arith.constant 0 : i32
    %c0_i32_0 = arith.constant 0 : i32
    %c0_i32_1 = arith.constant 0 : i32
    return %c0_i32, %c0_i32_0 : i32, i32
  }
  func.func @transform_2(%arg0: i32, %arg1: i32) -> (i32, i32) {
    %c0_i32 = arith.constant 0 : i32
    %c0_i32_0 = arith.constant 0 : i32
    %c0_i32_1 = arith.constant 0 : i32
    return %c0_i32, %c0_i32_0 : i32, i32
  }
  func.func @transform_3(%arg0: i32, %arg1: i32) -> (i32, i32) {
    %c0_i32 = arith.constant 0 : i32
    %c0_i32_0 = arith.constant 0 : i32
    %c0_i32_1 = arith.constant 0 : i32
    return %c0_i32, %c0_i32_0 : i32, i32
  }
  func.func @transform_4(%arg0: i32, %arg1: i32) -> (i32, i32) {
    %c0_i32 = arith.constant 0 : i32
    %c0_i32_0 = arith.constant 0 : i32
    %c0_i32_1 = arith.constant 0 : i32
    return %c0_i32, %c0_i32_0 : i32, i32
  }
  func.func @transform_5(%arg0: i32, %arg1: i32) -> (i32, i32) {
    %c0_i32 = arith.constant 0 : i32
    %c0_i32_0 = arith.constant 0 : i32
    %c0_i32_1 = arith.constant 0 : i32
    return %c0_i32, %c0_i32_0 : i32, i32
  }
  func.func @transform_6(%arg0: i32, %arg1: i32) -> (i32, i32, i32) {
    %c0_i32 = arith.constant 0 : i32
    %c0_i32_0 = arith.constant 0 : i32
    return %arg1, %arg0, %c0_i32 : i32, i32, i32
  }
}

module attributes {stable_mosaic.version = 11 : i64} {
  func.func @_lstm_chunk_kernel(%arg0: i32, %arg1: i32, %arg2: memref<8x8x128xf32, #tpu.memory_space<vmem>>, %arg3: memref<128x512xf32, #tpu.memory_space<vmem>>, %arg4: memref<128x512xf32, #tpu.memory_space<vmem>>, %arg5: memref<1x512xf32, #tpu.memory_space<vmem>>, %arg6: memref<8x8x128xf32, #tpu.memory_space<vmem>>, %arg7: memref<8x128xf32, #tpu.memory_space<vmem>>, %arg8: memref<8x128xf32, #tpu.memory_space<vmem>>, %arg9: memref<64x512xf32, #tpu.memory_space<vmem>>) attributes {dimension_semantics = [#tpu.dimension_semantics<parallel>, #tpu.dimension_semantics<arbitrary>], iteration_bounds = array<i64: 1, 1>, scalar_prefetch = 0 : i64, scratch_operands = 3 : i64, tpu.core_type = #tpu.core_type<tc>, window_params = [{transform_indices = @transform_0, window_bounds = array<i64: 8, 8, 128>}, {pipeline_mode = #tpu.pipeline_mode<synchronous>, transform_indices = @transform_1, window_bounds = array<i64: 128, 512>}, {pipeline_mode = #tpu.pipeline_mode<synchronous>, transform_indices = @transform_2, window_bounds = array<i64: 128, 512>}, {pipeline_mode = #tpu.pipeline_mode<synchronous>, transform_indices = @transform_3, window_bounds = array<i64: 1, 512>}, {transform_indices = @transform_4, window_bounds = array<i64: 8, 8, 128>}]} {
    %c0_i32 = arith.constant 0 : i32
    %0 = arith.cmpi eq, %arg1, %c0_i32 : i32
    %1 = arith.extui %0 : i1 to i32
    %c0_i32_0 = arith.constant 0 : i32
    %2 = arith.cmpi ne, %1, %c0_i32_0 : i32
    scf.if %2 {
      %cst_98 = arith.constant 0.000000e+00 : f32
      %303 = vector.broadcast %cst_98 : f32 to vector<8x128xf32>
      %c0_99 = arith.constant 0 : index
      %c0_100 = arith.constant 0 : index
      %304 = vector.load %arg7[%c0_99, %c0_100] : memref<8x128xf32, #tpu.memory_space<vmem>>, vector<8x128xf32>
      tpu.vector_store %arg7[%c0_99, %c0_100], %303 {strides = array<i32>} : memref<8x128xf32, #tpu.memory_space<vmem>>, vector<8x128xf32>,
      %cst_101 = arith.constant 0.000000e+00 : f32
      %305 = vector.broadcast %cst_101 : f32 to vector<8x128xf32>
      %c0_102 = arith.constant 0 : index
      %c0_103 = arith.constant 0 : index
      %306 = vector.load %arg8[%c0_102, %c0_103] : memref<8x128xf32, #tpu.memory_space<vmem>>, vector<8x128xf32>
      tpu.vector_store %arg8[%c0_102, %c0_103], %305 {strides = array<i32>} : memref<8x128xf32, #tpu.memory_space<vmem>>, vector<8x128xf32>,
    } else {
    }
    %c0 = arith.constant 0 : index
    %c0_1 = arith.constant 0 : index
    %c0_2 = arith.constant 0 : index
    %3 = vector.load %arg2[%c0, %c0_1, %c0_2] : memref<8x8x128xf32, #tpu.memory_space<vmem>>, vector<8x8x128xf32>
    %4 = vector.shape_cast %3 : vector<8x8x128xf32> to vector<64x128xf32>
    %c0_3 = arith.constant 0 : index
    %c0_4 = arith.constant 0 : index
    %5 = vector.load %arg3[%c0_3, %c0_4] : memref<128x512xf32, #tpu.memory_space<vmem>>, vector<128x512xf32>
    %cst = arith.constant dense<0.000000e+00> : vector<64x512xf32>
    %6 = tpu.matmul %4, %5, %cst {dimension_numbers = #tpu.dot_dimension_numbers<[1], [0], [0], [1], [0, 0, 1, 1], [], []>} : vector<64x128xf32>, vector<128x512xf32>, vector<64x512xf32> -> vector<64x512xf32>
    %c0_5 = arith.constant 0 : index
    %c0_6 = arith.constant 0 : index
    %7 = vector.load %arg5[%c0_5, %c0_6] : memref<1x512xf32, #tpu.memory_space<vmem>>, vector<1x512xf32>
    %8 = vector.broadcast %7 : vector<1x512xf32> to vector<64x512xf32>
    %9 = arith.addf %6, %8 : vector<64x512xf32>
    %c0_7 = arith.constant 0 : index
    %c0_8 = arith.constant 0 : index
    %10 = vector.load %arg9[%c0_7, %c0_8] : memref<64x512xf32, #tpu.memory_space<vmem>>, vector<64x512xf32>
    tpu.vector_store %arg9[%c0_7, %c0_8], %9 {strides = array<i32>} : memref<64x512xf32, #tpu.memory_space<vmem>>, vector<64x512xf32>,
    %c0_9 = arith.constant 0 : index
    %c0_10 = arith.constant 0 : index
    %11 = vector.load %arg7[%c0_9, %c0_10] : memref<8x128xf32, #tpu.memory_space<vmem>>, vector<8x128xf32>
    %c0_11 = arith.constant 0 : index
    %c0_12 = arith.constant 0 : index
    %12 = vector.load %arg8[%c0_11, %c0_12] : memref<8x128xf32, #tpu.memory_space<vmem>>, vector<8x128xf32>
    %c0_i32_13 = arith.constant 0 : i32
    %c8_i32 = arith.constant 8 : i32
    %13 = arith.muli %c0_i32_13, %c8_i32 : i32
    %14 = tpu.assume_multiple %13, 8 : i32
    %15 = arith.index_cast %14 : i32 to index
    %c0_14 = arith.constant 0 : index
    %16 = vector.load %arg9[%15, %c0_14] : memref<64x512xf32, #tpu.memory_space<vmem>>, vector<8x512xf32>
    %c0_15 = arith.constant 0 : index
    %c0_16 = arith.constant 0 : index
    %17 = vector.load %arg4[%c0_15, %c0_16] : memref<128x512xf32, #tpu.memory_space<vmem>>, vector<128x512xf32>
    %cst_17 = arith.constant dense<0.000000e+00> : vector<8x512xf32>
    %18 = tpu.matmul %11, %17, %cst_17 {dimension_numbers = #tpu.dot_dimension_numbers<[1], [0], [0], [1], [0, 0, 1, 1], [], []>} : vector<8x128xf32>, vector<128x512xf32>, vector<8x512xf32> -> vector<8x512xf32>
    %19 = arith.addf %16, %18 : vector<8x512xf32>
    %20 = vector.extract_strided_slice %19 {offsets = [0, 0], sizes = [8, 128], strides = [1, 1]} : vector<8x512xf32> to vector<8x128xf32>
    %21 = arith.negf %20 : vector<8x128xf32>
    %22 = math.exp %21 : vector<8x128xf32>
    %cst_18 = arith.constant 1.000000e+00 : f32
    %23 = vector.broadcast %cst_18 : f32 to vector<8x128xf32>
    %24 = arith.addf %23, %22 : vector<8x128xf32>
    %25 = arith.divf %23, %24 : vector<8x128xf32>
    %26 = vector.extract_strided_slice %19 {offsets = [0, 128], sizes = [8, 128], strides = [1, 1]} : vector<8x512xf32> to vector<8x128xf32>
    %27 = arith.negf %26 : vector<8x128xf32>
    %28 = math.exp %27 : vector<8x128xf32>
    %cst_19 = arith.constant 1.000000e+00 : f32
    %29 = vector.broadcast %cst_19 : f32 to vector<8x128xf32>
    %30 = arith.addf %29, %28 : vector<8x128xf32>
    %31 = arith.divf %29, %30 : vector<8x128xf32>
    %32 = vector.extract_strided_slice %19 {offsets = [0, 256], sizes = [8, 128], strides = [1, 1]} : vector<8x512xf32> to vector<8x128xf32>
    %33 = math.tanh %32 : vector<8x128xf32>
    %34 = vector.extract_strided_slice %19 {offsets = [0, 384], sizes = [8, 128], strides = [1, 1]} : vector<8x512xf32> to vector<8x128xf32>
    %35 = arith.negf %34 : vector<8x128xf32>
    %36 = math.exp %35 : vector<8x128xf32>
    %cst_20 = arith.constant 1.000000e+00 : f32
    %37 = vector.broadcast %cst_20 : f32 to vector<8x128xf32>
    %38 = arith.addf %37, %36 : vector<8x128xf32>
    %39 = arith.divf %37, %38 : vector<8x128xf32>
    %40 = arith.mulf %31, %12 : vector<8x128xf32>
    %41 = arith.mulf %25, %33 : vector<8x128xf32>
    %42 = arith.addf %40, %41 : vector<8x128xf32>
    %43 = math.tanh %42 : vector<8x128xf32>
    %44 = arith.mulf %39, %43 : vector<8x128xf32>
    %45 = arith.index_cast %c0_i32_13 : i32 to index
    %c0_21 = arith.constant 0 : index
    %c0_22 = arith.constant 0 : index
    %46 = vector.load %arg6[%45, %c0_21, %c0_22] : memref<8x8x128xf32, #tpu.memory_space<vmem>>, vector<1x8x128xf32>
    %47 = vector.shape_cast %46 : vector<1x8x128xf32> to vector<8x128xf32>
    %48 = vector.shape_cast %44 : vector<8x128xf32> to vector<1x8x128xf32>
    tpu.vector_store %arg6[%45, %c0_21, %c0_22], %48 {strides = array<i32>} : memref<8x8x128xf32, #tpu.memory_space<vmem>>, vector<1x8x128xf32>,
    %c1_i32 = arith.constant 1 : i32
    %c8_i32_23 = arith.constant 8 : i32
    %49 = arith.muli %c1_i32, %c8_i32_23 : i32
    %50 = tpu.assume_multiple %49, 8 : i32
    %51 = arith.index_cast %50 : i32 to index
    %c0_24 = arith.constant 0 : index
    %52 = vector.load %arg9[%51, %c0_24] : memref<64x512xf32, #tpu.memory_space<vmem>>, vector<8x512xf32>
    %c0_25 = arith.constant 0 : index
    %c0_26 = arith.constant 0 : index
    %53 = vector.load %arg4[%c0_25, %c0_26] : memref<128x512xf32, #tpu.memory_space<vmem>>, vector<128x512xf32>
    %cst_27 = arith.constant dense<0.000000e+00> : vector<8x512xf32>
    %54 = tpu.matmul %44, %53, %cst_27 {dimension_numbers = #tpu.dot_dimension_numbers<[1], [0], [0], [1], [0, 0, 1, 1], [], []>} : vector<8x128xf32>, vector<128x512xf32>, vector<8x512xf32> -> vector<8x512xf32>
    %55 = arith.addf %52, %54 : vector<8x512xf32>
    %56 = vector.extract_strided_slice %55 {offsets = [0, 0], sizes = [8, 128], strides = [1, 1]} : vector<8x512xf32> to vector<8x128xf32>
    %57 = arith.negf %56 : vector<8x128xf32>
    %58 = math.exp %57 : vector<8x128xf32>
    %cst_28 = arith.constant 1.000000e+00 : f32
    %59 = vector.broadcast %cst_28 : f32 to vector<8x128xf32>
    %60 = arith.addf %59, %58 : vector<8x128xf32>
    %61 = arith.divf %59, %60 : vector<8x128xf32>
    %62 = vector.extract_strided_slice %55 {offsets = [0, 128], sizes = [8, 128], strides = [1, 1]} : vector<8x512xf32> to vector<8x128xf32>
    %63 = arith.negf %62 : vector<8x128xf32>
    %64 = math.exp %63 : vector<8x128xf32>
    %cst_29 = arith.constant 1.000000e+00 : f32
    %65 = vector.broadcast %cst_29 : f32 to vector<8x128xf32>
    %66 = arith.addf %65, %64 : vector<8x128xf32>
    %67 = arith.divf %65, %66 : vector<8x128xf32>
    %68 = vector.extract_strided_slice %55 {offsets = [0, 256], sizes = [8, 128], strides = [1, 1]} : vector<8x512xf32> to vector<8x128xf32>
    %69 = math.tanh %68 : vector<8x128xf32>
    %70 = vector.extract_strided_slice %55 {offsets = [0, 384], sizes = [8, 128], strides = [1, 1]} : vector<8x512xf32> to vector<8x128xf32>
    %71 = arith.negf %70 : vector<8x128xf32>
    %72 = math.exp %71 : vector<8x128xf32>
    %cst_30 = arith.constant 1.000000e+00 : f32
    %73 = vector.broadcast %cst_30 : f32 to vector<8x128xf32>
    %74 = arith.addf %73, %72 : vector<8x128xf32>
    %75 = arith.divf %73, %74 : vector<8x128xf32>
    %76 = arith.mulf %67, %42 : vector<8x128xf32>
    %77 = arith.mulf %61, %69 : vector<8x128xf32>
    %78 = arith.addf %76, %77 : vector<8x128xf32>
    %79 = math.tanh %78 : vector<8x128xf32>
    %80 = arith.mulf %75, %79 : vector<8x128xf32>
    %81 = arith.index_cast %c1_i32 : i32 to index
    %c0_31 = arith.constant 0 : index
    %c0_32 = arith.constant 0 : index
    %82 = vector.load %arg6[%81, %c0_31, %c0_32] : memref<8x8x128xf32, #tpu.memory_space<vmem>>, vector<1x8x128xf32>
    %83 = vector.shape_cast %82 : vector<1x8x128xf32> to vector<8x128xf32>
    %84 = vector.shape_cast %80 : vector<8x128xf32> to vector<1x8x128xf32>
    tpu.vector_store %arg6[%81, %c0_31, %c0_32], %84 {strides = array<i32>} : memref<8x8x128xf32, #tpu.memory_space<vmem>>, vector<1x8x128xf32>,
    %c2_i32 = arith.constant 2 : i32
    %c8_i32_33 = arith.constant 8 : i32
    %85 = arith.muli %c2_i32, %c8_i32_33 : i32
    %86 = tpu.assume_multiple %85, 8 : i32
    %87 = arith.index_cast %86 : i32 to index
    %c0_34 = arith.constant 0 : index
    %88 = vector.load %arg9[%87, %c0_34] : memref<64x512xf32, #tpu.memory_space<vmem>>, vector<8x512xf32>
    %c0_35 = arith.constant 0 : index
    %c0_36 = arith.constant 0 : index
    %89 = vector.load %arg4[%c0_35, %c0_36] : memref<128x512xf32, #tpu.memory_space<vmem>>, vector<128x512xf32>
    %cst_37 = arith.constant dense<0.000000e+00> : vector<8x512xf32>
    %90 = tpu.matmul %80, %89, %cst_37 {dimension_numbers = #tpu.dot_dimension_numbers<[1], [0], [0], [1], [0, 0, 1, 1], [], []>} : vector<8x128xf32>, vector<128x512xf32>, vector<8x512xf32> -> vector<8x512xf32>
    %91 = arith.addf %88, %90 : vector<8x512xf32>
    %92 = vector.extract_strided_slice %91 {offsets = [0, 0], sizes = [8, 128], strides = [1, 1]} : vector<8x512xf32> to vector<8x128xf32>
    %93 = arith.negf %92 : vector<8x128xf32>
    %94 = math.exp %93 : vector<8x128xf32>
    %cst_38 = arith.constant 1.000000e+00 : f32
    %95 = vector.broadcast %cst_38 : f32 to vector<8x128xf32>
    %96 = arith.addf %95, %94 : vector<8x128xf32>
    %97 = arith.divf %95, %96 : vector<8x128xf32>
    %98 = vector.extract_strided_slice %91 {offsets = [0, 128], sizes = [8, 128], strides = [1, 1]} : vector<8x512xf32> to vector<8x128xf32>
    %99 = arith.negf %98 : vector<8x128xf32>
    %100 = math.exp %99 : vector<8x128xf32>
    %cst_39 = arith.constant 1.000000e+00 : f32
    %101 = vector.broadcast %cst_39 : f32 to vector<8x128xf32>
    %102 = arith.addf %101, %100 : vector<8x128xf32>
    %103 = arith.divf %101, %102 : vector<8x128xf32>
    %104 = vector.extract_strided_slice %91 {offsets = [0, 256], sizes = [8, 128], strides = [1, 1]} : vector<8x512xf32> to vector<8x128xf32>
    %105 = math.tanh %104 : vector<8x128xf32>
    %106 = vector.extract_strided_slice %91 {offsets = [0, 384], sizes = [8, 128], strides = [1, 1]} : vector<8x512xf32> to vector<8x128xf32>
    %107 = arith.negf %106 : vector<8x128xf32>
    %108 = math.exp %107 : vector<8x128xf32>
    %cst_40 = arith.constant 1.000000e+00 : f32
    %109 = vector.broadcast %cst_40 : f32 to vector<8x128xf32>
    %110 = arith.addf %109, %108 : vector<8x128xf32>
    %111 = arith.divf %109, %110 : vector<8x128xf32>
    %112 = arith.mulf %103, %78 : vector<8x128xf32>
    %113 = arith.mulf %97, %105 : vector<8x128xf32>
    %114 = arith.addf %112, %113 : vector<8x128xf32>
    %115 = math.tanh %114 : vector<8x128xf32>
    %116 = arith.mulf %111, %115 : vector<8x128xf32>
    %117 = arith.index_cast %c2_i32 : i32 to index
    %c0_41 = arith.constant 0 : index
    %c0_42 = arith.constant 0 : index
    %118 = vector.load %arg6[%117, %c0_41, %c0_42] : memref<8x8x128xf32, #tpu.memory_space<vmem>>, vector<1x8x128xf32>
    %119 = vector.shape_cast %118 : vector<1x8x128xf32> to vector<8x128xf32>
    %120 = vector.shape_cast %116 : vector<8x128xf32> to vector<1x8x128xf32>
    tpu.vector_store %arg6[%117, %c0_41, %c0_42], %120 {strides = array<i32>} : memref<8x8x128xf32, #tpu.memory_space<vmem>>, vector<1x8x128xf32>,
    %c3_i32 = arith.constant 3 : i32
    %c8_i32_43 = arith.constant 8 : i32
    %121 = arith.muli %c3_i32, %c8_i32_43 : i32
    %122 = tpu.assume_multiple %121, 8 : i32
    %123 = arith.index_cast %122 : i32 to index
    %c0_44 = arith.constant 0 : index
    %124 = vector.load %arg9[%123, %c0_44] : memref<64x512xf32, #tpu.memory_space<vmem>>, vector<8x512xf32>
    %c0_45 = arith.constant 0 : index
    %c0_46 = arith.constant 0 : index
    %125 = vector.load %arg4[%c0_45, %c0_46] : memref<128x512xf32, #tpu.memory_space<vmem>>, vector<128x512xf32>
    %cst_47 = arith.constant dense<0.000000e+00> : vector<8x512xf32>
    %126 = tpu.matmul %116, %125, %cst_47 {dimension_numbers = #tpu.dot_dimension_numbers<[1], [0], [0], [1], [0, 0, 1, 1], [], []>} : vector<8x128xf32>, vector<128x512xf32>, vector<8x512xf32> -> vector<8x512xf32>
    %127 = arith.addf %124, %126 : vector<8x512xf32>
    %128 = vector.extract_strided_slice %127 {offsets = [0, 0], sizes = [8, 128], strides = [1, 1]} : vector<8x512xf32> to vector<8x128xf32>
    %129 = arith.negf %128 : vector<8x128xf32>
    %130 = math.exp %129 : vector<8x128xf32>
    %cst_48 = arith.constant 1.000000e+00 : f32
    %131 = vector.broadcast %cst_48 : f32 to vector<8x128xf32>
    %132 = arith.addf %131, %130 : vector<8x128xf32>
    %133 = arith.divf %131, %132 : vector<8x128xf32>
    %134 = vector.extract_strided_slice %127 {offsets = [0, 128], sizes = [8, 128], strides = [1, 1]} : vector<8x512xf32> to vector<8x128xf32>
    %135 = arith.negf %134 : vector<8x128xf32>
    %136 = math.exp %135 : vector<8x128xf32>
    %cst_49 = arith.constant 1.000000e+00 : f32
    %137 = vector.broadcast %cst_49 : f32 to vector<8x128xf32>
    %138 = arith.addf %137, %136 : vector<8x128xf32>
    %139 = arith.divf %137, %138 : vector<8x128xf32>
    %140 = vector.extract_strided_slice %127 {offsets = [0, 256], sizes = [8, 128], strides = [1, 1]} : vector<8x512xf32> to vector<8x128xf32>
    %141 = math.tanh %140 : vector<8x128xf32>
    %142 = vector.extract_strided_slice %127 {offsets = [0, 384], sizes = [8, 128], strides = [1, 1]} : vector<8x512xf32> to vector<8x128xf32>
    %143 = arith.negf %142 : vector<8x128xf32>
    %144 = math.exp %143 : vector<8x128xf32>
    %cst_50 = arith.constant 1.000000e+00 : f32
    %145 = vector.broadcast %cst_50 : f32 to vector<8x128xf32>
    %146 = arith.addf %145, %144 : vector<8x128xf32>
    %147 = arith.divf %145, %146 : vector<8x128xf32>
    %148 = arith.mulf %139, %114 : vector<8x128xf32>
    %149 = arith.mulf %133, %141 : vector<8x128xf32>
    %150 = arith.addf %148, %149 : vector<8x128xf32>
    %151 = math.tanh %150 : vector<8x128xf32>
    %152 = arith.mulf %147, %151 : vector<8x128xf32>
    %153 = arith.index_cast %c3_i32 : i32 to index
    %c0_51 = arith.constant 0 : index
    %c0_52 = arith.constant 0 : index
    %154 = vector.load %arg6[%153, %c0_51, %c0_52] : memref<8x8x128xf32, #tpu.memory_space<vmem>>, vector<1x8x128xf32>
    %155 = vector.shape_cast %154 : vector<1x8x128xf32> to vector<8x128xf32>
    %156 = vector.shape_cast %152 : vector<8x128xf32> to vector<1x8x128xf32>
    tpu.vector_store %arg6[%153, %c0_51, %c0_52], %156 {strides = array<i32>} : memref<8x8x128xf32, #tpu.memory_space<vmem>>, vector<1x8x128xf32>,
    %c4_i32 = arith.constant 4 : i32
    %c8_i32_53 = arith.constant 8 : i32
    %157 = arith.muli %c4_i32, %c8_i32_53 : i32
    %158 = tpu.assume_multiple %157, 8 : i32
    %159 = arith.index_cast %158 : i32 to index
    %c0_54 = arith.constant 0 : index
    %160 = vector.load %arg9[%159, %c0_54] : memref<64x512xf32, #tpu.memory_space<vmem>>, vector<8x512xf32>
    %c0_55 = arith.constant 0 : index
    %c0_56 = arith.constant 0 : index
    %161 = vector.load %arg4[%c0_55, %c0_56] : memref<128x512xf32, #tpu.memory_space<vmem>>, vector<128x512xf32>
    %cst_57 = arith.constant dense<0.000000e+00> : vector<8x512xf32>
    %162 = tpu.matmul %152, %161, %cst_57 {dimension_numbers = #tpu.dot_dimension_numbers<[1], [0], [0], [1], [0, 0, 1, 1], [], []>} : vector<8x128xf32>, vector<128x512xf32>, vector<8x512xf32> -> vector<8x512xf32>
    %163 = arith.addf %160, %162 : vector<8x512xf32>
    %164 = vector.extract_strided_slice %163 {offsets = [0, 0], sizes = [8, 128], strides = [1, 1]} : vector<8x512xf32> to vector<8x128xf32>
    %165 = arith.negf %164 : vector<8x128xf32>
    %166 = math.exp %165 : vector<8x128xf32>
    %cst_58 = arith.constant 1.000000e+00 : f32
    %167 = vector.broadcast %cst_58 : f32 to vector<8x128xf32>
    %168 = arith.addf %167, %166 : vector<8x128xf32>
    %169 = arith.divf %167, %168 : vector<8x128xf32>
    %170 = vector.extract_strided_slice %163 {offsets = [0, 128], sizes = [8, 128], strides = [1, 1]} : vector<8x512xf32> to vector<8x128xf32>
    %171 = arith.negf %170 : vector<8x128xf32>
    %172 = math.exp %171 : vector<8x128xf32>
    %cst_59 = arith.constant 1.000000e+00 : f32
    %173 = vector.broadcast %cst_59 : f32 to vector<8x128xf32>
    %174 = arith.addf %173, %172 : vector<8x128xf32>
    %175 = arith.divf %173, %174 : vector<8x128xf32>
    %176 = vector.extract_strided_slice %163 {offsets = [0, 256], sizes = [8, 128], strides = [1, 1]} : vector<8x512xf32> to vector<8x128xf32>
    %177 = math.tanh %176 : vector<8x128xf32>
    %178 = vector.extract_strided_slice %163 {offsets = [0, 384], sizes = [8, 128], strides = [1, 1]} : vector<8x512xf32> to vector<8x128xf32>
    %179 = arith.negf %178 : vector<8x128xf32>
    %180 = math.exp %179 : vector<8x128xf32>
    %cst_60 = arith.constant 1.000000e+00 : f32
    %181 = vector.broadcast %cst_60 : f32 to vector<8x128xf32>
    %182 = arith.addf %181, %180 : vector<8x128xf32>
    %183 = arith.divf %181, %182 : vector<8x128xf32>
    %184 = arith.mulf %175, %150 : vector<8x128xf32>
    %185 = arith.mulf %169, %177 : vector<8x128xf32>
    %186 = arith.addf %184, %185 : vector<8x128xf32>
    %187 = math.tanh %186 : vector<8x128xf32>
    %188 = arith.mulf %183, %187 : vector<8x128xf32>
    %189 = arith.index_cast %c4_i32 : i32 to index
    %c0_61 = arith.constant 0 : index
    %c0_62 = arith.constant 0 : index
    %190 = vector.load %arg6[%189, %c0_61, %c0_62] : memref<8x8x128xf32, #tpu.memory_space<vmem>>, vector<1x8x128xf32>
    %191 = vector.shape_cast %190 : vector<1x8x128xf32> to vector<8x128xf32>
    %192 = vector.shape_cast %188 : vector<8x128xf32> to vector<1x8x128xf32>
    tpu.vector_store %arg6[%189, %c0_61, %c0_62], %192 {strides = array<i32>} : memref<8x8x128xf32, #tpu.memory_space<vmem>>, vector<1x8x128xf32>,
    %c5_i32 = arith.constant 5 : i32
    %c8_i32_63 = arith.constant 8 : i32
    %193 = arith.muli %c5_i32, %c8_i32_63 : i32
    %194 = tpu.assume_multiple %193, 8 : i32
    %195 = arith.index_cast %194 : i32 to index
    %c0_64 = arith.constant 0 : index
    %196 = vector.load %arg9[%195, %c0_64] : memref<64x512xf32, #tpu.memory_space<vmem>>, vector<8x512xf32>
    %c0_65 = arith.constant 0 : index
    %c0_66 = arith.constant 0 : index
    %197 = vector.load %arg4[%c0_65, %c0_66] : memref<128x512xf32, #tpu.memory_space<vmem>>, vector<128x512xf32>
    %cst_67 = arith.constant dense<0.000000e+00> : vector<8x512xf32>
    %198 = tpu.matmul %188, %197, %cst_67 {dimension_numbers = #tpu.dot_dimension_numbers<[1], [0], [0], [1], [0, 0, 1, 1], [], []>} : vector<8x128xf32>, vector<128x512xf32>, vector<8x512xf32> -> vector<8x512xf32>
    %199 = arith.addf %196, %198 : vector<8x512xf32>
    %200 = vector.extract_strided_slice %199 {offsets = [0, 0], sizes = [8, 128], strides = [1, 1]} : vector<8x512xf32> to vector<8x128xf32>
    %201 = arith.negf %200 : vector<8x128xf32>
    %202 = math.exp %201 : vector<8x128xf32>
    %cst_68 = arith.constant 1.000000e+00 : f32
    %203 = vector.broadcast %cst_68 : f32 to vector<8x128xf32>
    %204 = arith.addf %203, %202 : vector<8x128xf32>
    %205 = arith.divf %203, %204 : vector<8x128xf32>
    %206 = vector.extract_strided_slice %199 {offsets = [0, 128], sizes = [8, 128], strides = [1, 1]} : vector<8x512xf32> to vector<8x128xf32>
    %207 = arith.negf %206 : vector<8x128xf32>
    %208 = math.exp %207 : vector<8x128xf32>
    %cst_69 = arith.constant 1.000000e+00 : f32
    %209 = vector.broadcast %cst_69 : f32 to vector<8x128xf32>
    %210 = arith.addf %209, %208 : vector<8x128xf32>
    %211 = arith.divf %209, %210 : vector<8x128xf32>
    %212 = vector.extract_strided_slice %199 {offsets = [0, 256], sizes = [8, 128], strides = [1, 1]} : vector<8x512xf32> to vector<8x128xf32>
    %213 = math.tanh %212 : vector<8x128xf32>
    %214 = vector.extract_strided_slice %199 {offsets = [0, 384], sizes = [8, 128], strides = [1, 1]} : vector<8x512xf32> to vector<8x128xf32>
    %215 = arith.negf %214 : vector<8x128xf32>
    %216 = math.exp %215 : vector<8x128xf32>
    %cst_70 = arith.constant 1.000000e+00 : f32
    %217 = vector.broadcast %cst_70 : f32 to vector<8x128xf32>
    %218 = arith.addf %217, %216 : vector<8x128xf32>
    %219 = arith.divf %217, %218 : vector<8x128xf32>
    %220 = arith.mulf %211, %186 : vector<8x128xf32>
    %221 = arith.mulf %205, %213 : vector<8x128xf32>
    %222 = arith.addf %220, %221 : vector<8x128xf32>
    %223 = math.tanh %222 : vector<8x128xf32>
    %224 = arith.mulf %219, %223 : vector<8x128xf32>
    %225 = arith.index_cast %c5_i32 : i32 to index
    %c0_71 = arith.constant 0 : index
    %c0_72 = arith.constant 0 : index
    %226 = vector.load %arg6[%225, %c0_71, %c0_72] : memref<8x8x128xf32, #tpu.memory_space<vmem>>, vector<1x8x128xf32>
    %227 = vector.shape_cast %226 : vector<1x8x128xf32> to vector<8x128xf32>
    %228 = vector.shape_cast %224 : vector<8x128xf32> to vector<1x8x128xf32>
    tpu.vector_store %arg6[%225, %c0_71, %c0_72], %228 {strides = array<i32>} : memref<8x8x128xf32, #tpu.memory_space<vmem>>, vector<1x8x128xf32>,
    %c6_i32 = arith.constant 6 : i32
    %c8_i32_73 = arith.constant 8 : i32
    %229 = arith.muli %c6_i32, %c8_i32_73 : i32
    %230 = tpu.assume_multiple %229, 8 : i32
    %231 = arith.index_cast %230 : i32 to index
    %c0_74 = arith.constant 0 : index
    %232 = vector.load %arg9[%231, %c0_74] : memref<64x512xf32, #tpu.memory_space<vmem>>, vector<8x512xf32>
    %c0_75 = arith.constant 0 : index
    %c0_76 = arith.constant 0 : index
    %233 = vector.load %arg4[%c0_75, %c0_76] : memref<128x512xf32, #tpu.memory_space<vmem>>, vector<128x512xf32>
    %cst_77 = arith.constant dense<0.000000e+00> : vector<8x512xf32>
    %234 = tpu.matmul %224, %233, %cst_77 {dimension_numbers = #tpu.dot_dimension_numbers<[1], [0], [0], [1], [0, 0, 1, 1], [], []>} : vector<8x128xf32>, vector<128x512xf32>, vector<8x512xf32> -> vector<8x512xf32>
    %235 = arith.addf %232, %234 : vector<8x512xf32>
    %236 = vector.extract_strided_slice %235 {offsets = [0, 0], sizes = [8, 128], strides = [1, 1]} : vector<8x512xf32> to vector<8x128xf32>
    %237 = arith.negf %236 : vector<8x128xf32>
    %238 = math.exp %237 : vector<8x128xf32>
    %cst_78 = arith.constant 1.000000e+00 : f32
    %239 = vector.broadcast %cst_78 : f32 to vector<8x128xf32>
    %240 = arith.addf %239, %238 : vector<8x128xf32>
    %241 = arith.divf %239, %240 : vector<8x128xf32>
    %242 = vector.extract_strided_slice %235 {offsets = [0, 128], sizes = [8, 128], strides = [1, 1]} : vector<8x512xf32> to vector<8x128xf32>
    %243 = arith.negf %242 : vector<8x128xf32>
    %244 = math.exp %243 : vector<8x128xf32>
    %cst_79 = arith.constant 1.000000e+00 : f32
    %245 = vector.broadcast %cst_79 : f32 to vector<8x128xf32>
    %246 = arith.addf %245, %244 : vector<8x128xf32>
    %247 = arith.divf %245, %246 : vector<8x128xf32>
    %248 = vector.extract_strided_slice %235 {offsets = [0, 256], sizes = [8, 128], strides = [1, 1]} : vector<8x512xf32> to vector<8x128xf32>
    %249 = math.tanh %248 : vector<8x128xf32>
    %250 = vector.extract_strided_slice %235 {offsets = [0, 384], sizes = [8, 128], strides = [1, 1]} : vector<8x512xf32> to vector<8x128xf32>
    %251 = arith.negf %250 : vector<8x128xf32>
    %252 = math.exp %251 : vector<8x128xf32>
    %cst_80 = arith.constant 1.000000e+00 : f32
    %253 = vector.broadcast %cst_80 : f32 to vector<8x128xf32>
    %254 = arith.addf %253, %252 : vector<8x128xf32>
    %255 = arith.divf %253, %254 : vector<8x128xf32>
    %256 = arith.mulf %247, %222 : vector<8x128xf32>
    %257 = arith.mulf %241, %249 : vector<8x128xf32>
    %258 = arith.addf %256, %257 : vector<8x128xf32>
    %259 = math.tanh %258 : vector<8x128xf32>
    %260 = arith.mulf %255, %259 : vector<8x128xf32>
    %261 = arith.index_cast %c6_i32 : i32 to index
    %c0_81 = arith.constant 0 : index
    %c0_82 = arith.constant 0 : index
    %262 = vector.load %arg6[%261, %c0_81, %c0_82] : memref<8x8x128xf32, #tpu.memory_space<vmem>>, vector<1x8x128xf32>
    %263 = vector.shape_cast %262 : vector<1x8x128xf32> to vector<8x128xf32>
    %264 = vector.shape_cast %260 : vector<8x128xf32> to vector<1x8x128xf32>
    tpu.vector_store %arg6[%261, %c0_81, %c0_82], %264 {strides = array<i32>} : memref<8x8x128xf32, #tpu.memory_space<vmem>>, vector<1x8x128xf32>,
    %c7_i32 = arith.constant 7 : i32
    %c8_i32_83 = arith.constant 8 : i32
    %265 = arith.muli %c7_i32, %c8_i32_83 : i32
    %266 = tpu.assume_multiple %265, 8 : i32
    %267 = arith.index_cast %266 : i32 to index
    %c0_84 = arith.constant 0 : index
    %268 = vector.load %arg9[%267, %c0_84] : memref<64x512xf32, #tpu.memory_space<vmem>>, vector<8x512xf32>
    %c0_85 = arith.constant 0 : index
    %c0_86 = arith.constant 0 : index
    %269 = vector.load %arg4[%c0_85, %c0_86] : memref<128x512xf32, #tpu.memory_space<vmem>>, vector<128x512xf32>
    %cst_87 = arith.constant dense<0.000000e+00> : vector<8x512xf32>
    %270 = tpu.matmul %260, %269, %cst_87 {dimension_numbers = #tpu.dot_dimension_numbers<[1], [0], [0], [1], [0, 0, 1, 1], [], []>} : vector<8x128xf32>, vector<128x512xf32>, vector<8x512xf32> -> vector<8x512xf32>
    %271 = arith.addf %268, %270 : vector<8x512xf32>
    %272 = vector.extract_strided_slice %271 {offsets = [0, 0], sizes = [8, 128], strides = [1, 1]} : vector<8x512xf32> to vector<8x128xf32>
    %273 = arith.negf %272 : vector<8x128xf32>
    %274 = math.exp %273 : vector<8x128xf32>
    %cst_88 = arith.constant 1.000000e+00 : f32
    %275 = vector.broadcast %cst_88 : f32 to vector<8x128xf32>
    %276 = arith.addf %275, %274 : vector<8x128xf32>
    %277 = arith.divf %275, %276 : vector<8x128xf32>
    %278 = vector.extract_strided_slice %271 {offsets = [0, 128], sizes = [8, 128], strides = [1, 1]} : vector<8x512xf32> to vector<8x128xf32>
    %279 = arith.negf %278 : vector<8x128xf32>
    %280 = math.exp %279 : vector<8x128xf32>
    %cst_89 = arith.constant 1.000000e+00 : f32
    %281 = vector.broadcast %cst_89 : f32 to vector<8x128xf32>
    %282 = arith.addf %281, %280 : vector<8x128xf32>
    %283 = arith.divf %281, %282 : vector<8x128xf32>
    %284 = vector.extract_strided_slice %271 {offsets = [0, 256], sizes = [8, 128], strides = [1, 1]} : vector<8x512xf32> to vector<8x128xf32>
    %285 = math.tanh %284 : vector<8x128xf32>
    %286 = vector.extract_strided_slice %271 {offsets = [0, 384], sizes = [8, 128], strides = [1, 1]} : vector<8x512xf32> to vector<8x128xf32>
    %287 = arith.negf %286 : vector<8x128xf32>
    %288 = math.exp %287 : vector<8x128xf32>
    %cst_90 = arith.constant 1.000000e+00 : f32
    %289 = vector.broadcast %cst_90 : f32 to vector<8x128xf32>
    %290 = arith.addf %289, %288 : vector<8x128xf32>
    %291 = arith.divf %289, %290 : vector<8x128xf32>
    %292 = arith.mulf %283, %258 : vector<8x128xf32>
    %293 = arith.mulf %277, %285 : vector<8x128xf32>
    %294 = arith.addf %292, %293 : vector<8x128xf32>
    %295 = math.tanh %294 : vector<8x128xf32>
    %296 = arith.mulf %291, %295 : vector<8x128xf32>
    %297 = arith.index_cast %c7_i32 : i32 to index
    %c0_91 = arith.constant 0 : index
    %c0_92 = arith.constant 0 : index
    %298 = vector.load %arg6[%297, %c0_91, %c0_92] : memref<8x8x128xf32, #tpu.memory_space<vmem>>, vector<1x8x128xf32>
    %299 = vector.shape_cast %298 : vector<1x8x128xf32> to vector<8x128xf32>
    %300 = vector.shape_cast %296 : vector<8x128xf32> to vector<1x8x128xf32>
    tpu.vector_store %arg6[%297, %c0_91, %c0_92], %300 {strides = array<i32>} : memref<8x8x128xf32, #tpu.memory_space<vmem>>, vector<1x8x128xf32>,
    %c8_i32_93 = arith.constant 8 : i32
    %c0_94 = arith.constant 0 : index
    %c0_95 = arith.constant 0 : index
    %301 = vector.load %arg7[%c0_94, %c0_95] : memref<8x128xf32, #tpu.memory_space<vmem>>, vector<8x128xf32>
    tpu.vector_store %arg7[%c0_94, %c0_95], %296 {strides = array<i32>} : memref<8x128xf32, #tpu.memory_space<vmem>>, vector<8x128xf32>,
    %c0_96 = arith.constant 0 : index
    %c0_97 = arith.constant 0 : index
    %302 = vector.load %arg8[%c0_96, %c0_97] : memref<8x128xf32, #tpu.memory_space<vmem>>, vector<8x128xf32>
    tpu.vector_store %arg8[%c0_96, %c0_97], %294 {strides = array<i32>} : memref<8x128xf32, #tpu.memory_space<vmem>>, vector<8x128xf32>,
    return
  }
  func.func @transform_0(%arg0: i32, %arg1: i32) -> (i32, i32, i32) {
    %c0_i32 = arith.constant 0 : i32
    %c0_i32_0 = arith.constant 0 : i32
    return %arg1, %arg0, %c0_i32 : i32, i32, i32
  }
  func.func @transform_1(%arg0: i32, %arg1: i32) -> (i32, i32) {
    %c0_i32 = arith.constant 0 : i32
    %c0_i32_0 = arith.constant 0 : i32
    %c0_i32_1 = arith.constant 0 : i32
    return %c0_i32, %c0_i32_0 : i32, i32
  }
  func.func @transform_2(%arg0: i32, %arg1: i32) -> (i32, i32) {
    %c0_i32 = arith.constant 0 : i32
    %c0_i32_0 = arith.constant 0 : i32
    %c0_i32_1 = arith.constant 0 : i32
    return %c0_i32, %c0_i32_0 : i32, i32
  }
  func.func @transform_3(%arg0: i32, %arg1: i32) -> (i32, i32) {
    %c0_i32 = arith.constant 0 : i32
    %c0_i32_0 = arith.constant 0 : i32
    %c0_i32_1 = arith.constant 0 : i32
    return %c0_i32, %c0_i32_0 : i32, i32
  }
  func.func @transform_4(%arg0: i32, %arg1: i32) -> (i32, i32, i32) {
    %c0_i32 = arith.constant 0 : i32
    %c0_i32_0 = arith.constant 0 : i32
    return %arg1, %arg0, %c0_i32 : i32, i32, i32
  }
}

</mosaic_0001>

<llo_original>
// kernel: _lambda_.3
$region0: #{_lambda_.3}
  #allocation0 [shape = 'u32[]', space=smem, size = 0x4, offset = 0x4, fixed_abs, tag = 'smem constant byte address 0x4 - core index']
  #allocation1 [shape = 'u32[72,128]{1,0:T(1,128)}', space=vmem, size = 0x9000, scoped, tag = 'internal scratch']
  #allocation2 [shape = 'f32[8,128]{1,0:T(8,128)}', space=vmem, size = 0x1000, scoped, tag = 'scratch operand']
  #allocation3 [shape = 'f32[8,128]{1,0:T(8,128)}', space=vmem, size = 0x1000, scoped, tag = 'scratch operand']
  #allocation4 [shape = 'f32[64,512]{1,0:T(8,128)}', space=vmem, size = 0x20000, scoped, tag = 'scratch operand']
  #allocation5 [shape = 'f32[8,8,128]{2,1,0:T(8,128)}', space=vmem, size = 0x8000, scoped, tag = 'scratch operand']
  %s0 = inlined_call_operand.vmem [shape: f32[8,8,128], index: 0, kind: input, shape index: {}]
  %s1 = inlined_call_operand.hbm [shape: f32[128,512], index: 1, kind: input, shape index: {}]
  %s2 = inlined_call_operand.hbm [shape: f32[128,512], index: 2, kind: input, shape index: {}]
  %s3 = inlined_call_operand.vmem [shape: f32[1,512], index: 3, kind: input, shape index: {}]
  %s4 = inlined_call_operand.hbm [shape: f32[128,128], index: 4, kind: input, shape index: {}]
  %s5 = inlined_call_operand.vmem [shape: f32[1,128], index: 5, kind: input, shape index: {}]
  %s6 = inlined_call_operand.vmem [shape: f32[8,8,128], index: 6, kind: output, shape index: {}]
  %s7 = sld [smem:[#allocation0]]
  $region50: #{_lambda_.3} parent=0
    _
  %s9 = ssub.s32 1, %s7
  %s10 = scalar_select 0, %s9, %s7
  $region1: #{_lambda_.3} parent=0
    #allocation6 [shape = 'u8[262144]{0}', space=vmem, size = 0x40000, scoped, tag = 'input window, operand 1, single buffered']
    #allocation7 [shape = 's32[1]{0}', space=sflag, size = 0x4, scoped, tag = 'scoped memory for _lambda_.3']
    #allocation8 [shape = 'u8[262144]{0}', space=vmem, size = 0x40000, scoped, tag = 'input window, operand 2, single buffered']
    #allocation9 [shape = 's32[1]{0}', space=sflag, size = 0x4, scoped, tag = 'scoped memory for _lambda_.3']
    #allocation10 [shape = 'u8[65536]{0}', space=vmem, size = 0x10000, scoped, tag = 'input window, operand 4, single buffered']
    %11 = vsyncpa [#allocation7], 0
    %12 = vsyncpa [#allocation9], 0
    // Predicated region
    $region2: #{_lambda_.3} parent=1 // pred_check
      _
    $region3: #{_lambda_.3} parent=1 // pred_check_branch
      %14 = sbr.rel (0) target = $region5
    $region4: #{_lambda_.3} parent=1 // pred_region
      _
    $region5: #{_lambda_.3} parent=1 // pred_fallthru
      _
    // Predicated region
    $region6: #{_lambda_.3} parent=1 // pred_check
      _
    $region7: #{_lambda_.3} parent=1 // pred_check_branch
      %16 = sbr.rel (0) target = $region9
    $region8: #{_lambda_.3} parent=1 // pred_region
      %18 = vsyncadd [#allocation7], 0
      %s19 = sshll.u32 %s1, 4
      %s20 = int_to_ptr.hbm [resolvable:$true] %s19
      %s21 = sshll.u32 [#allocation6], 4
      %s22 = int_to_ptr.vmem [resolvable:$true] %s21
      %27 = dma.hbm_to_vmem [thread:$0]  %s20, 8192, %s22, [#allocation7], 512, 512, 32
    $region9: #{_lambda_.3} parent=1 // pred_fallthru
      _
    // Predicated region
    $region10: #{_lambda_.3} parent=1 // pred_check
      _
    $region11: #{_lambda_.3} parent=1 // pred_check_branch
      %29 = sbr.rel (0) target = $region13
    $region12: #{_lambda_.3} parent=1 // pred_region
      %31 = vsyncadd [#allocation9], 0
      %s32 = sshll.u32 %s2, 4
      %s33 = int_to_ptr.hbm [resolvable:$true] %s32
      %s34 = sshll.u32 [#allocation8], 4
      %s35 = int_to_ptr.vmem [resolvable:$true] %s34
      %40 = dma.hbm_to_vmem [thread:$0]  %s33, 8192, %s35, [#allocation9], 512, 512, 32
    $region13: #{_lambda_.3} parent=1 // pred_fallthru
      _
    // Predicated region
    $region14: #{_lambda_.3} parent=1 // pred_check
      _
    $region15: #{_lambda_.3} parent=1 // pred_check_branch
      %42 = sbr.rel (0) target = $region17
    $region16: #{_lambda_.3} parent=1 // pred_region
      _
    $region17: #{_lambda_.3} parent=1 // pred_fallthru
      _
    // Predicated region
    $region18: #{_lambda_.3} parent=1 // pred_check
      _
    $region19: #{_lambda_.3} parent=1 // pred_check_branch
      %44 = sbr.rel (0) target = $region21
    $region20: #{_lambda_.3} parent=1 // pred_region
      %46 = vsyncadd [#allocation9], 0
      %s47 = sshll.u32 %s4, 4
      %s48 = int_to_ptr.hbm [resolvable:$true] %s47
      %s49 = sshll.u32 [#allocation10], 4
      %s50 = int_to_ptr.vmem [resolvable:$true] %s49
      %55 = dma.hbm_to_vmem [thread:$0]  %s48, 2048, %s50, [#allocation9], 128, 128, 8
    $region21: #{_lambda_.3} parent=1 // pred_fallthru
      _
    // Predicated region
    $region22: #{_lambda_.3} parent=1 // pred_check
      _
    $region23: #{_lambda_.3} parent=1 // pred_check_branch
      %57 = sbr.rel (0) target = $region25
    $region24: #{_lambda_.3} parent=1 // pred_region
      _
    $region25: #{_lambda_.3} parent=1 // pred_fallthru
      _
    // Predicated region
    $region26: #{_lambda_.3} parent=1 // pred_check
      _
    $region27: #{_lambda_.3} parent=1 // pred_check_branch
      %59 = sbr.rel (0) target = $region29
    $region28: #{_lambda_.3} parent=1 // pred_region
      %61 = dma.done [#allocation7], 8192
    $region29: #{_lambda_.3} parent=1 // pred_fallthru
      _
    // Predicated region
    $region30: #{_lambda_.3} parent=1 // pred_check
      _
    $region31: #{_lambda_.3} parent=1 // pred_check_branch
      %63 = sbr.rel (0) target = $region33
    $region32: #{_lambda_.3} parent=1 // pred_region
      %65 = dma.done [#allocation9], 8192
    $region33: #{_lambda_.3} parent=1 // pred_fallthru
      _
    // Predicated region
    $region34: #{_lambda_.3} parent=1 // pred_check
      _
    $region35: #{_lambda_.3} parent=1 // pred_check_branch
      %67 = sbr.rel (0) target = $region37
    $region36: #{_lambda_.3} parent=1 // pred_region
      %69 = dma.done [#allocation9], 2048
    $region37: #{_lambda_.3} parent=1 // pred_fallthru
      _
    %p70 = scmp.eq.s32.totalorder 0, 0
    // Predicated region
    $region38: #{_lambda_.3} parent=1 // pred_check
      %p71 = pneg %p70
    $region39: #{_lambda_.3} parent=1 // pred_check_branch
      %73 = sbr.rel (%p71) target = $region41
    $region40: #{_lambda_.3} parent=1 // pred_region
      %74 = vst [vmem:[#allocation2] sm:$0xff] 0.0
      %75 = vst [vmem:[#allocation3] sm:$0xff] 0.0
    $region41: #{_lambda_.3} parent=1 // pred_fallthru
      _
    %v76 = vld [vmem:[%s0] sm:$0xff]
    %v77 = vld [vmem:[%s0 + $0x8] sm:$0xff]
    %v78 = vld [vmem:[%s0 + $0x10] sm:$0xff]
    %v79 = vld [vmem:[%s0 + $0x18] sm:$0xff]
    %v80 = vld [vmem:[%s0 + $0x20] sm:$0xff]
    %v81 = vld [vmem:[%s0 + $0x28] sm:$0xff]
    %v82 = vld [vmem:[%s0 + $0x30] sm:$0xff]
    %v83 = vld [vmem:[%s0 + $0x38] sm:$0xff]
    %v84 = vld [vmem:[#allocation6] sm:$0xff]
    %v85 = vld [vmem:[#allocation6 + $0x8] sm:$0xff]
    %v86 = vld [vmem:[#allocation6 + $0x10] sm:$0xff]
    %v87 = vld [vmem:[#allocation6 + $0x18] sm:$0xff]
    %v88 = vld [vmem:[#allocation6 + $0x20] sm:$0xff]
    %v89 = vld [vmem:[#allocation6 + $0x28] sm:$0xff]
    %v90 = vld [vmem:[#allocation6 + $0x30] sm:$0xff]
    %v91 = vld [vmem:[#allocation6 + $0x38] sm:$0xff]
    %v92 = vld [vmem:[#allocation6 + $0x40] sm:$0xff]
    %v93 = vld [vmem:[#allocation6 + $0x48] sm:$0xff]
    %v94 = vld [vmem:[#allocation6 + $0x50] sm:$0xff]
    %v95 = vld [vmem:[#allocation6 + $0x58] sm:$0xff]
    %v96 = vld [vmem:[#allocation6 + $0x60] sm:$0xff]
    %v97 = vld [vmem:[#allocation6 + $0x68] sm:$0xff]
    %v98 = vld [vmem:[#allocation6 + $0x70] sm:$0xff]
    %v99 = vld [vmem:[#allocation6 + $0x78] sm:$0xff]
    %v100 = vld [vmem:[#allocation6 + $0x80] sm:$0xff]
    %v101 = vld [vmem:[#allocation6 + $0x88] sm:$0xff]
    %v102 = vld [vmem:[#allocation6 + $0x90] sm:$0xff]
    %v103 = vld [vmem:[#allocation6 + $0x98] sm:$0xff]
    %v104 = vld [vmem:[#allocation6 + $0xa0] sm:$0xff]
    %v105 = vld [vmem:[#allocation6 + $0xa8] sm:$0xff]
    %v106 = vld [vmem:[#allocation6 + $0xb0] sm:$0xff]
    %v107 = vld [vmem:[#allocation6 + $0xb8] sm:$0xff]
    %v108 = vld [vmem:[#allocation6 + $0xc0] sm:$0xff]
    %v109 = vld [vmem:[#allocation6 + $0xc8] sm:$0xff]
    %v110 = vld [vmem:[#allocation6 + $0xd0] sm:$0xff]
    %v111 = vld [vmem:[#allocation6 + $0xd8] sm:$0xff]
    %v112 = vld [vmem:[#allocation6 + $0xe0] sm:$0xff]
    %v113 = vld [vmem:[#allocation6 + $0xe8] sm:$0xff]
    %v114 = vld [vmem:[#allocation6 + $0xf0] sm:$0xff]
    %v115 = vld [vmem:[#allocation6 + $0xf8] sm:$0xff]
    %v116 = vld [vmem:[#allocation6 + $0x100] sm:$0xff]
    %v117 = vld [vmem:[#allocation6 + $0x108] sm:$0xff]
    %v118 = vld [vmem:[#allocation6 + $0x110] sm:$0xff]
    %v119 = vld [vmem:[#allocation6 + $0x118] sm:$0xff]
    %v120 = vld [vmem:[#allocation6 + $0x120] sm:$0xff]
    %v121 = vld [vmem:[#allocation6 + $0x128] sm:$0xff]
    %v122 = vld [vmem:[#allocation6 + $0x130] sm:$0xff]
    %v123 = vld [vmem:[#allocation6 + $0x138] sm:$0xff]
    %v124 = vld [vmem:[#allocation6 + $0x140] sm:$0xff]
    %v125 = vld [vmem:[#allocation6 + $0x148] sm:$0xff]
    %v126 = vld [vmem:[#allocation6 + $0x150] sm:$0xff]
    %v127 = vld [vmem:[#allocation6 + $0x158] sm:$0xff]
    %v128 = vld [vmem:[#allocation6 + $0x160] sm:$0xff]
    %v129 = vld [vmem:[#allocation6 + $0x168] sm:$0xff]
    %v130 = vld [vmem:[#allocation6 + $0x170] sm:$0xff]
    %v131 = vld [vmem:[#allocation6 + $0x178] sm:$0xff]
    %v132 = vld [vmem:[#allocation6 + $0x180] sm:$0xff]
    %v133 = vld [vmem:[#allocation6 + $0x188] sm:$0xff]
    %v134 = vld [vmem:[#allocation6 + $0x190] sm:$0xff]
    %v135 = vld [vmem:[#allocation6 + $0x198] sm:$0xff]
    %v136 = vld [vmem:[#allocation6 + $0x1a0] sm:$0xff]
    %v137 = vld [vmem:[#allocation6 + $0x1a8] sm:$0xff]
    %v138 = vld [vmem:[#allocation6 + $0x1b0] sm:$0xff]
    %v139 = vld [vmem:[#allocation6 + $0x1b8] sm:$0xff]
    %v140 = vld [vmem:[#allocation6 + $0x1c0] sm:$0xff]
    %v141 = vld [vmem:[#allocation6 + $0x1c8] sm:$0xff]
    %v142 = vld [vmem:[#allocation6 + $0x1d0] sm:$0xff]
    %v143 = vld [vmem:[#allocation6 + $0x1d8] sm:$0xff]
    %v144 = vld [vmem:[#allocation6 + $0x1e0] sm:$0xff]
    %v145 = vld [vmem:[#allocation6 + $0x1e8] sm:$0xff]
    %v146 = vld [vmem:[#allocation6 + $0x1f0] sm:$0xff]
    %v147 = vld [vmem:[#allocation6 + $0x1f8] sm:$0xff]
    %v148 = vld [vmem:[%s3] sm:$0xf]
    %v150 = vperm.slane %v148, 0
    %v151 = vperm.slane %v148, 1
    %v152 = vperm.slane %v148, 2
    %v153 = vperm.slane %v148, 3
    %158 = vmatpush.msra.mxu0 %v144
    %159 = vmatpush.msra.mxu0 %v140
    %160 = vmatpush.msra.mxu0 %v136
    %161 = vmatpush.msra.mxu0 %v132
    %162 = vmatpush.msra.mxu0 %v128
    %163 = vmatpush.msra.mxu0 %v124
    %164 = vmatpush.msra.mxu0 %v120
    %165 = vmatpush.msra.mxu0 %v116
    %166 = vmatpush.msra.mxu0 %v112
    %167 = vmatpush.msra.mxu0 %v108
    %168 = vmatpush.msra.mxu0 %v104
    %169 = vmatpush.msra.mxu0 %v100
    %170 = vmatpush.msra.mxu0 %v96
    %171 = vmatpush.msra.mxu0 %v92
    %172 = vmatpush.msra.mxu0 %v88
    %173 = vmatpush.msra.mxu0 %v84
    %174 = vmatmul.f32.gmra.mxu0 %v76
    %v175 = vpop.f32.mrf.mxu0
    %v176 = vadd.f32 %v150, %v175
    %177 = vmatmul.f32.gmra.mxu0 %v77
    %v178 = vpop.f32.mrf.mxu0
    %v179 = vadd.f32 %v150, %v178
    %180 = vmatmul.f32.gmra.mxu0 %v78
    %v181 = vpop.f32.mrf.mxu0
    %v182 = vadd.f32 %v150, %v181
    %183 = vmatmul.f32.gmra.mxu0 %v79
    %v184 = vpop.f32.mrf.mxu0
    %v185 = vadd.f32 %v150, %v184
    %186 = vmatmul.f32.gmra.mxu0 %v80
    %v187 = vpop.f32.mrf.mxu0
    %v188 = vadd.f32 %v150, %v187
    %189 = vmatmul.f32.gmra.mxu0 %v81
    %v190 = vpop.f32.mrf.mxu0
    %v191 = vadd.f32 %v150, %v190
    %192 = vmatmul.f32.gmra.mxu0 %v82
    %v193 = vpop.f32.mrf.mxu0
    %v194 = vadd.f32 %v150, %v193
    %195 = vmatmul.f32.gmra.mxu0 %v83
    %v196 = vpop.f32.mrf.mxu0
    %v197 = vadd.f32 %v150, %v196
    %198 = vdwg.mxu0
    %199 = vmatpush.msra.mxu0 %v145
    %200 = vmatpush.msra.mxu0 %v141
    %201 = vmatpush.msra.mxu0 %v137
    %202 = vmatpush.msra.mxu0 %v133
    %203 = vmatpush.msra.mxu0 %v129
    %204 = vmatpush.msra.mxu0 %v125
    %205 = vmatpush.msra.mxu0 %v121
    %206 = vmatpush.msra.mxu0 %v117
    %207 = vmatpush.msra.mxu0 %v113
    %208 = vmatpush.msra.mxu0 %v109
    %209 = vmatpush.msra.mxu0 %v105
    %210 = vmatpush.msra.mxu0 %v101
    %211 = vmatpush.msra.mxu0 %v97
    %212 = vmatpush.msra.mxu0 %v93
    %213 = vmatpush.msra.mxu0 %v89
    %214 = vmatpush.msra.mxu0 %v85
    %215 = vmatmul.f32.gmra.mxu0 %v76
    %v216 = vpop.f32.mrf.mxu0
    %v217 = vadd.f32 %v151, %v216
    %218 = vmatmul.f32.gmra.mxu0 %v77
    %v219 = vpop.f32.mrf.mxu0
    %v220 = vadd.f32 %v151, %v219
    %221 = vmatmul.f32.gmra.mxu0 %v78
    %v222 = vpop.f32.mrf.mxu0
    %v223 = vadd.f32 %v151, %v222
    %224 = vmatmul.f32.gmra.mxu0 %v79
    %v225 = vpop.f32.mrf.mxu0
    %v226 = vadd.f32 %v151, %v225
    %227 = vmatmul.f32.gmra.mxu0 %v80
    %v228 = vpop.f32.mrf.mxu0
    %v229 = vadd.f32 %v151, %v228
    %230 = vmatmul.f32.gmra.mxu0 %v81
    %v231 = vpop.f32.mrf.mxu0
    %v232 = vadd.f32 %v151, %v231
    %233 = vmatmul.f32.gmra.mxu0 %v82
    %v234 = vpop.f32.mrf.mxu0
    %v235 = vadd.f32 %v151, %v234
    %236 = vmatmul.f32.gmra.mxu0 %v83
    %v237 = vpop.f32.mrf.mxu0
    %v238 = vadd.f32 %v151, %v237
    %239 = vdwg.mxu0
    %240 = vmatpush.msra.mxu0 %v146
    %241 = vmatpush.msra.mxu0 %v142
    %242 = vmatpush.msra.mxu0 %v138
    %243 = vmatpush.msra.mxu0 %v134
    %244 = vmatpush.msra.mxu0 %v130
    %245 = vmatpush.msra.mxu0 %v126
    %246 = vmatpush.msra.mxu0 %v122
    %247 = vmatpush.msra.mxu0 %v118
    %248 = vmatpush.msra.mxu0 %v114
    %249 = vmatpush.msra.mxu0 %v110
    %250 = vmatpush.msra.mxu0 %v106
    %251 = vmatpush.msra.mxu0 %v102
    %252 = vmatpush.msra.mxu0 %v98
    %253 = vmatpush.msra.mxu0 %v94
    %254 = vmatpush.msra.mxu0 %v90
    %255 = vmatpush.msra.mxu0 %v86
    %256 = vmatmul.f32.gmra.mxu0 %v76
    %v257 = vpop.f32.mrf.mxu0
    %v258 = vadd.f32 %v152, %v257
    %259 = vmatmul.f32.gmra.mxu0 %v77
    %v260 = vpop.f32.mrf.mxu0
    %v261 = vadd.f32 %v152, %v260
    %262 = vmatmul.f32.gmra.mxu0 %v78
    %v263 = vpop.f32.mrf.mxu0
    %v264 = vadd.f32 %v152, %v263
    %265 = vmatmul.f32.gmra.mxu0 %v79
    %v266 = vpop.f32.mrf.mxu0
    %v267 = vadd.f32 %v152, %v266
    %268 = vmatmul.f32.gmra.mxu0 %v80
    %v269 = vpop.f32.mrf.mxu0
    %v270 = vadd.f32 %v152, %v269
    %271 = vmatmul.f32.gmra.mxu0 %v81
    %v272 = vpop.f32.mrf.mxu0
    %v273 = vadd.f32 %v152, %v272
    %274 = vmatmul.f32.gmra.mxu0 %v82
    %v275 = vpop.f32.mrf.mxu0
    %v276 = vadd.f32 %v152, %v275
    %277 = vmatmul.f32.gmra.mxu0 %v83
    %v278 = vpop.f32.mrf.mxu0
    %v279 = vadd.f32 %v152, %v278
    %280 = vdwg.mxu0
    %281 = vmatpush.msra.mxu0 %v147
    %282 = vmatpush.msra.mxu0 %v143
    %283 = vmatpush.msra.mxu0 %v139
    %284 = vmatpush.msra.mxu0 %v135
    %285 = vmatpush.msra.mxu0 %v131
    %286 = vmatpush.msra.mxu0 %v127
    %287 = vmatpush.msra.mxu0 %v123
    %288 = vmatpush.msra.mxu0 %v119
    %289 = vmatpush.msra.mxu0 %v115
    %290 = vmatpush.msra.mxu0 %v111
    %291 = vmatpush.msra.mxu0 %v107
    %292 = vmatpush.msra.mxu0 %v103
    %293 = vmatpush.msra.mxu0 %v99
    %294 = vmatpush.msra.mxu0 %v95
    %295 = vmatpush.msra.mxu0 %v91
    %296 = vmatpush.msra.mxu0 %v87
    %297 = vmatmul.f32.gmra.mxu0 %v76
    %v298 = vpop.f32.mrf.mxu0
    %v299 = vadd.f32 %v153, %v298
    %300 = vmatmul.f32.gmra.mxu0 %v77
    %v301 = vpop.f32.mrf.mxu0
    %v302 = vadd.f32 %v153, %v301
    %303 = vmatmul.f32.gmra.mxu0 %v78
    %v304 = vpop.f32.mrf.mxu0
    %v305 = vadd.f32 %v153, %v304
    %306 = vmatmul.f32.gmra.mxu0 %v79
    %v307 = vpop.f32.mrf.mxu0
    %v308 = vadd.f32 %v153, %v307
    %309 = vmatmul.f32.gmra.mxu0 %v80
    %v310 = vpop.f32.mrf.mxu0
    %v311 = vadd.f32 %v153, %v310
    %312 = vmatmul.f32.gmra.mxu0 %v81
    %v313 = vpop.f32.mrf.mxu0
    %v314 = vadd.f32 %v153, %v313
    %315 = vmatmul.f32.gmra.mxu0 %v82
    %v316 = vpop.f32.mrf.mxu0
    %v317 = vadd.f32 %v153, %v316
    %318 = vmatmul.f32.gmra.mxu0 %v83
    %v319 = vpop.f32.mrf.mxu0
    %v320 = vadd.f32 %v153, %v319
    %321 = vdwg.mxu0
    %322 = vst [vmem:[#allocation4] sm:$0xff] %v176
    %323 = vst [vmem:[#allocation4 + $0x8] sm:$0xff] %v217
    %324 = vst [vmem:[#allocation4 + $0x10] sm:$0xff] %v258
    %325 = vst [vmem:[#allocation4 + $0x18] sm:$0xff] %v299
    %326 = vst [vmem:[#allocation4 + $0x20] sm:$0xff] %v179
    %327 = vst [vmem:[#allocation4 + $0x28] sm:$0xff] %v220
    %328 = vst [vmem:[#allocation4 + $0x30] sm:$0xff] %v261
    %329 = vst [vmem:[#allocation4 + $0x38] sm:$0xff] %v302
    %330 = vst [vmem:[#allocation4 + $0x40] sm:$0xff] %v182
    %331 = vst [vmem:[#allocation4 + $0x48] sm:$0xff] %v223
    %332 = vst [vmem:[#allocation4 + $0x50] sm:$0xff] %v264
    %333 = vst [vmem:[#allocation4 + $0x58] sm:$0xff] %v305
    %334 = vst [vmem:[#allocation4 + $0x60] sm:$0xff] %v185
    %335 = vst [vmem:[#allocation4 + $0x68] sm:$0xff] %v226
    %336 = vst [vmem:[#allocation4 + $0x70] sm:$0xff] %v267
    %337 = vst [vmem:[#allocation4 + $0x78] sm:$0xff] %v308
    %338 = vst [vmem:[#allocation4 + $0x80] sm:$0xff] %v188
    %339 = vst [vmem:[#allocation4 + $0x88] sm:$0xff] %v229
    %340 = vst [vmem:[#allocation4 + $0x90] sm:$0xff] %v270
    %341 = vst [vmem:[#allocation4 + $0x98] sm:$0xff] %v311
    %342 = vst [vmem:[#allocation4 + $0xa0] sm:$0xff] %v191
    %343 = vst [vmem:[#allocation4 + $0xa8] sm:$0xff] %v232
    %344 = vst [vmem:[#allocation4 + $0xb0] sm:$0xff] %v273
    %345 = vst [vmem:[#allocation4 + $0xb8] sm:$0xff] %v314
    %346 = vst [vmem:[#allocation4 + $0xc0] sm:$0xff] %v194
    %347 = vst [vmem:[#allocation4 + $0xc8] sm:$0xff] %v235
    %348 = vst [vmem:[#allocation4 + $0xd0] sm:$0xff] %v276
    %349 = vst [vmem:[#allocation4 + $0xd8] sm:$0xff] %v317
    %350 = vst [vmem:[#allocation4 + $0xe0] sm:$0xff] %v197
    %351 = vst [vmem:[#allocation4 + $0xe8] sm:$0xff] %v238
    %352 = vst [vmem:[#allocation4 + $0xf0] sm:$0xff] %v279
    %353 = vst [vmem:[#allocation4 + $0xf8] sm:$0xff] %v320
    %v354 = vld [vmem:[#allocation2] sm:$0xff]
    %v355 = vld [vmem:[#allocation3] sm:$0xff]
    %s356 = smul.u32 0, 4
    %s357 = smul.addr %s356, 8
    %s358 = scalar_lea.vmem [#allocation4], %s357
    %v359 = vld [vmem:[%s358] sm:$0xff]
    %v360 = vld [vmem:[%s358 + $0x8] sm:$0xff]
    %v361 = vld [vmem:[%s358 + $0x10] sm:$0xff]
    %v362 = vld [vmem:[%s358 + $0x18] sm:$0xff]
    %v363 = vld [vmem:[#allocation8] sm:$0xff]
    %v364 = vld [vmem:[#allocation8 + $0x8] sm:$0xff]
    %v365 = vld [vmem:[#allocation8 + $0x10] sm:$0xff]
    %v366 = vld [vmem:[#allocation8 + $0x18] sm:$0xff]
    %v367 = vld [vmem:[#allocation8 + $0x20] sm:$0xff]
    %v368 = vld [vmem:[#allocation8 + $0x28] sm:$0xff]
    %v369 = vld [vmem:[#allocation8 + $0x30] sm:$0xff]
    %v370 = vld [vmem:[#allocation8 + $0x38] sm:$0xff]
    %v371 = vld [vmem:[#allocation8 + $0x40] sm:$0xff]
    %v372 = vld [vmem:[#allocation8 + $0x48] sm:$0xff]
    %v373 = vld [vmem:[#allocation8 + $0x50] sm:$0xff]
    %v374 = vld [vmem:[#allocation8 + $0x58] sm:$0xff]
    %v375 = vld [vmem:[#allocation8 + $0x60] sm:$0xff]
    %v376 = vld [vmem:[#allocation8 + $0x68] sm:$0xff]
    %v377 = vld [vmem:[#allocation8 + $0x70] sm:$0xff]
    %v378 = vld [vmem:[#allocation8 + $0x78] sm:$0xff]
    %v379 = vld [vmem:[#allocation8 + $0x80] sm:$0xff]
    %v380 = vld [vmem:[#allocation8 + $0x88] sm:$0xff]
    %v381 = vld [vmem:[#allocation8 + $0x90] sm:$0xff]
    %v382 = vld [vmem:[#allocation8 + $0x98] sm:$0xff]
    %v383 = vld [vmem:[#allocation8 + $0xa0] sm:$0xff]
    %v384 = vld [vmem:[#allocation8 + $0xa8] sm:$0xff]
    %v385 = vld [vmem:[#allocation8 + $0xb0] sm:$0xff]
    %v386 = vld [vmem:[#allocation8 + $0xb8] sm:$0xff]
    %v387 = vld [vmem:[#allocation8 + $0xc0] sm:$0xff]
    %v388 = vld [vmem:[#allocation8 + $0xc8] sm:$0xff]
    %v389 = vld [vmem:[#allocation8 + $0xd0] sm:$0xff]
    %v390 = vld [vmem:[#allocation8 + $0xd8] sm:$0xff]
    %v391 = vld [vmem:[#allocation8 + $0xe0] sm:$0xff]
    %v392 = vld [vmem:[#allocation8 + $0xe8] sm:$0xff]
    %v393 = vld [vmem:[#allocation8 + $0xf0] sm:$0xff]
    %v394 = vld [vmem:[#allocation8 + $0xf8] sm:$0xff]
    %v395 = vld [vmem:[#allocation8 + $0x100] sm:$0xff]
    %v396 = vld [vmem:[#allocation8 + $0x108] sm:$0xff]
    %v397 = vld [vmem:[#allocation8 + $0x110] sm:$0xff]
    %v398 = vld [vmem:[#allocation8 + $0x118] sm:$0xff]
    %v399 = vld [vmem:[#allocation8 + $0x120] sm:$0xff]
    %v400 = vld [vmem:[#allocation8 + $0x128] sm:$0xff]
    %v401 = vld [vmem:[#allocation8 + $0x130] sm:$0xff]
    %v402 = vld [vmem:[#allocation8 + $0x138] sm:$0xff]
    %v403 = vld [vmem:[#allocation8 + $0x140] sm:$0xff]
    %v404 = vld [vmem:[#allocation8 + $0x148] sm:$0xff]
    %v405 = vld [vmem:[#allocation8 + $0x150] sm:$0xff]
    %v406 = vld [vmem:[#allocation8 + $0x158] sm:$0xff]
    %v407 = vld [vmem:[#allocation8 + $0x160] sm:$0xff]
    %v408 = vld [vmem:[#allocation8 + $0x168] sm:$0xff]
    %v409 = vld [vmem:[#allocation8 + $0x170] sm:$0xff]
    %v410 = vld [vmem:[#allocation8 + $0x178] sm:$0xff]
    %v411 = vld [vmem:[#allocation8 + $0x180] sm:$0xff]
    %v412 = vld [vmem:[#allocation8 + $0x188] sm:$0xff]
    %v413 = vld [vmem:[#allocation8 + $0x190] sm:$0xff]
    %v414 = vld [vmem:[#allocation8 + $0x198] sm:$0xff]
    %v415 = vld [vmem:[#allocation8 + $0x1a0] sm:$0xff]
    %v416 = vld [vmem:[#allocation8 + $0x1a8] sm:$0xff]
    %v417 = vld [vmem:[#allocation8 + $0x1b0] sm:$0xff]
    %v418 = vld [vmem:[#allocation8 + $0x1b8] sm:$0xff]
    %v419 = vld [vmem:[#allocation8 + $0x1c0] sm:$0xff]
    %v420 = vld [vmem:[#allocation8 + $0x1c8] sm:$0xff]
    %v421 = vld [vmem:[#allocation8 + $0x1d0] sm:$0xff]
    %v422 = vld [vmem:[#allocation8 + $0x1d8] sm:$0xff]
    %v423 = vld [vmem:[#allocation8 + $0x1e0] sm:$0xff]
    %v424 = vld [vmem:[#allocation8 + $0x1e8] sm:$0xff]
    %v425 = vld [vmem:[#allocation8 + $0x1f0] sm:$0xff]
    %v426 = vld [vmem:[#allocation8 + $0x1f8] sm:$0xff]
    %427 = vmatpush.msra.mxu0 %v423
    %428 = vmatpush.msra.mxu0 %v419
    %429 = vmatpush.msra.mxu0 %v415
    %430 = vmatpush.msra.mxu0 %v411
    %431 = vmatpush.msra.mxu0 %v407
    %432 = vmatpush.msra.mxu0 %v403
    %433 = vmatpush.msra.mxu0 %v399
    %434 = vmatpush.msra.mxu0 %v395
    %435 = vmatpush.msra.mxu0 %v391
    %436 = vmatpush.msra.mxu0 %v387
    %437 = vmatpush.msra.mxu0 %v383
    %438 = vmatpush.msra.mxu0 %v379
    %439 = vmatpush.msra.mxu0 %v375
    %440 = vmatpush.msra.mxu0 %v371
    %441 = vmatpush.msra.mxu0 %v367
    %442 = vmatpush.msra.mxu0 %v363
    %443 = vmatmul.f32.gmra.mxu0 %v354
    %v444 = vpop.f32.mrf.mxu0
    %v445 = vadd.f32 0.0, %v444
    %446 = vdwg.mxu0
    %447 = vmatpush.msra.mxu0 %v424
    %448 = vmatpush.msra.mxu0 %v420
    %449 = vmatpush.msra.mxu0 %v416
    %450 = vmatpush.msra.mxu0 %v412
    %451 = vmatpush.msra.mxu0 %v408
    %452 = vmatpush.msra.mxu0 %v404
    %453 = vmatpush.msra.mxu0 %v400
    %454 = vmatpush.msra.mxu0 %v396
    %455 = vmatpush.msra.mxu0 %v392
    %456 = vmatpush.msra.mxu0 %v388
    %457 = vmatpush.msra.mxu0 %v384
    %458 = vmatpush.msra.mxu0 %v380
    %459 = vmatpush.msra.mxu0 %v376
    %460 = vmatpush.msra.mxu0 %v372
    %461 = vmatpush.msra.mxu0 %v368
    %462 = vmatpush.msra.mxu0 %v364
    %463 = vmatmul.f32.gmra.mxu0 %v354
    %v464 = vpop.f32.mrf.mxu0
    %v465 = vadd.f32 0.0, %v464
    %466 = vdwg.mxu0
    %467 = vmatpush.msra.mxu0 %v425
    %468 = vmatpush.msra.mxu0 %v421
    %469 = vmatpush.msra.mxu0 %v417
    %470 = vmatpush.msra.mxu0 %v413
    %471 = vmatpush.msra.mxu0 %v409
    %472 = vmatpush.msra.mxu0 %v405
    %473 = vmatpush.msra.mxu0 %v401
    %474 = vmatpush.msra.mxu0 %v397
    %475 = vmatpush.msra.mxu0 %v393
    %476 = vmatpush.msra.mxu0 %v389
    %477 = vmatpush.msra.mxu0 %v385
    %478 = vmatpush.msra.mxu0 %v381
    %479 = vmatpush.msra.mxu0 %v377
    %480 = vmatpush.msra.mxu0 %v373
    %481 = vmatpush.msra.mxu0 %v369
    %482 = vmatpush.msra.mxu0 %v365
    %483 = vmatmul.f32.gmra.mxu0 %v354
    %v484 = vpop.f32.mrf.mxu0
    %v485 = vadd.f32 0.0, %v484
    %486 = vdwg.mxu0
    %487 = vmatpush.msra.mxu0 %v426
    %488 = vmatpush.msra.mxu0 %v422
    %489 = vmatpush.msra.mxu0 %v418
    %490 = vmatpush.msra.mxu0 %v414
    %491 = vmatpush.msra.mxu0 %v410
    %492 = vmatpush.msra.mxu0 %v406
    %493 = vmatpush.msra.mxu0 %v402
    %494 = vmatpush.msra.mxu0 %v398
    %495 = vmatpush.msra.mxu0 %v394
    %496 = vmatpush.msra.mxu0 %v390
    %497 = vmatpush.msra.mxu0 %v386
    %498 = vmatpush.msra.mxu0 %v382
    %499 = vmatpush.msra.mxu0 %v378
    %500 = vmatpush.msra.mxu0 %v374
    %501 = vmatpush.msra.mxu0 %v370
    %502 = vmatpush.msra.mxu0 %v366
    %503 = vmatmul.f32.gmra.mxu0 %v354
    %v504 = vpop.f32.mrf.mxu0
    %v505 = vadd.f32 0.0, %v504
    %506 = vdwg.mxu0
    %v507 = vadd.f32 %v359, %v445
    %v508 = vadd.f32 %v360, %v465
    %v509 = vadd.f32 %v361, %v485
    %v510 = vadd.f32 %v362, %v505
    %v511 = vxor.u32 %v507, 2147483648
    %v512 = vmul.f32 %v511, 1.442695
    %v513 = vpow.pop %v512
    %v514 = vadd.f32 %v513, 1.0
    %v515 = vrcp.pop %v514
    %v516 = vmul.f32 %v514, %v515
    %v517 = vsub.f32 1.0, %v516
    %v518 = vmul.f32 %v515, %v517
    %v519 = vadd.f32 %v515, %v518
    %vm520 = vweird.f32 %v514
    %vm521 = vweird.f32 %v515
    %vm522 = vmor %vm520, %vm521
    %v523 = vsel %vm522, %v515, %v519
    %v524 = vand.u32 2147483647, %v514
    %vm525 = vcmp.eq.f32.partialorder %v524, 8.507059e+37
    %v526 = vand.u32 %v514, 2147483648
    %v527 = vor.u32 1.1754944e-38, %v526
    %v528 = vsel %vm525, %v527, %v523
    %v529 = vmul.f32 1.0, %v528
    %v530 = vxor.u32 %v508, 2147483648
    %v531 = vmul.f32 %v530, 1.442695
    %v532 = vpow.pop %v531
    %v533 = vadd.f32 %v532, 1.0
    %v534 = vrcp.pop %v533
    %v535 = vmul.f32 %v533, %v534
    %v536 = vsub.f32 1.0, %v535
    %v537 = vmul.f32 %v534, %v536
    %v538 = vadd.f32 %v534, %v537
    %vm539 = vweird.f32 %v533
    %vm540 = vweird.f32 %v534
    %vm541 = vmor %vm539, %vm540
    %v542 = vsel %vm541, %v534, %v538
    %v543 = vand.u32 2147483647, %v533
    %vm544 = vcmp.eq.f32.partialorder %v543, 8.507059e+37
    %v545 = vand.u32 %v533, 2147483648
    %v546 = vor.u32 1.1754944e-38, %v545
    %v547 = vsel %vm544, %v546, %v542
    %v548 = vmul.f32 1.0, %v547
    %v549 = vtanh.pop %v509
    %v550 = vxor.u32 %v510, 2147483648
    %v551 = vmul.f32 %v550, 1.442695
    %v552 = vpow.pop %v551
    %v553 = vadd.f32 %v552, 1.0
    %v554 = vrcp.pop %v553
    %v555 = vmul.f32 %v553, %v554
    %v556 = vsub.f32 1.0, %v555
    %v557 = vmul.f32 %v554, %v556
    %v558 = vadd.f32 %v554, %v557
    %vm559 = vweird.f32 %v553
    %vm560 = vweird.f32 %v554
    %vm561 = vmor %vm559, %vm560
    %v562 = vsel %vm561, %v554, %v558
    %v563 = vand.u32 2147483647, %v553
    %vm564 = vcmp.eq.f32.partialorder %v563, 8.507059e+37
    %v565 = vand.u32 %v553, 2147483648
    %v566 = vor.u32 1.1754944e-38, %v565
    %v567 = vsel %vm564, %v566, %v562
    %v568 = vmul.f32 1.0, %v567
    %v569 = vmul.f32 %v548, %v355
    %v570 = vmul.f32 %v529, %v549
    %v571 = vadd.f32 %v569, %v570
    %v572 = vtanh.pop %v571
    %v573 = vmul.f32 %v568, %v572
    %574 = vst [vmem:[#allocation5] sm:$0xff] %v573
    %s575 = smul.u32 1, 4
    %s576 = smul.addr %s575, 8
    %s577 = scalar_lea.vmem [#allocation4], %s576
    %v578 = vld [vmem:[%s577] sm:$0xff]
    %v579 = vld [vmem:[%s577 + $0x8] sm:$0xff]
    %v580 = vld [vmem:[%s577 + $0x10] sm:$0xff]
    %v581 = vld [vmem:[%s577 + $0x18] sm:$0xff]
    %v582 = vld [vmem:[#allocation8] sm:$0xff]
    %v583 = vld [vmem:[#allocation8 + $0x8] sm:$0xff]
    %v584 = vld [vmem:[#allocation8 + $0x10] sm:$0xff]
    %v585 = vld [vmem:[#allocation8 + $0x18] sm:$0xff]
    %v586 = vld [vmem:[#allocation8 + $0x20] sm:$0xff]
    %v587 = vld [vmem:[#allocation8 + $0x28] sm:$0xff]
    %v588 = vld [vmem:[#allocation8 + $0x30] sm:$0xff]
    %v589 = vld [vmem:[#allocation8 + $0x38] sm:$0xff]
    %v590 = vld [vmem:[#allocation8 + $0x40] sm:$0xff]
    %v591 = vld [vmem:[#allocation8 + $0x48] sm:$0xff]
    %v592 = vld [vmem:[#allocation8 + $0x50] sm:$0xff]
    %v593 = vld [vmem:[#allocation8 + $0x58] sm:$0xff]
    %v594 = vld [vmem:[#allocation8 + $0x60] sm:$0xff]
    %v595 = vld [vmem:[#allocation8 + $0x68] sm:$0xff]
    %v596 = vld [vmem:[#allocation8 + $0x70] sm:$0xff]
    %v597 = vld [vmem:[#allocation8 + $0x78] sm:$0xff]
    %v598 = vld [vmem:[#allocation8 + $0x80] sm:$0xff]
    %v599 = vld [vmem:[#allocation8 + $0x88] sm:$0xff]
    %v600 = vld [vmem:[#allocation8 + $0x90] sm:$0xff]
    %v601 = vld [vmem:[#allocation8 + $0x98] sm:$0xff]
    %v602 = vld [vmem:[#allocation8 + $0xa0] sm:$0xff]
    %v603 = vld [vmem:[#allocation8 + $0xa8] sm:$0xff]
    %v604 = vld [vmem:[#allocation8 + $0xb0] sm:$0xff]
    %v605 = vld [vmem:[#allocation8 + $0xb8] sm:$0xff]
    %v606 = vld [vmem:[#allocation8 + $0xc0] sm:$0xff]
    %v607 = vld [vmem:[#allocation8 + $0xc8] sm:$0xff]
    %v608 = vld [vmem:[#allocation8 + $0xd0] sm:$0xff]
    %v609 = vld [vmem:[#allocation8 + $0xd8] sm:$0xff]
    %v610 = vld [vmem:[#allocation8 + $0xe0] sm:$0xff]
    %v611 = vld [vmem:[#allocation8 + $0xe8] sm:$0xff]
    %v612 = vld [vmem:[#allocation8 + $0xf0] sm:$0xff]
    %v613 = vld [vmem:[#allocation8 + $0xf8] sm:$0xff]
    %v614 = vld [vmem:[#allocation8 + $0x100] sm:$0xff]
    %v615 = vld [vmem:[#allocation8 + $0x108] sm:$0xff]
    %v616 = vld [vmem:[#allocation8 + $0x110] sm:$0xff]
    %v617 = vld [vmem:[#allocation8 + $0x118] sm:$0xff]
    %v618 = vld [vmem:[#allocation8 + $0x120] sm:$0xff]
    %v619 = vld [vmem:[#allocation8 + $0x128] sm:$0xff]
    %v620 = vld [vmem:[#allocation8 + $0x130] sm:$0xff]
    %v621 = vld [vmem:[#allocation8 + $0x138] sm:$0xff]
    %v622 = vld [vmem:[#allocation8 + $0x140] sm:$0xff]
    %v623 = vld [vmem:[#allocation8 + $0x148] sm:$0xff]
    %v624 = vld [vmem:[#allocation8 + $0x150] sm:$0xff]
    %v625 = vld [vmem:[#allocation8 + $0x158] sm:$0xff]
    %v626 = vld [vmem:[#allocation8 + $0x160] sm:$0xff]
    %v627 = vld [vmem:[#allocation8 + $0x168] sm:$0xff]
    %v628 = vld [vmem:[#allocation8 + $0x170] sm:$0xff]
    %v629 = vld [vmem:[#allocation8 + $0x178] sm:$0xff]
    %v630 = vld [vmem:[#allocation8 + $0x180] sm:$0xff]
    %v631 = vld [vmem:[#allocation8 + $0x188] sm:$0xff]
    %v632 = vld [vmem:[#allocation8 + $0x190] sm:$0xff]
    %v633 = vld [vmem:[#allocation8 + $0x198] sm:$0xff]
    %v634 = vld [vmem:[#allocation8 + $0x1a0] sm:$0xff]
    %v635 = vld [vmem:[#allocation8 + $0x1a8] sm:$0xff]
    %v636 = vld [vmem:[#allocation8 + $0x1b0] sm:$0xff]
    %v637 = vld [vmem:[#allocation8 + $0x1b8] sm:$0xff]
    %v638 = vld [vmem:[#allocation8 + $0x1c0] sm:$0xff]
    %v639 = vld [vmem:[#allocation8 + $0x1c8] sm:$0xff]
    %v640 = vld [vmem:[#allocation8 + $0x1d0] sm:$0xff]
    %v641 = vld [vmem:[#allocation8 + $0x1d8] sm:$0xff]
    %v642 = vld [vmem:[#allocation8 + $0x1e0] sm:$0xff]
    %v643 = vld [vmem:[#allocation8 + $0x1e8] sm:$0xff]
    %v644 = vld [vmem:[#allocation8 + $0x1f0] sm:$0xff]
    %v645 = vld [vmem:[#allocation8 + $0x1f8] sm:$0xff]
    %646 = vmatpush.msra.mxu0 %v642
    %647 = vmatpush.msra.mxu0 %v638
    %648 = vmatpush.msra.mxu0 %v634
    %649 = vmatpush.msra.mxu0 %v630
    %650 = vmatpush.msra.mxu0 %v626
    %651 = vmatpush.msra.mxu0 %v622
    %652 = vmatpush.msra.mxu0 %v618
    %653 = vmatpush.msra.mxu0 %v614
    %654 = vmatpush.msra.mxu0 %v610
    %655 = vmatpush.msra.mxu0 %v606
    %656 = vmatpush.msra.mxu0 %v602
    %657 = vmatpush.msra.mxu0 %v598
    %658 = vmatpush.msra.mxu0 %v594
    %659 = vmatpush.msra.mxu0 %v590
    %660 = vmatpush.msra.mxu0 %v586
    %661 = vmatpush.msra.mxu0 %v582
    %662 = vmatmul.f32.gmra.mxu0 %v573
    %v663 = vpop.f32.mrf.mxu0
    %v664 = vadd.f32 0.0, %v663
    %665 = vdwg.mxu0
    %666 = vmatpush.msra.mxu0 %v643
    %667 = vmatpush.msra.mxu0 %v639
    %668 = vmatpush.msra.mxu0 %v635
    %669 = vmatpush.msra.mxu0 %v631
    %670 = vmatpush.msra.mxu0 %v627
    %671 = vmatpush.msra.mxu0 %v623
    %672 = vmatpush.msra.mxu0 %v619
    %673 = vmatpush.msra.mxu0 %v615
    %674 = vmatpush.msra.mxu0 %v611
    %675 = vmatpush.msra.mxu0 %v607
    %676 = vmatpush.msra.mxu0 %v603
    %677 = vmatpush.msra.mxu0 %v599
    %678 = vmatpush.msra.mxu0 %v595
    %679 = vmatpush.msra.mxu0 %v591
    %680 = vmatpush.msra.mxu0 %v587
    %681 = vmatpush.msra.mxu0 %v583
    %682 = vmatmul.f32.gmra.mxu0 %v573
    %v683 = vpop.f32.mrf.mxu0
    %v684 = vadd.f32 0.0, %v683
    %685 = vdwg.mxu0
    %686 = vmatpush.msra.mxu0 %v644
    %687 = vmatpush.msra.mxu0 %v640
    %688 = vmatpush.msra.mxu0 %v636
    %689 = vmatpush.msra.mxu0 %v632
    %690 = vmatpush.msra.mxu0 %v628
    %691 = vmatpush.msra.mxu0 %v624
    %692 = vmatpush.msra.mxu0 %v620
    %693 = vmatpush.msra.mxu0 %v616
    %694 = vmatpush.msra.mxu0 %v612
    %695 = vmatpush.msra.mxu0 %v608
    %696 = vmatpush.msra.mxu0 %v604
    %697 = vmatpush.msra.mxu0 %v600
    %698 = vmatpush.msra.mxu0 %v596
    %699 = vmatpush.msra.mxu0 %v592
    %700 = vmatpush.msra.mxu0 %v588
    %701 = vmatpush.msra.mxu0 %v584
    %702 = vmatmul.f32.gmra.mxu0 %v573
    %v703 = vpop.f32.mrf.mxu0
    %v704 = vadd.f32 0.0, %v703
    %705 = vdwg.mxu0
    %706 = vmatpush.msra.mxu0 %v645
    %707 = vmatpush.msra.mxu0 %v641
    %708 = vmatpush.msra.mxu0 %v637
    %709 = vmatpush.msra.mxu0 %v633
    %710 = vmatpush.msra.mxu0 %v629
    %711 = vmatpush.msra.mxu0 %v625
    %712 = vmatpush.msra.mxu0 %v621
    %713 = vmatpush.msra.mxu0 %v617
    %714 = vmatpush.msra.mxu0 %v613
    %715 = vmatpush.msra.mxu0 %v609
    %716 = vmatpush.msra.mxu0 %v605
    %717 = vmatpush.msra.mxu0 %v601
    %718 = vmatpush.msra.mxu0 %v597
    %719 = vmatpush.msra.mxu0 %v593
    %720 = vmatpush.msra.mxu0 %v589
    %721 = vmatpush.msra.mxu0 %v585
    %722 = vmatmul.f32.gmra.mxu0 %v573
    %v723 = vpop.f32.mrf.mxu0
    %v724 = vadd.f32 0.0, %v723
    %725 = vdwg.mxu0
    %v726 = vadd.f32 %v578, %v664
    %v727 = vadd.f32 %v579, %v684
    %v728 = vadd.f32 %v580, %v704
    %v729 = vadd.f32 %v581, %v724
    %v730 = vxor.u32 %v726, 2147483648
    %v731 = vmul.f32 %v730, 1.442695
    %v732 = vpow.pop %v731
    %v733 = vadd.f32 %v732, 1.0
    %v734 = vrcp.pop %v733
    %v735 = vmul.f32 %v733, %v734
    %v736 = vsub.f32 1.0, %v735
    %v737 = vmul.f32 %v734, %v736
    %v738 = vadd.f32 %v734, %v737
    %vm739 = vweird.f32 %v733
    %vm740 = vweird.f32 %v734
    %vm741 = vmor %vm739, %vm740
    %v742 = vsel %vm741, %v734, %v738
    %v743 = vand.u32 2147483647, %v733
    %vm744 = vcmp.eq.f32.partialorder %v743, 8.507059e+37
    %v745 = vand.u32 %v733, 2147483648
    %v746 = vor.u32 1.1754944e-38, %v745
    %v747 = vsel %vm744, %v746, %v742
    %v748 = vmul.f32 1.0, %v747
    %v749 = vxor.u32 %v727, 2147483648
    %v750 = vmul.f32 %v749, 1.442695
    %v751 = vpow.pop %v750
    %v752 = vadd.f32 %v751, 1.0
    %v753 = vrcp.pop %v752
    %v754 = vmul.f32 %v752, %v753
    %v755 = vsub.f32 1.0, %v754
    %v756 = vmul.f32 %v753, %v755
    %v757 = vadd.f32 %v753, %v756
    %vm758 = vweird.f32 %v752
    %vm759 = vweird.f32 %v753
    %vm760 = vmor %vm758, %vm759
    %v761 = vsel %vm760, %v753, %v757
    %v762 = vand.u32 2147483647, %v752
    %vm763 = vcmp.eq.f32.partialorder %v762, 8.507059e+37
    %v764 = vand.u32 %v752, 2147483648
    %v765 = vor.u32 1.1754944e-38, %v764
    %v766 = vsel %vm763, %v765, %v761
    %v767 = vmul.f32 1.0, %v766
    %v768 = vtanh.pop %v728
    %v769 = vxor.u32 %v729, 2147483648
    %v770 = vmul.f32 %v769, 1.442695
    %v771 = vpow.pop %v770
    %v772 = vadd.f32 %v771, 1.0
    %v773 = vrcp.pop %v772
    %v774 = vmul.f32 %v772, %v773
    %v775 = vsub.f32 1.0, %v774
    %v776 = vmul.f32 %v773, %v775
    %v777 = vadd.f32 %v773, %v776
    %vm778 = vweird.f32 %v772
    %vm779 = vweird.f32 %v773
    %vm780 = vmor %vm778, %vm779
    %v781 = vsel %vm780, %v773, %v777
    %v782 = vand.u32 2147483647, %v772
    %vm783 = vcmp.eq.f32.partialorder %v782, 8.507059e+37
    %v784 = vand.u32 %v772, 2147483648
    %v785 = vor.u32 1.1754944e-38, %v784
    %v786 = vsel %vm783, %v785, %v781
    %v787 = vmul.f32 1.0, %v786
    %v788 = vmul.f32 %v767, %v571
    %v789 = vmul.f32 %v748, %v768
    %v790 = vadd.f32 %v788, %v789
    %v791 = vtanh.pop %v790
    %v792 = vmul.f32 %v787, %v791
    %s793 = scalar_lea.vmem [#allocation5], 8
    %794 = vst [vmem:[%s793] sm:$0xff] %v792
    %s795 = smul.u32 2, 4
    %s796 = smul.addr %s795, 8
    %s797 = scalar_lea.vmem [#allocation4], %s796
    %v798 = vld [vmem:[%s797] sm:$0xff]
    %v799 = vld [vmem:[%s797 + $0x8] sm:$0xff]
    %v800 = vld [vmem:[%s797 + $0x10] sm:$0xff]
    %v801 = vld [vmem:[%s797 + $0x18] sm:$0xff]
    %v802 = vld [vmem:[#allocation8] sm:$0xff]
    %v803 = vld [vmem:[#allocation8 + $0x8] sm:$0xff]
    %v804 = vld [vmem:[#allocation8 + $0x10] sm:$0xff]
    %v805 = vld [vmem:[#allocation8 + $0x18] sm:$0xff]
    %v806 = vld [vmem:[#allocation8 + $0x20] sm:$0xff]
    %v807 = vld [vmem:[#allocation8 + $0x28] sm:$0xff]
    %v808 = vld [vmem:[#allocation8 + $0x30] sm:$0xff]
    %v809 = vld [vmem:[#allocation8 + $0x38] sm:$0xff]
    %v810 = vld [vmem:[#allocation8 + $0x40] sm:$0xff]
    %v811 = vld [vmem:[#allocation8 + $0x48] sm:$0xff]
    %v812 = vld [vmem:[#allocation8 + $0x50] sm:$0xff]
    %v813 = vld [vmem:[#allocation8 + $0x58] sm:$0xff]
    %v814 = vld [vmem:[#allocation8 + $0x60] sm:$0xff]
    %v815 = vld [vmem:[#allocation8 + $0x68] sm:$0xff]
    %v816 = vld [vmem:[#allocation8 + $0x70] sm:$0xff]
    %v817 = vld [vmem:[#allocation8 + $0x78] sm:$0xff]
    %v818 = vld [vmem:[#allocation8 + $0x80] sm:$0xff]
    %v819 = vld [vmem:[#allocation8 + $0x88] sm:$0xff]
    %v820 = vld [vmem:[#allocation8 + $0x90] sm:$0xff]
    %v821 = vld [vmem:[#allocation8 + $0x98] sm:$0xff]
    %v822 = vld [vmem:[#allocation8 + $0xa0] sm:$0xff]
    %v823 = vld [vmem:[#allocation8 + $0xa8] sm:$0xff]
    %v824 = vld [vmem:[#allocation8 + $0xb0] sm:$0xff]
    %v825 = vld [vmem:[#allocation8 + $0xb8] sm:$0xff]
    %v826 = vld [vmem:[#allocation8 + $0xc0] sm:$0xff]
    %v827 = vld [vmem:[#allocation8 + $0xc8] sm:$0xff]
    %v828 = vld [vmem:[#allocation8 + $0xd0] sm:$0xff]
    %v829 = vld [vmem:[#allocation8 + $0xd8] sm:$0xff]
    %v830 = vld [vmem:[#allocation8 + $0xe0] sm:$0xff]
    %v831 = vld [vmem:[#allocation8 + $0xe8] sm:$0xff]
    %v832 = vld [vmem:[#allocation8 + $0xf0] sm:$0xff]
    %v833 = vld [vmem:[#allocation8 + $0xf8] sm:$0xff]
    %v834 = vld [vmem:[#allocation8 + $0x100] sm:$0xff]
    %v835 = vld [vmem:[#allocation8 + $0x108] sm:$0xff]
    %v836 = vld [vmem:[#allocation8 + $0x110] sm:$0xff]
    %v837 = vld [vmem:[#allocation8 + $0x118] sm:$0xff]
    %v838 = vld [vmem:[#allocation8 + $0x120] sm:$0xff]
    %v839 = vld [vmem:[#allocation8 + $0x128] sm:$0xff]
    %v840 = vld [vmem:[#allocation8 + $0x130] sm:$0xff]
    %v841 = vld [vmem:[#allocation8 + $0x138] sm:$0xff]
    %v842 = vld [vmem:[#allocation8 + $0x140] sm:$0xff]
    %v843 = vld [vmem:[#allocation8 + $0x148] sm:$0xff]
    %v844 = vld [vmem:[#allocation8 + $0x150] sm:$0xff]
    %v845 = vld [vmem:[#allocation8 + $0x158] sm:$0xff]
    %v846 = vld [vmem:[#allocation8 + $0x160] sm:$0xff]
    %v847 = vld [vmem:[#allocation8 + $0x168] sm:$0xff]
    %v848 = vld [vmem:[#allocation8 + $0x170] sm:$0xff]
    %v849 = vld [vmem:[#allocation8 + $0x178] sm:$0xff]
    %v850 = vld [vmem:[#allocation8 + $0x180] sm:$0xff]
    %v851 = vld [vmem:[#allocation8 + $0x188] sm:$0xff]
    %v852 = vld [vmem:[#allocation8 + $0x190] sm:$0xff]
    %v853 = vld [vmem:[#allocation8 + $0x198] sm:$0xff]
    %v854 = vld [vmem:[#allocation8 + $0x1a0] sm:$0xff]
    %v855 = vld [vmem:[#allocation8 + $0x1a8] sm:$0xff]
    %v856 = vld [vmem:[#allocation8 + $0x1b0] sm:$0xff]
    %v857 = vld [vmem:[#allocation8 + $0x1b8] sm:$0xff]
    %v858 = vld [vmem:[#allocation8 + $0x1c0] sm:$0xff]
    %v859 = vld [vmem:[#allocation8 + $0x1c8] sm:$0xff]
    %v860 = vld [vmem:[#allocation8 + $0x1d0] sm:$0xff]
    %v861 = vld [vmem:[#allocation8 + $0x1d8] sm:$0xff]
    %v862 = vld [vmem:[#allocation8 + $0x1e0] sm:$0xff]
    %v863 = vld [vmem:[#allocation8 + $0x1e8] sm:$0xff]
    %v864 = vld [vmem:[#allocation8 + $0x1f0] sm:$0xff]
    %v865 = vld [vmem:[#allocation8 + $0x1f8] sm:$0xff]
    %866 = vmatpush.msra.mxu0 %v862
    %867 = vmatpush.msra.mxu0 %v858
    %868 = vmatpush.msra.mxu0 %v854
    %869 = vmatpush.msra.mxu0 %v850
    %870 = vmatpush.msra.mxu0 %v846
    %871 = vmatpush.msra.mxu0 %v842
    %872 = vmatpush.msra.mxu0 %v838
    %873 = vmatpush.msra.mxu0 %v834
    %874 = vmatpush.msra.mxu0 %v830
    %875 = vmatpush.msra.mxu0 %v826
    %876 = vmatpush.msra.mxu0 %v822
    %877 = vmatpush.msra.mxu0 %v818
    %878 = vmatpush.msra.mxu0 %v814
    %879 = vmatpush.msra.mxu0 %v810
    %880 = vmatpush.msra.mxu0 %v806
    %881 = vmatpush.msra.mxu0 %v802
    %882 = vmatmul.f32.gmra.mxu0 %v792
    %v883 = vpop.f32.mrf.mxu0
    %v884 = vadd.f32 0.0, %v883
    %885 = vdwg.mxu0
    %886 = vmatpush.msra.mxu0 %v863
    %887 = vmatpush.msra.mxu0 %v859
    %888 = vmatpush.msra.mxu0 %v855
    %889 = vmatpush.msra.mxu0 %v851
    %890 = vmatpush.msra.mxu0 %v847
    %891 = vmatpush.msra.mxu0 %v843
    %892 = vmatpush.msra.mxu0 %v839
    %893 = vmatpush.msra.mxu0 %v835
    %894 = vmatpush.msra.mxu0 %v831
    %895 = vmatpush.msra.mxu0 %v827
    %896 = vmatpush.msra.mxu0 %v823
    %897 = vmatpush.msra.mxu0 %v819
    %898 = vmatpush.msra.mxu0 %v815
    %899 = vmatpush.msra.mxu0 %v811
    %900 = vmatpush.msra.mxu0 %v807
    %901 = vmatpush.msra.mxu0 %v803
    %902 = vmatmul.f32.gmra.mxu0 %v792
    %v903 = vpop.f32.mrf.mxu0
    %v904 = vadd.f32 0.0, %v903
    %905 = vdwg.mxu0
    %906 = vmatpush.msra.mxu0 %v864
    %907 = vmatpush.msra.mxu0 %v860
    %908 = vmatpush.msra.mxu0 %v856
    %909 = vmatpush.msra.mxu0 %v852
    %910 = vmatpush.msra.mxu0 %v848
    %911 = vmatpush.msra.mxu0 %v844
    %912 = vmatpush.msra.mxu0 %v840
    %913 = vmatpush.msra.mxu0 %v836
    %914 = vmatpush.msra.mxu0 %v832
    %915 = vmatpush.msra.mxu0 %v828
    %916 = vmatpush.msra.mxu0 %v824
    %917 = vmatpush.msra.mxu0 %v820
    %918 = vmatpush.msra.mxu0 %v816
    %919 = vmatpush.msra.mxu0 %v812
    %920 = vmatpush.msra.mxu0 %v808
    %921 = vmatpush.msra.mxu0 %v804
    %922 = vmatmul.f32.gmra.mxu0 %v792
    %v923 = vpop.f32.mrf.mxu0
    %v924 = vadd.f32 0.0, %v923
    %925 = vdwg.mxu0
    %926 = vmatpush.msra.mxu0 %v865
    %927 = vmatpush.msra.mxu0 %v861
    %928 = vmatpush.msra.mxu0 %v857
    %929 = vmatpush.msra.mxu0 %v853
    %930 = vmatpush.msra.mxu0 %v849
    %931 = vmatpush.msra.mxu0 %v845
    %932 = vmatpush.msra.mxu0 %v841
    %933 = vmatpush.msra.mxu0 %v837
    %934 = vmatpush.msra.mxu0 %v833
    %935 = vmatpush.msra.mxu0 %v829
    %936 = vmatpush.msra.mxu0 %v825
    %937 = vmatpush.msra.mxu0 %v821
    %938 = vmatpush.msra.mxu0 %v817
    %939 = vmatpush.msra.mxu0 %v813
    %940 = vmatpush.msra.mxu0 %v809
    %941 = vmatpush.msra.mxu0 %v805
    %942 = vmatmul.f32.gmra.mxu0 %v792
    %v943 = vpop.f32.mrf.mxu0
    %v944 = vadd.f32 0.0, %v943
    %945 = vdwg.mxu0
    %v946 = vadd.f32 %v798, %v884
    %v947 = vadd.f32 %v799, %v904
    %v948 = vadd.f32 %v800, %v924
    %v949 = vadd.f32 %v801, %v944
    %v950 = vxor.u32 %v946, 2147483648
    %v951 = vmul.f32 %v950, 1.442695
    %v952 = vpow.pop %v951
    %v953 = vadd.f32 %v952, 1.0
    %v954 = vrcp.pop %v953
    %v955 = vmul.f32 %v953, %v954
    %v956 = vsub.f32 1.0, %v955
    %v957 = vmul.f32 %v954, %v956
    %v958 = vadd.f32 %v954, %v957
    %vm959 = vweird.f32 %v953
    %vm960 = vweird.f32 %v954
    %vm961 = vmor %vm959, %vm960
    %v962 = vsel %vm961, %v954, %v958
    %v963 = vand.u32 2147483647, %v953
    %vm964 = vcmp.eq.f32.partialorder %v963, 8.507059e+37
    %v965 = vand.u32 %v953, 2147483648
    %v966 = vor.u32 1.1754944e-38, %v965
    %v967 = vsel %vm964, %v966, %v962
    %v968 = vmul.f32 1.0, %v967
    %v969 = vxor.u32 %v947, 2147483648
    %v970 = vmul.f32 %v969, 1.442695
    %v971 = vpow.pop %v970
    %v972 = vadd.f32 %v971, 1.0
    %v973 = vrcp.pop %v972
    %v974 = vmul.f32 %v972, %v973
    %v975 = vsub.f32 1.0, %v974
    %v976 = vmul.f32 %v973, %v975
    %v977 = vadd.f32 %v973, %v976
    %vm978 = vweird.f32 %v972
    %vm979 = vweird.f32 %v973
    %vm980 = vmor %vm978, %vm979
    %v981 = vsel %vm980, %v973, %v977
    %v982 = vand.u32 2147483647, %v972
    %vm983 = vcmp.eq.f32.partialorder %v982, 8.507059e+37
    %v984 = vand.u32 %v972, 2147483648
    %v985 = vor.u32 1.1754944e-38, %v984
    %v986 = vsel %vm983, %v985, %v981
    %v987 = vmul.f32 1.0, %v986
    %v988 = vtanh.pop %v948
    %v989 = vxor.u32 %v949, 2147483648
    %v990 = vmul.f32 %v989, 1.442695
    %v991 = vpow.pop %v990
    %v992 = vadd.f32 %v991, 1.0
    %v993 = vrcp.pop %v992
    %v994 = vmul.f32 %v992, %v993
    %v995 = vsub.f32 1.0, %v994
    %v996 = vmul.f32 %v993, %v995
    %v997 = vadd.f32 %v993, %v996
    %vm998 = vweird.f32 %v992
    %vm999 = vweird.f32 %v993
    %vm1000 = vmor %vm998, %vm999
    %v1001 = vsel %vm1000, %v993, %v997
    %v1002 = vand.u32 2147483647, %v992
    %vm1003 = vcmp.eq.f32.partialorder %v1002, 8.507059e+37
    %v1004 = vand.u32 %v992, 2147483648
    %v1005 = vor.u32 1.1754944e-38, %v1004
    %v1006 = vsel %vm1003, %v1005, %v1001
    %v1007 = vmul.f32 1.0, %v1006
    %v1008 = vmul.f32 %v987, %v790
    %v1009 = vmul.f32 %v968, %v988
    %v1010 = vadd.f32 %v1008, %v1009
    %v1011 = vtanh.pop %v1010
    %v1012 = vmul.f32 %v1007, %v1011
    %s1013 = scalar_lea.vmem [#allocation5], 16
    %1014 = vst [vmem:[%s1013] sm:$0xff] %v1012
    %s1015 = smul.u32 3, 4
    %s1016 = smul.addr %s1015, 8
    %s1017 = scalar_lea.vmem [#allocation4], %s1016
    %v1018 = vld [vmem:[%s1017] sm:$0xff]
    %v1019 = vld [vmem:[%s1017 + $0x8] sm:$0xff]
    %v1020 = vld [vmem:[%s1017 + $0x10] sm:$0xff]
    %v1021 = vld [vmem:[%s1017 + $0x18] sm:$0xff]
    %v1022 = vld [vmem:[#allocation8] sm:$0xff]
    %v1023 = vld [vmem:[#allocation8 + $0x8] sm:$0xff]
    %v1024 = vld [vmem:[#allocation8 + $0x10] sm:$0xff]
    %v1025 = vld [vmem:[#allocation8 + $0x18] sm:$0xff]
    %v1026 = vld [vmem:[#allocation8 + $0x20] sm:$0xff]
    %v1027 = vld [vmem:[#allocation8 + $0x28] sm:$0xff]
    %v1028 = vld [vmem:[#allocation8 + $0x30] sm:$0xff]
    %v1029 = vld [vmem:[#allocation8 + $0x38] sm:$0xff]
    %v1030 = vld [vmem:[#allocation8 + $0x40] sm:$0xff]
    %v1031 = vld [vmem:[#allocation8 + $0x48] sm:$0xff]
    %v1032 = vld [vmem:[#allocation8 + $0x50] sm:$0xff]
    %v1033 = vld [vmem:[#allocation8 + $0x58] sm:$0xff]
    %v1034 = vld [vmem:[#allocation8 + $0x60] sm:$0xff]
    %v1035 = vld [vmem:[#allocation8 + $0x68] sm:$0xff]
    %v1036 = vld [vmem:[#allocation8 + $0x70] sm:$0xff]
    %v1037 = vld [vmem:[#allocation8 + $0x78] sm:$0xff]
    %v1038 = vld [vmem:[#allocation8 + $0x80] sm:$0xff]
    %v1039 = vld [vmem:[#allocation8 + $0x88] sm:$0xff]
    %v1040 = vld [vmem:[#allocation8 + $0x90] sm:$0xff]
    %v1041 = vld [vmem:[#allocation8 + $0x98] sm:$0xff]
    %v1042 = vld [vmem:[#allocation8 + $0xa0] sm:$0xff]
    %v1043 = vld [vmem:[#allocation8 + $0xa8] sm:$0xff]
    %v1044 = vld [vmem:[#allocation8 + $0xb0] sm:$0xff]
    %v1045 = vld [vmem:[#allocation8 + $0xb8] sm:$0xff]
    %v1046 = vld [vmem:[#allocation8 + $0xc0] sm:$0xff]
    %v1047 = vld [vmem:[#allocation8 + $0xc8] sm:$0xff]
    %v1048 = vld [vmem:[#allocation8 + $0xd0] sm:$0xff]
    %v1049 = vld [vmem:[#allocation8 + $0xd8] sm:$0xff]
    %v1050 = vld [vmem:[#allocation8 + $0xe0] sm:$0xff]
    %v1051 = vld [vmem:[#allocation8 + $0xe8] sm:$0xff]
    %v1052 = vld [vmem:[#allocation8 + $0xf0] sm:$0xff]
    %v1053 = vld [vmem:[#allocation8 + $0xf8] sm:$0xff]
    %v1054 = vld [vmem:[#allocation8 + $0x100] sm:$0xff]
    %v1055 = vld [vmem:[#allocation8 + $0x108] sm:$0xff]
    %v1056 = vld [vmem:[#allocation8 + $0x110] sm:$0xff]
    %v1057 = vld [vmem:[#allocation8 + $0x118] sm:$0xff]
    %v1058 = vld [vmem:[#allocation8 + $0x120] sm:$0xff]
    %v1059 = vld [vmem:[#allocation8 + $0x128] sm:$0xff]
    %v1060 = vld [vmem:[#allocation8 + $0x130] sm:$0xff]
    %v1061 = vld [vmem:[#allocation8 + $0x138] sm:$0xff]
    %v1062 = vld [vmem:[#allocation8 + $0x140] sm:$0xff]
    %v1063 = vld [vmem:[#allocation8 + $0x148] sm:$0xff]
    %v1064 = vld [vmem:[#allocation8 + $0x150] sm:$0xff]
    %v1065 = vld [vmem:[#allocation8 + $0x158] sm:$0xff]
    %v1066 = vld [vmem:[#allocation8 + $0x160] sm:$0xff]
    %v1067 = vld [vmem:[#allocation8 + $0x168] sm:$0xff]
    %v1068 = vld [vmem:[#allocation8 + $0x170] sm:$0xff]
    %v1069 = vld [vmem:[#allocation8 + $0x178] sm:$0xff]
    %v1070 = vld [vmem:[#allocation8 + $0x180] sm:$0xff]
    %v1071 = vld [vmem:[#allocation8 + $0x188] sm:$0xff]
    %v1072 = vld [vmem:[#allocation8 + $0x190] sm:$0xff]
    %v1073 = vld [vmem:[#allocation8 + $0x198] sm:$0xff]
    %v1074 = vld [vmem:[#allocation8 + $0x1a0] sm:$0xff]
    %v1075 = vld [vmem:[#allocation8 + $0x1a8] sm:$0xff]
    %v1076 = vld [vmem:[#allocation8 + $0x1b0] sm:$0xff]
    %v1077 = vld [vmem:[#allocation8 + $0x1b8] sm:$0xff]
    %v1078 = vld [vmem:[#allocation8 + $0x1c0] sm:$0xff]
    %v1079 = vld [vmem:[#allocation8 + $0x1c8] sm:$0xff]
    %v1080 = vld [vmem:[#allocation8 + $0x1d0] sm:$0xff]
    %v1081 = vld [vmem:[#allocation8 + $0x1d8] sm:$0xff]
    %v1082 = vld [vmem:[#allocation8 + $0x1e0] sm:$0xff]
    %v1083 = vld [vmem:[#allocation8 + $0x1e8] sm:$0xff]
    %v1084 = vld [vmem:[#allocation8 + $0x1f0] sm:$0xff]
    %v1085 = vld [vmem:[#allocation8 + $0x1f8] sm:$0xff]
    %1086 = vmatpush.msra.mxu0 %v1082
    %1087 = vmatpush.msra.mxu0 %v1078
    %1088 = vmatpush.msra.mxu0 %v1074
    %1089 = vmatpush.msra.mxu0 %v1070
    %1090 = vmatpush.msra.mxu0 %v1066
    %1091 = vmatpush.msra.mxu0 %v1062
    %1092 = vmatpush.msra.mxu0 %v1058
    %1093 = vmatpush.msra.mxu0 %v1054
    %1094 = vmatpush.msra.mxu0 %v1050
    %1095 = vmatpush.msra.mxu0 %v1046
    %1096 = vmatpush.msra.mxu0 %v1042
    %1097 = vmatpush.msra.mxu0 %v1038
    %1098 = vmatpush.msra.mxu0 %v1034
    %1099 = vmatpush.msra.mxu0 %v1030
    %1100 = vmatpush.msra.mxu0 %v1026
    %1101 = vmatpush.msra.mxu0 %v1022
    %1102 = vmatmul.f32.gmra.mxu0 %v1012
    %v1103 = vpop.f32.mrf.mxu0
    %v1104 = vadd.f32 0.0, %v1103
    %1105 = vdwg.mxu0
    %1106 = vmatpush.msra.mxu0 %v1083
    %1107 = vmatpush.msra.mxu0 %v1079
    %1108 = vmatpush.msra.mxu0 %v1075
    %1109 = vmatpush.msra.mxu0 %v1071
    %1110 = vmatpush.msra.mxu0 %v1067
    %1111 = vmatpush.msra.mxu0 %v1063
    %1112 = vmatpush.msra.mxu0 %v1059
    %1113 = vmatpush.msra.mxu0 %v1055
    %1114 = vmatpush.msra.mxu0 %v1051
    %1115 = vmatpush.msra.mxu0 %v1047
    %1116 = vmatpush.msra.mxu0 %v1043
    %1117 = vmatpush.msra.mxu0 %v1039
    %1118 = vmatpush.msra.mxu0 %v1035
    %1119 = vmatpush.msra.mxu0 %v1031
    %1120 = vmatpush.msra.mxu0 %v1027
    %1121 = vmatpush.msra.mxu0 %v1023
    %1122 = vmatmul.f32.gmra.mxu0 %v1012
    %v1123 = vpop.f32.mrf.mxu0
    %v1124 = vadd.f32 0.0, %v1123
    %1125 = vdwg.mxu0
    %1126 = vmatpush.msra.mxu0 %v1084
    %1127 = vmatpush.msra.mxu0 %v1080
    %1128 = vmatpush.msra.mxu0 %v1076
    %1129 = vmatpush.msra.mxu0 %v1072
    %1130 = vmatpush.msra.mxu0 %v1068
    %1131 = vmatpush.msra.mxu0 %v1064
    %1132 = vmatpush.msra.mxu0 %v1060
    %1133 = vmatpush.msra.mxu0 %v1056
    %1134 = vmatpush.msra.mxu0 %v1052
    %1135 = vmatpush.msra.mxu0 %v1048
    %1136 = vmatpush.msra.mxu0 %v1044
    %1137 = vmatpush.msra.mxu0 %v1040
    %1138 = vmatpush.msra.mxu0 %v1036
    %1139 = vmatpush.msra.mxu0 %v1032
    %1140 = vmatpush.msra.mxu0 %v1028
    %1141 = vmatpush.msra.mxu0 %v1024
    %1142 = vmatmul.f32.gmra.mxu0 %v1012
    %v1143 = vpop.f32.mrf.mxu0
    %v1144 = vadd.f32 0.0, %v1143
    %1145 = vdwg.mxu0
    %1146 = vmatpush.msra.mxu0 %v1085
    %1147 = vmatpush.msra.mxu0 %v1081
    %1148 = vmatpush.msra.mxu0 %v1077
    %1149 = vmatpush.msra.mxu0 %v1073
    %1150 = vmatpush.msra.mxu0 %v1069
    %1151 = vmatpush.msra.mxu0 %v1065
    %1152 = vmatpush.msra.mxu0 %v1061
    %1153 = vmatpush.msra.mxu0 %v1057
    %1154 = vmatpush.msra.mxu0 %v1053
    %1155 = vmatpush.msra.mxu0 %v1049
    %1156 = vmatpush.msra.mxu0 %v1045
    %1157 = vmatpush.msra.mxu0 %v1041
    %1158 = vmatpush.msra.mxu0 %v1037
    %1159 = vmatpush.msra.mxu0 %v1033
    %1160 = vmatpush.msra.mxu0 %v1029
    %1161 = vmatpush.msra.mxu0 %v1025
    %1162 = vmatmul.f32.gmra.mxu0 %v1012
    %v1163 = vpop.f32.mrf.mxu0
    %v1164 = vadd.f32 0.0, %v1163
    %1165 = vdwg.mxu0
    %v1166 = vadd.f32 %v1018, %v1104
    %v1167 = vadd.f32 %v1019, %v1124
    %v1168 = vadd.f32 %v1020, %v1144
    %v1169 = vadd.f32 %v1021, %v1164
    %v1170 = vxor.u32 %v1166, 2147483648
    %v1171 = vmul.f32 %v1170, 1.442695
    %v1172 = vpow.pop %v1171
    %v1173 = vadd.f32 %v1172, 1.0
    %v1174 = vrcp.pop %v1173
    %v1175 = vmul.f32 %v1173, %v1174
    %v1176 = vsub.f32 1.0, %v1175
    %v1177 = vmul.f32 %v1174, %v1176
    %v1178 = vadd.f32 %v1174, %v1177
    %vm1179 = vweird.f32 %v1173
    %vm1180 = vweird.f32 %v1174
    %vm1181 = vmor %vm1179, %vm1180
    %v1182 = vsel %vm1181, %v1174, %v1178
    %v1183 = vand.u32 2147483647, %v1173
    %vm1184 = vcmp.eq.f32.partialorder %v1183, 8.507059e+37
    %v1185 = vand.u32 %v1173, 2147483648
    %v1186 = vor.u32 1.1754944e-38, %v1185
    %v1187 = vsel %vm1184, %v1186, %v1182
    %v1188 = vmul.f32 1.0, %v1187
    %v1189 = vxor.u32 %v1167, 2147483648
    %v1190 = vmul.f32 %v1189, 1.442695
    %v1191 = vpow.pop %v1190
    %v1192 = vadd.f32 %v1191, 1.0
    %v1193 = vrcp.pop %v1192
    %v1194 = vmul.f32 %v1192, %v1193
    %v1195 = vsub.f32 1.0, %v1194
    %v1196 = vmul.f32 %v1193, %v1195
    %v1197 = vadd.f32 %v1193, %v1196
    %vm1198 = vweird.f32 %v1192
    %vm1199 = vweird.f32 %v1193
    %vm1200 = vmor %vm1198, %vm1199
    %v1201 = vsel %vm1200, %v1193, %v1197
    %v1202 = vand.u32 2147483647, %v1192
    %vm1203 = vcmp.eq.f32.partialorder %v1202, 8.507059e+37
    %v1204 = vand.u32 %v1192, 2147483648
    %v1205 = vor.u32 1.1754944e-38, %v1204
    %v1206 = vsel %vm1203, %v1205, %v1201
    %v1207 = vmul.f32 1.0, %v1206
    %v1208 = vtanh.pop %v1168
    %v1209 = vxor.u32 %v1169, 2147483648
    %v1210 = vmul.f32 %v1209, 1.442695
    %v1211 = vpow.pop %v1210
    %v1212 = vadd.f32 %v1211, 1.0
    %v1213 = vrcp.pop %v1212
    %v1214 = vmul.f32 %v1212, %v1213
    %v1215 = vsub.f32 1.0, %v1214
    %v1216 = vmul.f32 %v1213, %v1215
    %v1217 = vadd.f32 %v1213, %v1216
    %vm1218 = vweird.f32 %v1212
    %vm1219 = vweird.f32 %v1213
    %vm1220 = vmor %vm1218, %vm1219
    %v1221 = vsel %vm1220, %v1213, %v1217
    %v1222 = vand.u32 2147483647, %v1212
    %vm1223 = vcmp.eq.f32.partialorder %v1222, 8.507059e+37
    %v1224 = vand.u32 %v1212, 2147483648
    %v1225 = vor.u32 1.1754944e-38, %v1224
    %v1226 = vsel %vm1223, %v1225, %v1221
    %v1227 = vmul.f32 1.0, %v1226
    %v1228 = vmul.f32 %v1207, %v1010
    %v1229 = vmul.f32 %v1188, %v1208
    %v1230 = vadd.f32 %v1228, %v1229
    %v1231 = vtanh.pop %v1230
    %v1232 = vmul.f32 %v1227, %v1231
    %s1233 = scalar_lea.vmem [#allocation5], 24
    %1234 = vst [vmem:[%s1233] sm:$0xff] %v1232
    %s1235 = smul.u32 4, 4
    %s1236 = smul.addr %s1235, 8
    %s1237 = scalar_lea.vmem [#allocation4], %s1236
    %v1238 = vld [vmem:[%s1237] sm:$0xff]
    %v1239 = vld [vmem:[%s1237 + $0x8] sm:$0xff]
    %v1240 = vld [vmem:[%s1237 + $0x10] sm:$0xff]
    %v1241 = vld [vmem:[%s1237 + $0x18] sm:$0xff]
    %v1242 = vld [vmem:[#allocation8] sm:$0xff]
    %v1243 = vld [vmem:[#allocation8 + $0x8] sm:$0xff]
    %v1244 = vld [vmem:[#allocation8 + $0x10] sm:$0xff]
    %v1245 = vld [vmem:[#allocation8 + $0x18] sm:$0xff]
    %v1246 = vld [vmem:[#allocation8 + $0x20] sm:$0xff]
    %v1247 = vld [vmem:[#allocation8 + $0x28] sm:$0xff]
    %v1248 = vld [vmem:[#allocation8 + $0x30] sm:$0xff]
    %v1249 = vld [vmem:[#allocation8 + $0x38] sm:$0xff]
    %v1250 = vld [vmem:[#allocation8 + $0x40] sm:$0xff]
    %v1251 = vld [vmem:[#allocation8 + $0x48] sm:$0xff]
    %v1252 = vld [vmem:[#allocation8 + $0x50] sm:$0xff]
    %v1253 = vld [vmem:[#allocation8 + $0x58] sm:$0xff]
    %v1254 = vld [vmem:[#allocation8 + $0x60] sm:$0xff]
    %v1255 = vld [vmem:[#allocation8 + $0x68] sm:$0xff]
    %v1256 = vld [vmem:[#allocation8 + $0x70] sm:$0xff]
    %v1257 = vld [vmem:[#allocation8 + $0x78] sm:$0xff]
    %v1258 = vld [vmem:[#allocation8 + $0x80] sm:$0xff]
    %v1259 = vld [vmem:[#allocation8 + $0x88] sm:$0xff]
    %v1260 = vld [vmem:[#allocation8 + $0x90] sm:$0xff]
    %v1261 = vld [vmem:[#allocation8 + $0x98] sm:$0xff]
    %v1262 = vld [vmem:[#allocation8 + $0xa0] sm:$0xff]
    %v1263 = vld [vmem:[#allocation8 + $0xa8] sm:$0xff]
    %v1264 = vld [vmem:[#allocation8 + $0xb0] sm:$0xff]
    %v1265 = vld [vmem:[#allocation8 + $0xb8] sm:$0xff]
    %v1266 = vld [vmem:[#allocation8 + $0xc0] sm:$0xff]
    %v1267 = vld [vmem:[#allocation8 + $0xc8] sm:$0xff]
    %v1268 = vld [vmem:[#allocation8 + $0xd0] sm:$0xff]
    %v1269 = vld [vmem:[#allocation8 + $0xd8] sm:$0xff]
    %v1270 = vld [vmem:[#allocation8 + $0xe0] sm:$0xff]
    %v1271 = vld [vmem:[#allocation8 + $0xe8] sm:$0xff]
    %v1272 = vld [vmem:[#allocation8 + $0xf0] sm:$0xff]
    %v1273 = vld [vmem:[#allocation8 + $0xf8] sm:$0xff]
    %v1274 = vld [vmem:[#allocation8 + $0x100] sm:$0xff]
    %v1275 = vld [vmem:[#allocation8 + $0x108] sm:$0xff]
    %v1276 = vld [vmem:[#allocation8 + $0x110] sm:$0xff]
    %v1277 = vld [vmem:[#allocation8 + $0x118] sm:$0xff]
    %v1278 = vld [vmem:[#allocation8 + $0x120] sm:$0xff]
    %v1279 = vld [vmem:[#allocation8 + $0x128] sm:$0xff]
    %v1280 = vld [vmem:[#allocation8 + $0x130] sm:$0xff]
    %v1281 = vld [vmem:[#allocation8 + $0x138] sm:$0xff]
    %v1282 = vld [vmem:[#allocation8 + $0x140] sm:$0xff]
    %v1283 = vld [vmem:[#allocation8 + $0x148] sm:$0xff]
    %v1284 = vld [vmem:[#allocation8 + $0x150] sm:$0xff]
    %v1285 = vld [vmem:[#allocation8 + $0x158] sm:$0xff]
    %v1286 = vld [vmem:[#allocation8 + $0x160] sm:$0xff]
    %v1287 = vld [vmem:[#allocation8 + $0x168] sm:$0xff]
    %v1288 = vld [vmem:[#allocation8 + $0x170] sm:$0xff]
    %v1289 = vld [vmem:[#allocation8 + $0x178] sm:$0xff]
    %v1290 = vld [vmem:[#allocation8 + $0x180] sm:$0xff]
    %v1291 = vld [vmem:[#allocation8 + $0x188] sm:$0xff]
    %v1292 = vld [vmem:[#allocation8 + $0x190] sm:$0xff]
    %v1293 = vld [vmem:[#allocation8 + $0x198] sm:$0xff]
    %v1294 = vld [vmem:[#allocation8 + $0x1a0] sm:$0xff]
    %v1295 = vld [vmem:[#allocation8 + $0x1a8] sm:$0xff]
    %v1296 = vld [vmem:[#allocation8 + $0x1b0] sm:$0xff]
    %v1297 = vld [vmem:[#allocation8 + $0x1b8] sm:$0xff]
    %v1298 = vld [vmem:[#allocation8 + $0x1c0] sm:$0xff]
    %v1299 = vld [vmem:[#allocation8 + $0x1c8] sm:$0xff]
    %v1300 = vld [vmem:[#allocation8 + $0x1d0] sm:$0xff]
    %v1301 = vld [vmem:[#allocation8 + $0x1d8] sm:$0xff]
    %v1302 = vld [vmem:[#allocation8 + $0x1e0] sm:$0xff]
    %v1303 = vld [vmem:[#allocation8 + $0x1e8] sm:$0xff]
    %v1304 = vld [vmem:[#allocation8 + $0x1f0] sm:$0xff]
    %v1305 = vld [vmem:[#allocation8 + $0x1f8] sm:$0xff]
    %1306 = vmatpush.msra.mxu0 %v1302
    %1307 = vmatpush.msra.mxu0 %v1298
    %1308 = vmatpush.msra.mxu0 %v1294
    %1309 = vmatpush.msra.mxu0 %v1290
    %1310 = vmatpush.msra.mxu0 %v1286
    %1311 = vmatpush.msra.mxu0 %v1282
    %1312 = vmatpush.msra.mxu0 %v1278
    %1313 = vmatpush.msra.mxu0 %v1274
    %1314 = vmatpush.msra.mxu0 %v1270
    %1315 = vmatpush.msra.mxu0 %v1266
    %1316 = vmatpush.msra.mxu0 %v1262
    %1317 = vmatpush.msra.mxu0 %v1258
    %1318 = vmatpush.msra.mxu0 %v1254
    %1319 = vmatpush.msra.mxu0 %v1250
    %1320 = vmatpush.msra.mxu0 %v1246
    %1321 = vmatpush.msra.mxu0 %v1242
    %1322 = vmatmul.f32.gmra.mxu0 %v1232
    %v1323 = vpop.f32.mrf.mxu0
    %v1324 = vadd.f32 0.0, %v1323
    %1325 = vdwg.mxu0
    %1326 = vmatpush.msra.mxu0 %v1303
    %1327 = vmatpush.msra.mxu0 %v1299
    %1328 = vmatpush.msra.mxu0 %v1295
    %1329 = vmatpush.msra.mxu0 %v1291
    %1330 = vmatpush.msra.mxu0 %v1287
    %1331 = vmatpush.msra.mxu0 %v1283
    %1332 = vmatpush.msra.mxu0 %v1279
    %1333 = vmatpush.msra.mxu0 %v1275
    %1334 = vmatpush.msra.mxu0 %v1271
    %1335 = vmatpush.msra.mxu0 %v1267
    %1336 = vmatpush.msra.mxu0 %v1263
    %1337 = vmatpush.msra.mxu0 %v1259
    %1338 = vmatpush.msra.mxu0 %v1255
    %1339 = vmatpush.msra.mxu0 %v1251
    %1340 = vmatpush.msra.mxu0 %v1247
    %1341 = vmatpush.msra.mxu0 %v1243
    %1342 = vmatmul.f32.gmra.mxu0 %v1232
    %v1343 = vpop.f32.mrf.mxu0
    %v1344 = vadd.f32 0.0, %v1343
    %1345 = vdwg.mxu0
    %1346 = vmatpush.msra.mxu0 %v1304
    %1347 = vmatpush.msra.mxu0 %v1300
    %1348 = vmatpush.msra.mxu0 %v1296
    %1349 = vmatpush.msra.mxu0 %v1292
    %1350 = vmatpush.msra.mxu0 %v1288
    %1351 = vmatpush.msra.mxu0 %v1284
    %1352 = vmatpush.msra.mxu0 %v1280
    %1353 = vmatpush.msra.mxu0 %v1276
    %1354 = vmatpush.msra.mxu0 %v1272
    %1355 = vmatpush.msra.mxu0 %v1268
    %1356 = vmatpush.msra.mxu0 %v1264
    %1357 = vmatpush.msra.mxu0 %v1260
    %1358 = vmatpush.msra.mxu0 %v1256
    %1359 = vmatpush.msra.mxu0 %v1252
    %1360 = vmatpush.msra.mxu0 %v1248
    %1361 = vmatpush.msra.mxu0 %v1244
    %1362 = vmatmul.f32.gmra.mxu0 %v1232
    %v1363 = vpop.f32.mrf.mxu0
    %v1364 = vadd.f32 0.0, %v1363
    %1365 = vdwg.mxu0
    %1366 = vmatpush.msra.mxu0 %v1305
    %1367 = vmatpush.msra.mxu0 %v1301
    %1368 = vmatpush.msra.mxu0 %v1297
    %1369 = vmatpush.msra.mxu0 %v1293
    %1370 = vmatpush.msra.mxu0 %v1289
    %1371 = vmatpush.msra.mxu0 %v1285
    %1372 = vmatpush.msra.mxu0 %v1281
    %1373 = vmatpush.msra.mxu0 %v1277
    %1374 = vmatpush.msra.mxu0 %v1273
    %1375 = vmatpush.msra.mxu0 %v1269
    %1376 = vmatpush.msra.mxu0 %v1265
    %1377 = vmatpush.msra.mxu0 %v1261
    %1378 = vmatpush.msra.mxu0 %v1257
    %1379 = vmatpush.msra.mxu0 %v1253
    %1380 = vmatpush.msra.mxu0 %v1249
    %1381 = vmatpush.msra.mxu0 %v1245
    %1382 = vmatmul.f32.gmra.mxu0 %v1232
    %v1383 = vpop.f32.mrf.mxu0
    %v1384 = vadd.f32 0.0, %v1383
    %1385 = vdwg.mxu0
    %v1386 = vadd.f32 %v1238, %v1324
    %v1387 = vadd.f32 %v1239, %v1344
    %v1388 = vadd.f32 %v1240, %v1364
    %v1389 = vadd.f32 %v1241, %v1384
    %v1390 = vxor.u32 %v1386, 2147483648
    %v1391 = vmul.f32 %v1390, 1.442695
    %v1392 = vpow.pop %v1391
    %v1393 = vadd.f32 %v1392, 1.0
    %v1394 = vrcp.pop %v1393
    %v1395 = vmul.f32 %v1393, %v1394
    %v1396 = vsub.f32 1.0, %v1395
    %v1397 = vmul.f32 %v1394, %v1396
    %v1398 = vadd.f32 %v1394, %v1397
    %vm1399 = vweird.f32 %v1393
    %vm1400 = vweird.f32 %v1394
    %vm1401 = vmor %vm1399, %vm1400
    %v1402 = vsel %vm1401, %v1394, %v1398
    %v1403 = vand.u32 2147483647, %v1393
    %vm1404 = vcmp.eq.f32.partialorder %v1403, 8.507059e+37
    %v1405 = vand.u32 %v1393, 2147483648
    %v1406 = vor.u32 1.1754944e-38, %v1405
    %v1407 = vsel %vm1404, %v1406, %v1402
    %v1408 = vmul.f32 1.0, %v1407
    %v1409 = vxor.u32 %v1387, 2147483648
    %v1410 = vmul.f32 %v1409, 1.442695
    %v1411 = vpow.pop %v1410
    %v1412 = vadd.f32 %v1411, 1.0
    %v1413 = vrcp.pop %v1412
    %v1414 = vmul.f32 %v1412, %v1413
    %v1415 = vsub.f32 1.0, %v1414
    %v1416 = vmul.f32 %v1413, %v1415
    %v1417 = vadd.f32 %v1413, %v1416
    %vm1418 = vweird.f32 %v1412
    %vm1419 = vweird.f32 %v1413
    %vm1420 = vmor %vm1418, %vm1419
    %v1421 = vsel %vm1420, %v1413, %v1417
    %v1422 = vand.u32 2147483647, %v1412
    %vm1423 = vcmp.eq.f32.partialorder %v1422, 8.507059e+37
    %v1424 = vand.u32 %v1412, 2147483648
    %v1425 = vor.u32 1.1754944e-38, %v1424
    %v1426 = vsel %vm1423, %v1425, %v1421
    %v1427 = vmul.f32 1.0, %v1426
    %v1428 = vtanh.pop %v1388
    %v1429 = vxor.u32 %v1389, 2147483648
    %v1430 = vmul.f32 %v1429, 1.442695
    %v1431 = vpow.pop %v1430
    %v1432 = vadd.f32 %v1431, 1.0
    %v1433 = vrcp.pop %v1432
    %v1434 = vmul.f32 %v1432, %v1433
    %v1435 = vsub.f32 1.0, %v1434
    %v1436 = vmul.f32 %v1433, %v1435
    %v1437 = vadd.f32 %v1433, %v1436
    %vm1438 = vweird.f32 %v1432
    %vm1439 = vweird.f32 %v1433
    %vm1440 = vmor %vm1438, %vm1439
    %v1441 = vsel %vm1440, %v1433, %v1437
    %v1442 = vand.u32 2147483647, %v1432
    %vm1443 = vcmp.eq.f32.partialorder %v1442, 8.507059e+37
    %v1444 = vand.u32 %v1432, 2147483648
    %v1445 = vor.u32 1.1754944e-38, %v1444
    %v1446 = vsel %vm1443, %v1445, %v1441
    %v1447 = vmul.f32 1.0, %v1446
    %v1448 = vmul.f32 %v1427, %v1230
    %v1449 = vmul.f32 %v1408, %v1428
    %v1450 = vadd.f32 %v1448, %v1449
    %v1451 = vtanh.pop %v1450
    %v1452 = vmul.f32 %v1447, %v1451
    %s1453 = scalar_lea.vmem [#allocation5], 32
    %1454 = vst [vmem:[%s1453] sm:$0xff] %v1452
    %s1455 = smul.u32 5, 4
    %s1456 = smul.addr %s1455, 8
    %s1457 = scalar_lea.vmem [#allocation4], %s1456
    %v1458 = vld [vmem:[%s1457] sm:$0xff]
    %v1459 = vld [vmem:[%s1457 + $0x8] sm:$0xff]
    %v1460 = vld [vmem:[%s1457 + $0x10] sm:$0xff]
    %v1461 = vld [vmem:[%s1457 + $0x18] sm:$0xff]
    %v1462 = vld [vmem:[#allocation8] sm:$0xff]
    %v1463 = vld [vmem:[#allocation8 + $0x8] sm:$0xff]
    %v1464 = vld [vmem:[#allocation8 + $0x10] sm:$0xff]
    %v1465 = vld [vmem:[#allocation8 + $0x18] sm:$0xff]
    %v1466 = vld [vmem:[#allocation8 + $0x20] sm:$0xff]
    %v1467 = vld [vmem:[#allocation8 + $0x28] sm:$0xff]
    %v1468 = vld [vmem:[#allocation8 + $0x30] sm:$0xff]
    %v1469 = vld [vmem:[#allocation8 + $0x38] sm:$0xff]
    %v1470 = vld [vmem:[#allocation8 + $0x40] sm:$0xff]
    %v1471 = vld [vmem:[#allocation8 + $0x48] sm:$0xff]
    %v1472 = vld [vmem:[#allocation8 + $0x50] sm:$0xff]
    %v1473 = vld [vmem:[#allocation8 + $0x58] sm:$0xff]
    %v1474 = vld [vmem:[#allocation8 + $0x60] sm:$0xff]
    %v1475 = vld [vmem:[#allocation8 + $0x68] sm:$0xff]
    %v1476 = vld [vmem:[#allocation8 + $0x70] sm:$0xff]
    %v1477 = vld [vmem:[#allocation8 + $0x78] sm:$0xff]
    %v1478 = vld [vmem:[#allocation8 + $0x80] sm:$0xff]
    %v1479 = vld [vmem:[#allocation8 + $0x88] sm:$0xff]
    %v1480 = vld [vmem:[#allocation8 + $0x90] sm:$0xff]
    %v1481 = vld [vmem:[#allocation8 + $0x98] sm:$0xff]
    %v1482 = vld [vmem:[#allocation8 + $0xa0] sm:$0xff]
    %v1483 = vld [vmem:[#allocation8 + $0xa8] sm:$0xff]
    %v1484 = vld [vmem:[#allocation8 + $0xb0] sm:$0xff]
    %v1485 = vld [vmem:[#allocation8 + $0xb8] sm:$0xff]
    %v1486 = vld [vmem:[#allocation8 + $0xc0] sm:$0xff]
    %v1487 = vld [vmem:[#allocation8 + $0xc8] sm:$0xff]
    %v1488 = vld [vmem:[#allocation8 + $0xd0] sm:$0xff]
    %v1489 = vld [vmem:[#allocation8 + $0xd8] sm:$0xff]
    %v1490 = vld [vmem:[#allocation8 + $0xe0] sm:$0xff]
    %v1491 = vld [vmem:[#allocation8 + $0xe8] sm:$0xff]
    %v1492 = vld [vmem:[#allocation8 + $0xf0] sm:$0xff]
    %v1493 = vld [vmem:[#allocation8 + $0xf8] sm:$0xff]
    %v1494 = vld [vmem:[#allocation8 + $0x100] sm:$0xff]
    %v1495 = vld [vmem:[#allocation8 + $0x108] sm:$0xff]
    %v1496 = vld [vmem:[#allocation8 + $0x110] sm:$0xff]
    %v1497 = vld [vmem:[#allocation8 + $0x118] sm:$0xff]
    %v1498 = vld [vmem:[#allocation8 + $0x120] sm:$0xff]
    %v1499 = vld [vmem:[#allocation8 + $0x128] sm:$0xff]
    %v1500 = vld [vmem:[#allocation8 + $0x130] sm:$0xff]
    %v1501 = vld [vmem:[#allocation8 + $0x138] sm:$0xff]
    %v1502 = vld [vmem:[#allocation8 + $0x140] sm:$0xff]
    %v1503 = vld [vmem:[#allocation8 + $0x148] sm:$0xff]
    %v1504 = vld [vmem:[#allocation8 + $0x150] sm:$0xff]
    %v1505 = vld [vmem:[#allocation8 + $0x158] sm:$0xff]
    %v1506 = vld [vmem:[#allocation8 + $0x160] sm:$0xff]
    %v1507 = vld [vmem:[#allocation8 + $0x168] sm:$0xff]
    %v1508 = vld [vmem:[#allocation8 + $0x170] sm:$0xff]
    %v1509 = vld [vmem:[#allocation8 + $0x178] sm:$0xff]
    %v1510 = vld [vmem:[#allocation8 + $0x180] sm:$0xff]
    %v1511 = vld [vmem:[#allocation8 + $0x188] sm:$0xff]
    %v1512 = vld [vmem:[#allocation8 + $0x190] sm:$0xff]
    %v1513 = vld [vmem:[#allocation8 + $0x198] sm:$0xff]
    %v1514 = vld [vmem:[#allocation8 + $0x1a0] sm:$0xff]
    %v1515 = vld [vmem:[#allocation8 + $0x1a8] sm:$0xff]
    %v1516 = vld [vmem:[#allocation8 + $0x1b0] sm:$0xff]
    %v1517 = vld [vmem:[#allocation8 + $0x1b8] sm:$0xff]
    %v1518 = vld [vmem:[#allocation8 + $0x1c0] sm:$0xff]
    %v1519 = vld [vmem:[#allocation8 + $0x1c8] sm:$0xff]
    %v1520 = vld [vmem:[#allocation8 + $0x1d0] sm:$0xff]
    %v1521 = vld [vmem:[#allocation8 + $0x1d8] sm:$0xff]
    %v1522 = vld [vmem:[#allocation8 + $0x1e0] sm:$0xff]
    %v1523 = vld [vmem:[#allocation8 + $0x1e8] sm:$0xff]
    %v1524 = vld [vmem:[#allocation8 + $0x1f0] sm:$0xff]
    %v1525 = vld [vmem:[#allocation8 + $0x1f8] sm:$0xff]
    %1526 = vmatpush.msra.mxu0 %v1522
    %1527 = vmatpush.msra.mxu0 %v1518
    %1528 = vmatpush.msra.mxu0 %v1514
    %1529 = vmatpush.msra.mxu0 %v1510
    %1530 = vmatpush.msra.mxu0 %v1506
    %1531 = vmatpush.msra.mxu0 %v1502
    %1532 = vmatpush.msra.mxu0 %v1498
    %1533 = vmatpush.msra.mxu0 %v1494
    %1534 = vmatpush.msra.mxu0 %v1490
    %1535 = vmatpush.msra.mxu0 %v1486
    %1536 = vmatpush.msra.mxu0 %v1482
    %1537 = vmatpush.msra.mxu0 %v1478
    %1538 = vmatpush.msra.mxu0 %v1474
    %1539 = vmatpush.msra.mxu0 %v1470
    %1540 = vmatpush.msra.mxu0 %v1466
    %1541 = vmatpush.msra.mxu0 %v1462
    %1542 = vmatmul.f32.gmra.mxu0 %v1452
    %v1543 = vpop.f32.mrf.mxu0
    %v1544 = vadd.f32 0.0, %v1543
    %1545 = vdwg.mxu0
    %1546 = vmatpush.msra.mxu0 %v1523
    %1547 = vmatpush.msra.mxu0 %v1519
    %1548 = vmatpush.msra.mxu0 %v1515
    %1549 = vmatpush.msra.mxu0 %v1511
    %1550 = vmatpush.msra.mxu0 %v1507
    %1551 = vmatpush.msra.mxu0 %v1503
    %1552 = vmatpush.msra.mxu0 %v1499
    %1553 = vmatpush.msra.mxu0 %v1495
    %1554 = vmatpush.msra.mxu0 %v1491
    %1555 = vmatpush.msra.mxu0 %v1487
    %1556 = vmatpush.msra.mxu0 %v1483
    %1557 = vmatpush.msra.mxu0 %v1479
    %1558 = vmatpush.msra.mxu0 %v1475
    %1559 = vmatpush.msra.mxu0 %v1471
    %1560 = vmatpush.msra.mxu0 %v1467
    %1561 = vmatpush.msra.mxu0 %v1463
    %1562 = vmatmul.f32.gmra.mxu0 %v1452
    %v1563 = vpop.f32.mrf.mxu0
    %v1564 = vadd.f32 0.0, %v1563
    %1565 = vdwg.mxu0
    %1566 = vmatpush.msra.mxu0 %v1524
    %1567 = vmatpush.msra.mxu0 %v1520
    %1568 = vmatpush.msra.mxu0 %v1516
    %1569 = vmatpush.msra.mxu0 %v1512
    %1570 = vmatpush.msra.mxu0 %v1508
    %1571 = vmatpush.msra.mxu0 %v1504
    %1572 = vmatpush.msra.mxu0 %v1500
    %1573 = vmatpush.msra.mxu0 %v1496
    %1574 = vmatpush.msra.mxu0 %v1492
    %1575 = vmatpush.msra.mxu0 %v1488
    %1576 = vmatpush.msra.mxu0 %v1484
    %1577 = vmatpush.msra.mxu0 %v1480
    %1578 = vmatpush.msra.mxu0 %v1476
    %1579 = vmatpush.msra.mxu0 %v1472
    %1580 = vmatpush.msra.mxu0 %v1468
    %1581 = vmatpush.msra.mxu0 %v1464
    %1582 = vmatmul.f32.gmra.mxu0 %v1452
    %v1583 = vpop.f32.mrf.mxu0
    %v1584 = vadd.f32 0.0, %v1583
    %1585 = vdwg.mxu0
    %1586 = vmatpush.msra.mxu0 %v1525
    %1587 = vmatpush.msra.mxu0 %v1521
    %1588 = vmatpush.msra.mxu0 %v1517
    %1589 = vmatpush.msra.mxu0 %v1513
    %1590 = vmatpush.msra.mxu0 %v1509
    %1591 = vmatpush.msra.mxu0 %v1505
    %1592 = vmatpush.msra.mxu0 %v1501
    %1593 = vmatpush.msra.mxu0 %v1497
    %1594 = vmatpush.msra.mxu0 %v1493
    %1595 = vmatpush.msra.mxu0 %v1489
    %1596 = vmatpush.msra.mxu0 %v1485
    %1597 = vmatpush.msra.mxu0 %v1481
    %1598 = vmatpush.msra.mxu0 %v1477
    %1599 = vmatpush.msra.mxu0 %v1473
    %1600 = vmatpush.msra.mxu0 %v1469
    %1601 = vmatpush.msra.mxu0 %v1465
    %1602 = vmatmul.f32.gmra.mxu0 %v1452
    %v1603 = vpop.f32.mrf.mxu0
    %v1604 = vadd.f32 0.0, %v1603
    %1605 = vdwg.mxu0
    %v1606 = vadd.f32 %v1458, %v1544
    %v1607 = vadd.f32 %v1459, %v1564
    %v1608 = vadd.f32 %v1460, %v1584
    %v1609 = vadd.f32 %v1461, %v1604
    %v1610 = vxor.u32 %v1606, 2147483648
    %v1611 = vmul.f32 %v1610, 1.442695
    %v1612 = vpow.pop %v1611
    %v1613 = vadd.f32 %v1612, 1.0
    %v1614 = vrcp.pop %v1613
    %v1615 = vmul.f32 %v1613, %v1614
    %v1616 = vsub.f32 1.0, %v1615
    %v1617 = vmul.f32 %v1614, %v1616
    %v1618 = vadd.f32 %v1614, %v1617
    %vm1619 = vweird.f32 %v1613
    %vm1620 = vweird.f32 %v1614
    %vm1621 = vmor %vm1619, %vm1620
    %v1622 = vsel %vm1621, %v1614, %v1618
    %v1623 = vand.u32 2147483647, %v1613
    %vm1624 = vcmp.eq.f32.partialorder %v1623, 8.507059e+37
    %v1625 = vand.u32 %v1613, 2147483648
    %v1626 = vor.u32 1.1754944e-38, %v1625
    %v1627 = vsel %vm1624, %v1626, %v1622
    %v1628 = vmul.f32 1.0, %v1627
    %v1629 = vxor.u32 %v1607, 2147483648
    %v1630 = vmul.f32 %v1629, 1.442695
    %v1631 = vpow.pop %v1630
    %v1632 = vadd.f32 %v1631, 1.0
    %v1633 = vrcp.pop %v1632
    %v1634 = vmul.f32 %v1632, %v1633
    %v1635 = vsub.f32 1.0, %v1634
    %v1636 = vmul.f32 %v1633, %v1635
    %v1637 = vadd.f32 %v1633, %v1636
    %vm1638 = vweird.f32 %v1632
    %vm1639 = vweird.f32 %v1633
    %vm1640 = vmor %vm1638, %vm1639
    %v1641 = vsel %vm1640, %v1633, %v1637
    %v1642 = vand.u32 2147483647, %v1632
    %vm1643 = vcmp.eq.f32.partialorder %v1642, 8.507059e+37
    %v1644 = vand.u32 %v1632, 2147483648
    %v1645 = vor.u32 1.1754944e-38, %v1644
    %v1646 = vsel %vm1643, %v1645, %v1641
    %v1647 = vmul.f32 1.0, %v1646
    %v1648 = vtanh.pop %v1608
    %v1649 = vxor.u32 %v1609, 2147483648
    %v1650 = vmul.f32 %v1649, 1.442695
    %v1651 = vpow.pop %v1650
    %v1652 = vadd.f32 %v1651, 1.0
    %v1653 = vrcp.pop %v1652
    %v1654 = vmul.f32 %v1652, %v1653
    %v1655 = vsub.f32 1.0, %v1654
    %v1656 = vmul.f32 %v1653, %v1655
    %v1657 = vadd.f32 %v1653, %v1656
    %vm1658 = vweird.f32 %v1652
    %vm1659 = vweird.f32 %v1653
    %vm1660 = vmor %vm1658, %vm1659
    %v1661 = vsel %vm1660, %v1653, %v1657
    %v1662 = vand.u32 2147483647, %v1652
    %vm1663 = vcmp.eq.f32.partialorder %v1662, 8.507059e+37
    %v1664 = vand.u32 %v1652, 2147483648
    %v1665 = vor.u32 1.1754944e-38, %v1664
    %v1666 = vsel %vm1663, %v1665, %v1661
    %v1667 = vmul.f32 1.0, %v1666
    %v1668 = vmul.f32 %v1647, %v1450
    %v1669 = vmul.f32 %v1628, %v1648
    %v1670 = vadd.f32 %v1668, %v1669
    %v1671 = vtanh.pop %v1670
    %v1672 = vmul.f32 %v1667, %v1671
    %s1673 = scalar_lea.vmem [#allocation5], 40
    %1674 = vst [vmem:[%s1673] sm:$0xff] %v1672
    %s1675 = smul.u32 6, 4
    %s1676 = smul.addr %s1675, 8
    %s1677 = scalar_lea.vmem [#allocation4], %s1676
    %v1678 = vld [vmem:[%s1677] sm:$0xff]
    %v1679 = vld [vmem:[%s1677 + $0x8] sm:$0xff]
    %v1680 = vld [vmem:[%s1677 + $0x10] sm:$0xff]
    %v1681 = vld [vmem:[%s1677 + $0x18] sm:$0xff]
    %v1682 = vld [vmem:[#allocation8] sm:$0xff]
    %v1683 = vld [vmem:[#allocation8 + $0x8] sm:$0xff]
    %v1684 = vld [vmem:[#allocation8 + $0x10] sm:$0xff]
    %v1685 = vld [vmem:[#allocation8 + $0x18] sm:$0xff]
    %v1686 = vld [vmem:[#allocation8 + $0x20] sm:$0xff]
    %v1687 = vld [vmem:[#allocation8 + $0x28] sm:$0xff]
    %v1688 = vld [vmem:[#allocation8 + $0x30] sm:$0xff]
    %v1689 = vld [vmem:[#allocation8 + $0x38] sm:$0xff]
    %v1690 = vld [vmem:[#allocation8 + $0x40] sm:$0xff]
    %v1691 = vld [vmem:[#allocation8 + $0x48] sm:$0xff]
    %v1692 = vld [vmem:[#allocation8 + $0x50] sm:$0xff]
    %v1693 = vld [vmem:[#allocation8 + $0x58] sm:$0xff]
    %v1694 = vld [vmem:[#allocation8 + $0x60] sm:$0xff]
    %v1695 = vld [vmem:[#allocation8 + $0x68] sm:$0xff]
    %v1696 = vld [vmem:[#allocation8 + $0x70] sm:$0xff]
    %v1697 = vld [vmem:[#allocation8 + $0x78] sm:$0xff]
    %v1698 = vld [vmem:[#allocation8 + $0x80] sm:$0xff]
    %v1699 = vld [vmem:[#allocation8 + $0x88] sm:$0xff]
    %v1700 = vld [vmem:[#allocation8 + $0x90] sm:$0xff]
    %v1701 = vld [vmem:[#allocation8 + $0x98] sm:$0xff]
    %v1702 = vld [vmem:[#allocation8 + $0xa0] sm:$0xff]
    %v1703 = vld [vmem:[#allocation8 + $0xa8] sm:$0xff]
    %v1704 = vld [vmem:[#allocation8 + $0xb0] sm:$0xff]
    %v1705 = vld [vmem:[#allocation8 + $0xb8] sm:$0xff]
    %v1706 = vld [vmem:[#allocation8 + $0xc0] sm:$0xff]
    %v1707 = vld [vmem:[#allocation8 + $0xc8] sm:$0xff]
    %v1708 = vld [vmem:[#allocation8 + $0xd0] sm:$0xff]
    %v1709 = vld [vmem:[#allocation8 + $0xd8] sm:$0xff]
    %v1710 = vld [vmem:[#allocation8 + $0xe0] sm:$0xff]
    %v1711 = vld [vmem:[#allocation8 + $0xe8] sm:$0xff]
    %v1712 = vld [vmem:[#allocation8 + $0xf0] sm:$0xff]
    %v1713 = vld [vmem:[#allocation8 + $0xf8] sm:$0xff]
    %v1714 = vld [vmem:[#allocation8 + $0x100] sm:$0xff]
    %v1715 = vld [vmem:[#allocation8 + $0x108] sm:$0xff]
    %v1716 = vld [vmem:[#allocation8 + $0x110] sm:$0xff]
    %v1717 = vld [vmem:[#allocation8 + $0x118] sm:$0xff]
    %v1718 = vld [vmem:[#allocation8 + $0x120] sm:$0xff]
    %v1719 = vld [vmem:[#allocation8 + $0x128] sm:$0xff]
    %v1720 = vld [vmem:[#allocation8 + $0x130] sm:$0xff]
    %v1721 = vld [vmem:[#allocation8 + $0x138] sm:$0xff]
    %v1722 = vld [vmem:[#allocation8 + $0x140] sm:$0xff]
    %v1723 = vld [vmem:[#allocation8 + $0x148] sm:$0xff]
    %v1724 = vld [vmem:[#allocation8 + $0x150] sm:$0xff]
    %v1725 = vld [vmem:[#allocation8 + $0x158] sm:$0xff]
    %v1726 = vld [vmem:[#allocation8 + $0x160] sm:$0xff]
    %v1727 = vld [vmem:[#allocation8 + $0x168] sm:$0xff]
    %v1728 = vld [vmem:[#allocation8 + $0x170] sm:$0xff]
    %v1729 = vld [vmem:[#allocation8 + $0x178] sm:$0xff]
    %v1730 = vld [vmem:[#allocation8 + $0x180] sm:$0xff]
    %v1731 = vld [vmem:[#allocation8 + $0x188] sm:$0xff]
    %v1732 = vld [vmem:[#allocation8 + $0x190] sm:$0xff]
    %v1733 = vld [vmem:[#allocation8 + $0x198] sm:$0xff]
    %v1734 = vld [vmem:[#allocation8 + $0x1a0] sm:$0xff]
    %v1735 = vld [vmem:[#allocation8 + $0x1a8] sm:$0xff]
    %v1736 = vld [vmem:[#allocation8 + $0x1b0] sm:$0xff]
    %v1737 = vld [vmem:[#allocation8 + $0x1b8] sm:$0xff]
    %v1738 = vld [vmem:[#allocation8 + $0x1c0] sm:$0xff]
    %v1739 = vld [vmem:[#allocation8 + $0x1c8] sm:$0xff]
    %v1740 = vld [vmem:[#allocation8 + $0x1d0] sm:$0xff]
    %v1741 = vld [vmem:[#allocation8 + $0x1d8] sm:$0xff]
    %v1742 = vld [vmem:[#allocation8 + $0x1e0] sm:$0xff]
    %v1743 = vld [vmem:[#allocation8 + $0x1e8] sm:$0xff]
    %v1744 = vld [vmem:[#allocation8 + $0x1f0] sm:$0xff]
    %v1745 = vld [vmem:[#allocation8 + $0x1f8] sm:$0xff]
    %1746 = vmatpush.msra.mxu0 %v1742
    %1747 = vmatpush.msra.mxu0 %v1738
    %1748 = vmatpush.msra.mxu0 %v1734
    %1749 = vmatpush.msra.mxu0 %v1730
    %1750 = vmatpush.msra.mxu0 %v1726
    %1751 = vmatpush.msra.mxu0 %v1722
    %1752 = vmatpush.msra.mxu0 %v1718
    %1753 = vmatpush.msra.mxu0 %v1714
    %1754 = vmatpush.msra.mxu0 %v1710
    %1755 = vmatpush.msra.mxu0 %v1706
    %1756 = vmatpush.msra.mxu0 %v1702
    %1757 = vmatpush.msra.mxu0 %v1698
    %1758 = vmatpush.msra.mxu0 %v1694
    %1759 = vmatpush.msra.mxu0 %v1690
    %1760 = vmatpush.msra.mxu0 %v1686
    %1761 = vmatpush.msra.mxu0 %v1682
    %1762 = vmatmul.f32.gmra.mxu0 %v1672
    %v1763 = vpop.f32.mrf.mxu0
    %v1764 = vadd.f32 0.0, %v1763
    %1765 = vdwg.mxu0
    %1766 = vmatpush.msra.mxu0 %v1743
    %1767 = vmatpush.msra.mxu0 %v1739
    %1768 = vmatpush.msra.mxu0 %v1735
    %1769 = vmatpush.msra.mxu0 %v1731
    %1770 = vmatpush.msra.mxu0 %v1727
    %1771 = vmatpush.msra.mxu0 %v1723
    %1772 = vmatpush.msra.mxu0 %v1719
    %1773 = vmatpush.msra.mxu0 %v1715
    %1774 = vmatpush.msra.mxu0 %v1711
    %1775 = vmatpush.msra.mxu0 %v1707
    %1776 = vmatpush.msra.mxu0 %v1703
    %1777 = vmatpush.msra.mxu0 %v1699
    %1778 = vmatpush.msra.mxu0 %v1695
    %1779 = vmatpush.msra.mxu0 %v1691
    %1780 = vmatpush.msra.mxu0 %v1687
    %1781 = vmatpush.msra.mxu0 %v1683
    %1782 = vmatmul.f32.gmra.mxu0 %v1672
    %v1783 = vpop.f32.mrf.mxu0
    %v1784 = vadd.f32 0.0, %v1783
    %1785 = vdwg.mxu0
    %1786 = vmatpush.msra.mxu0 %v1744
    %1787 = vmatpush.msra.mxu0 %v1740
    %1788 = vmatpush.msra.mxu0 %v1736
    %1789 = vmatpush.msra.mxu0 %v1732
    %1790 = vmatpush.msra.mxu0 %v1728
    %1791 = vmatpush.msra.mxu0 %v1724
    %1792 = vmatpush.msra.mxu0 %v1720
    %1793 = vmatpush.msra.mxu0 %v1716
    %1794 = vmatpush.msra.mxu0 %v1712
    %1795 = vmatpush.msra.mxu0 %v1708
    %1796 = vmatpush.msra.mxu0 %v1704
    %1797 = vmatpush.msra.mxu0 %v1700
    %1798 = vmatpush.msra.mxu0 %v1696
    %1799 = vmatpush.msra.mxu0 %v1692
    %1800 = vmatpush.msra.mxu0 %v1688
    %1801 = vmatpush.msra.mxu0 %v1684
    %1802 = vmatmul.f32.gmra.mxu0 %v1672
    %v1803 = vpop.f32.mrf.mxu0
    %v1804 = vadd.f32 0.0, %v1803
    %1805 = vdwg.mxu0
    %1806 = vmatpush.msra.mxu0 %v1745
    %1807 = vmatpush.msra.mxu0 %v1741
    %1808 = vmatpush.msra.mxu0 %v1737
    %1809 = vmatpush.msra.mxu0 %v1733
    %1810 = vmatpush.msra.mxu0 %v1729
    %1811 = vmatpush.msra.mxu0 %v1725
    %1812 = vmatpush.msra.mxu0 %v1721
    %1813 = vmatpush.msra.mxu0 %v1717
    %1814 = vmatpush.msra.mxu0 %v1713
    %1815 = vmatpush.msra.mxu0 %v1709
    %1816 = vmatpush.msra.mxu0 %v1705
    %1817 = vmatpush.msra.mxu0 %v1701
    %1818 = vmatpush.msra.mxu0 %v1697
    %1819 = vmatpush.msra.mxu0 %v1693
    %1820 = vmatpush.msra.mxu0 %v1689
    %1821 = vmatpush.msra.mxu0 %v1685
    %1822 = vmatmul.f32.gmra.mxu0 %v1672
    %v1823 = vpop.f32.mrf.mxu0
    %v1824 = vadd.f32 0.0, %v1823
    %1825 = vdwg.mxu0
    %v1826 = vadd.f32 %v1678, %v1764
    %v1827 = vadd.f32 %v1679, %v1784
    %v1828 = vadd.f32 %v1680, %v1804
    %v1829 = vadd.f32 %v1681, %v1824
    %v1830 = vxor.u32 %v1826, 2147483648
    %v1831 = vmul.f32 %v1830, 1.442695
    %v1832 = vpow.pop %v1831
    %v1833 = vadd.f32 %v1832, 1.0
    %v1834 = vrcp.pop %v1833
    %v1835 = vmul.f32 %v1833, %v1834
    %v1836 = vsub.f32 1.0, %v1835
    %v1837 = vmul.f32 %v1834, %v1836
    %v1838 = vadd.f32 %v1834, %v1837
    %vm1839 = vweird.f32 %v1833
    %vm1840 = vweird.f32 %v1834
    %vm1841 = vmor %vm1839, %vm1840
    %v1842 = vsel %vm1841, %v1834, %v1838
    %v1843 = vand.u32 2147483647, %v1833
    %vm1844 = vcmp.eq.f32.partialorder %v1843, 8.507059e+37
    %v1845 = vand.u32 %v1833, 2147483648
    %v1846 = vor.u32 1.1754944e-38, %v1845
    %v1847 = vsel %vm1844, %v1846, %v1842
    %v1848 = vmul.f32 1.0, %v1847
    %v1849 = vxor.u32 %v1827, 2147483648
    %v1850 = vmul.f32 %v1849, 1.442695
    %v1851 = vpow.pop %v1850
    %v1852 = vadd.f32 %v1851, 1.0
    %v1853 = vrcp.pop %v1852
    %v1854 = vmul.f32 %v1852, %v1853
    %v1855 = vsub.f32 1.0, %v1854
    %v1856 = vmul.f32 %v1853, %v1855
    %v1857 = vadd.f32 %v1853, %v1856
    %vm1858 = vweird.f32 %v1852
    %vm1859 = vweird.f32 %v1853
    %vm1860 = vmor %vm1858, %vm1859
    %v1861 = vsel %vm1860, %v1853, %v1857
    %v1862 = vand.u32 2147483647, %v1852
    %vm1863 = vcmp.eq.f32.partialorder %v1862, 8.507059e+37
    %v1864 = vand.u32 %v1852, 2147483648
    %v1865 = vor.u32 1.1754944e-38, %v1864
    %v1866 = vsel %vm1863, %v1865, %v1861
    %v1867 = vmul.f32 1.0, %v1866
    %v1868 = vtanh.pop %v1828
    %v1869 = vxor.u32 %v1829, 2147483648
    %v1870 = vmul.f32 %v1869, 1.442695
    %v1871 = vpow.pop %v1870
    %v1872 = vadd.f32 %v1871, 1.0
    %v1873 = vrcp.pop %v1872
    %v1874 = vmul.f32 %v1872, %v1873
    %v1875 = vsub.f32 1.0, %v1874
    %v1876 = vmul.f32 %v1873, %v1875
    %v1877 = vadd.f32 %v1873, %v1876
    %vm1878 = vweird.f32 %v1872
    %vm1879 = vweird.f32 %v1873
    %vm1880 = vmor %vm1878, %vm1879
    %v1881 = vsel %vm1880, %v1873, %v1877
    %v1882 = vand.u32 2147483647, %v1872
    %vm1883 = vcmp.eq.f32.partialorder %v1882, 8.507059e+37
    %v1884 = vand.u32 %v1872, 2147483648
    %v1885 = vor.u32 1.1754944e-38, %v1884
    %v1886 = vsel %vm1883, %v1885, %v1881
    %v1887 = vmul.f32 1.0, %v1886
    %v1888 = vmul.f32 %v1867, %v1670
    %v1889 = vmul.f32 %v1848, %v1868
    %v1890 = vadd.f32 %v1888, %v1889
    %v1891 = vtanh.pop %v1890
    %v1892 = vmul.f32 %v1887, %v1891
    %s1893 = scalar_lea.vmem [#allocation5], 48
    %1894 = vst [vmem:[%s1893] sm:$0xff] %v1892
    %s1895 = smul.u32 7, 4
    %s1896 = smul.addr %s1895, 8
    %s1897 = scalar_lea.vmem [#allocation4], %s1896
    %v1898 = vld [vmem:[%s1897] sm:$0xff]
    %v1899 = vld [vmem:[%s1897 + $0x8] sm:$0xff]
    %v1900 = vld [vmem:[%s1897 + $0x10] sm:$0xff]
    %v1901 = vld [vmem:[%s1897 + $0x18] sm:$0xff]
    %v1902 = vld [vmem:[#allocation8] sm:$0xff]
    %v1903 = vld [vmem:[#allocation8 + $0x8] sm:$0xff]
    %v1904 = vld [vmem:[#allocation8 + $0x10] sm:$0xff]
    %v1905 = vld [vmem:[#allocation8 + $0x18] sm:$0xff]
    %v1906 = vld [vmem:[#allocation8 + $0x20] sm:$0xff]
    %v1907 = vld [vmem:[#allocation8 + $0x28] sm:$0xff]
    %v1908 = vld [vmem:[#allocation8 + $0x30] sm:$0xff]
    %v1909 = vld [vmem:[#allocation8 + $0x38] sm:$0xff]
    %v1910 = vld [vmem:[#allocation8 + $0x40] sm:$0xff]
    %v1911 = vld [vmem:[#allocation8 + $0x48] sm:$0xff]
    %v1912 = vld [vmem:[#allocation8 + $0x50] sm:$0xff]
    %v1913 = vld [vmem:[#allocation8 + $0x58] sm:$0xff]
    %v1914 = vld [vmem:[#allocation8 + $0x60] sm:$0xff]
    %v1915 = vld [vmem:[#allocation8 + $0x68] sm:$0xff]
    %v1916 = vld [vmem:[#allocation8 + $0x70] sm:$0xff]
    %v1917 = vld [vmem:[#allocation8 + $0x78] sm:$0xff]
    %v1918 = vld [vmem:[#allocation8 + $0x80] sm:$0xff]
    %v1919 = vld [vmem:[#allocation8 + $0x88] sm:$0xff]
    %v1920 = vld [vmem:[#allocation8 + $0x90] sm:$0xff]
    %v1921 = vld [vmem:[#allocation8 + $0x98] sm:$0xff]
    %v1922 = vld [vmem:[#allocation8 + $0xa0] sm:$0xff]
    %v1923 = vld [vmem:[#allocation8 + $0xa8] sm:$0xff]
    %v1924 = vld [vmem:[#allocation8 + $0xb0] sm:$0xff]
    %v1925 = vld [vmem:[#allocation8 + $0xb8] sm:$0xff]
    %v1926 = vld [vmem:[#allocation8 + $0xc0] sm:$0xff]
    %v1927 = vld [vmem:[#allocation8 + $0xc8] sm:$0xff]
    %v1928 = vld [vmem:[#allocation8 + $0xd0] sm:$0xff]
    %v1929 = vld [vmem:[#allocation8 + $0xd8] sm:$0xff]
    %v1930 = vld [vmem:[#allocation8 + $0xe0] sm:$0xff]
    %v1931 = vld [vmem:[#allocation8 + $0xe8] sm:$0xff]
    %v1932 = vld [vmem:[#allocation8 + $0xf0] sm:$0xff]
    %v1933 = vld [vmem:[#allocation8 + $0xf8] sm:$0xff]
    %v1934 = vld [vmem:[#allocation8 + $0x100] sm:$0xff]
    %v1935 = vld [vmem:[#allocation8 + $0x108] sm:$0xff]
    %v1936 = vld [vmem:[#allocation8 + $0x110] sm:$0xff]
    %v1937 = vld [vmem:[#allocation8 + $0x118] sm:$0xff]
    %v1938 = vld [vmem:[#allocation8 + $0x120] sm:$0xff]
    %v1939 = vld [vmem:[#allocation8 + $0x128] sm:$0xff]
    %v1940 = vld [vmem:[#allocation8 + $0x130] sm:$0xff]
    %v1941 = vld [vmem:[#allocation8 + $0x138] sm:$0xff]
    %v1942 = vld [vmem:[#allocation8 + $0x140] sm:$0xff]
    %v1943 = vld [vmem:[#allocation8 + $0x148] sm:$0xff]
    %v1944 = vld [vmem:[#allocation8 + $0x150] sm:$0xff]
    %v1945 = vld [vmem:[#allocation8 + $0x158] sm:$0xff]
    %v1946 = vld [vmem:[#allocation8 + $0x160] sm:$0xff]
    %v1947 = vld [vmem:[#allocation8 + $0x168] sm:$0xff]
    %v1948 = vld [vmem:[#allocation8 + $0x170] sm:$0xff]
    %v1949 = vld [vmem:[#allocation8 + $0x178] sm:$0xff]
    %v1950 = vld [vmem:[#allocation8 + $0x180] sm:$0xff]
    %v1951 = vld [vmem:[#allocation8 + $0x188] sm:$0xff]
    %v1952 = vld [vmem:[#allocation8 + $0x190] sm:$0xff]
    %v1953 = vld [vmem:[#allocation8 + $0x198] sm:$0xff]
    %v1954 = vld [vmem:[#allocation8 + $0x1a0] sm:$0xff]
    %v1955 = vld [vmem:[#allocation8 + $0x1a8] sm:$0xff]
    %v1956 = vld [vmem:[#allocation8 + $0x1b0] sm:$0xff]
    %v1957 = vld [vmem:[#allocation8 + $0x1b8] sm:$0xff]
    %v1958 = vld [vmem:[#allocation8 + $0x1c0] sm:$0xff]
    %v1959 = vld [vmem:[#allocation8 + $0x1c8] sm:$0xff]
    %v1960 = vld [vmem:[#allocation8 + $0x1d0] sm:$0xff]
    %v1961 = vld [vmem:[#allocation8 + $0x1d8] sm:$0xff]
    %v1962 = vld [vmem:[#allocation8 + $0x1e0] sm:$0xff]
    %v1963 = vld [vmem:[#allocation8 + $0x1e8] sm:$0xff]
    %v1964 = vld [vmem:[#allocation8 + $0x1f0] sm:$0xff]
    %v1965 = vld [vmem:[#allocation8 + $0x1f8] sm:$0xff]
    %1966 = vmatpush.msra.mxu0 %v1962
    %1967 = vmatpush.msra.mxu0 %v1958
    %1968 = vmatpush.msra.mxu0 %v1954
    %1969 = vmatpush.msra.mxu0 %v1950
    %1970 = vmatpush.msra.mxu0 %v1946
    %1971 = vmatpush.msra.mxu0 %v1942
    %1972 = vmatpush.msra.mxu0 %v1938
    %1973 = vmatpush.msra.mxu0 %v1934
    %1974 = vmatpush.msra.mxu0 %v1930
    %1975 = vmatpush.msra.mxu0 %v1926
    %1976 = vmatpush.msra.mxu0 %v1922
    %1977 = vmatpush.msra.mxu0 %v1918
    %1978 = vmatpush.msra.mxu0 %v1914
    %1979 = vmatpush.msra.mxu0 %v1910
    %1980 = vmatpush.msra.mxu0 %v1906
    %1981 = vmatpush.msra.mxu0 %v1902
    %1982 = vmatmul.f32.gmra.mxu0 %v1892
    %v1983 = vpop.f32.mrf.mxu0
    %v1984 = vadd.f32 0.0, %v1983
    %1985 = vdwg.mxu0
    %1986 = vmatpush.msra.mxu0 %v1963
    %1987 = vmatpush.msra.mxu0 %v1959
    %1988 = vmatpush.msra.mxu0 %v1955
    %1989 = vmatpush.msra.mxu0 %v1951
    %1990 = vmatpush.msra.mxu0 %v1947
    %1991 = vmatpush.msra.mxu0 %v1943
    %1992 = vmatpush.msra.mxu0 %v1939
    %1993 = vmatpush.msra.mxu0 %v1935
    %1994 = vmatpush.msra.mxu0 %v1931
    %1995 = vmatpush.msra.mxu0 %v1927
    %1996 = vmatpush.msra.mxu0 %v1923
    %1997 = vmatpush.msra.mxu0 %v1919
    %1998 = vmatpush.msra.mxu0 %v1915
    %1999 = vmatpush.msra.mxu0 %v1911
    %2000 = vmatpush.msra.mxu0 %v1907
    %2001 = vmatpush.msra.mxu0 %v1903
    %2002 = vmatmul.f32.gmra.mxu0 %v1892
    %v2003 = vpop.f32.mrf.mxu0
    %v2004 = vadd.f32 0.0, %v2003
    %2005 = vdwg.mxu0
    %2006 = vmatpush.msra.mxu0 %v1964
    %2007 = vmatpush.msra.mxu0 %v1960
    %2008 = vmatpush.msra.mxu0 %v1956
    %2009 = vmatpush.msra.mxu0 %v1952
    %2010 = vmatpush.msra.mxu0 %v1948
    %2011 = vmatpush.msra.mxu0 %v1944
    %2012 = vmatpush.msra.mxu0 %v1940
    %2013 = vmatpush.msra.mxu0 %v1936
    %2014 = vmatpush.msra.mxu0 %v1932
    %2015 = vmatpush.msra.mxu0 %v1928
    %2016 = vmatpush.msra.mxu0 %v1924
    %2017 = vmatpush.msra.mxu0 %v1920
    %2018 = vmatpush.msra.mxu0 %v1916
    %2019 = vmatpush.msra.mxu0 %v1912
    %2020 = vmatpush.msra.mxu0 %v1908
    %2021 = vmatpush.msra.mxu0 %v1904
    %2022 = vmatmul.f32.gmra.mxu0 %v1892
    %v2023 = vpop.f32.mrf.mxu0
    %v2024 = vadd.f32 0.0, %v2023
    %2025 = vdwg.mxu0
    %2026 = vmatpush.msra.mxu0 %v1965
    %2027 = vmatpush.msra.mxu0 %v1961
    %2028 = vmatpush.msra.mxu0 %v1957
    %2029 = vmatpush.msra.mxu0 %v1953
    %2030 = vmatpush.msra.mxu0 %v1949
    %2031 = vmatpush.msra.mxu0 %v1945
    %2032 = vmatpush.msra.mxu0 %v1941
    %2033 = vmatpush.msra.mxu0 %v1937
    %2034 = vmatpush.msra.mxu0 %v1933
    %2035 = vmatpush.msra.mxu0 %v1929
    %2036 = vmatpush.msra.mxu0 %v1925
    %2037 = vmatpush.msra.mxu0 %v1921
    %2038 = vmatpush.msra.mxu0 %v1917
    %2039 = vmatpush.msra.mxu0 %v1913
    %2040 = vmatpush.msra.mxu0 %v1909
    %2041 = vmatpush.msra.mxu0 %v1905
    %2042 = vmatmul.f32.gmra.mxu0 %v1892
    %v2043 = vpop.f32.mrf.mxu0
    %v2044 = vadd.f32 0.0, %v2043
    %2045 = vdwg.mxu0
    %v2046 = vadd.f32 %v1898, %v1984
    %v2047 = vadd.f32 %v1899, %v2004
    %v2048 = vadd.f32 %v1900, %v2024
    %v2049 = vadd.f32 %v1901, %v2044
    %v2050 = vxor.u32 %v2046, 2147483648
    %v2051 = vmul.f32 %v2050, 1.442695
    %v2052 = vpow.pop %v2051
    %v2053 = vadd.f32 %v2052, 1.0
    %v2054 = vrcp.pop %v2053
    %v2055 = vmul.f32 %v2053, %v2054
    %v2056 = vsub.f32 1.0, %v2055
    %v2057 = vmul.f32 %v2054, %v2056
    %v2058 = vadd.f32 %v2054, %v2057
    %vm2059 = vweird.f32 %v2053
    %vm2060 = vweird.f32 %v2054
    %vm2061 = vmor %vm2059, %vm2060
    %v2062 = vsel %vm2061, %v2054, %v2058
    %v2063 = vand.u32 2147483647, %v2053
    %vm2064 = vcmp.eq.f32.partialorder %v2063, 8.507059e+37
    %v2065 = vand.u32 %v2053, 2147483648
    %v2066 = vor.u32 1.1754944e-38, %v2065
    %v2067 = vsel %vm2064, %v2066, %v2062
    %v2068 = vmul.f32 1.0, %v2067
    %v2069 = vxor.u32 %v2047, 2147483648
    %v2070 = vmul.f32 %v2069, 1.442695
    %v2071 = vpow.pop %v2070
    %v2072 = vadd.f32 %v2071, 1.0
    %v2073 = vrcp.pop %v2072
    %v2074 = vmul.f32 %v2072, %v2073
    %v2075 = vsub.f32 1.0, %v2074
    %v2076 = vmul.f32 %v2073, %v2075
    %v2077 = vadd.f32 %v2073, %v2076
    %vm2078 = vweird.f32 %v2072
    %vm2079 = vweird.f32 %v2073
    %vm2080 = vmor %vm2078, %vm2079
    %v2081 = vsel %vm2080, %v2073, %v2077
    %v2082 = vand.u32 2147483647, %v2072
    %vm2083 = vcmp.eq.f32.partialorder %v2082, 8.507059e+37
    %v2084 = vand.u32 %v2072, 2147483648
    %v2085 = vor.u32 1.1754944e-38, %v2084
    %v2086 = vsel %vm2083, %v2085, %v2081
    %v2087 = vmul.f32 1.0, %v2086
    %v2088 = vtanh.pop %v2048
    %v2089 = vxor.u32 %v2049, 2147483648
    %v2090 = vmul.f32 %v2089, 1.442695
    %v2091 = vpow.pop %v2090
    %v2092 = vadd.f32 %v2091, 1.0
    %v2093 = vrcp.pop %v2092
    %v2094 = vmul.f32 %v2092, %v2093
    %v2095 = vsub.f32 1.0, %v2094
    %v2096 = vmul.f32 %v2093, %v2095
    %v2097 = vadd.f32 %v2093, %v2096
    %vm2098 = vweird.f32 %v2092
    %vm2099 = vweird.f32 %v2093
    %vm2100 = vmor %vm2098, %vm2099
    %v2101 = vsel %vm2100, %v2093, %v2097
    %v2102 = vand.u32 2147483647, %v2092
    %vm2103 = vcmp.eq.f32.partialorder %v2102, 8.507059e+37
    %v2104 = vand.u32 %v2092, 2147483648
    %v2105 = vor.u32 1.1754944e-38, %v2104
    %v2106 = vsel %vm2103, %v2105, %v2101
    %v2107 = vmul.f32 1.0, %v2106
    %v2108 = vmul.f32 %v2087, %v1890
    %v2109 = vmul.f32 %v2068, %v2088
    %v2110 = vadd.f32 %v2108, %v2109
    %v2111 = vtanh.pop %v2110
    %v2112 = vmul.f32 %v2107, %v2111
    %s2113 = scalar_lea.vmem [#allocation5], 56
    %2114 = vst [vmem:[%s2113] sm:$0xff] %v2112
    %2115 = vst [vmem:[#allocation2] sm:$0xff] %v2112
    %2116 = vst [vmem:[#allocation3] sm:$0xff] %v2110
    %v2117 = vld [vmem:[#allocation5] sm:$0xff]
    %v2118 = vld [vmem:[#allocation5 + $0x8] sm:$0xff]
    %v2119 = vld [vmem:[#allocation5 + $0x10] sm:$0xff]
    %v2120 = vld [vmem:[#allocation5 + $0x18] sm:$0xff]
    %v2121 = vld [vmem:[#allocation5 + $0x20] sm:$0xff]
    %v2122 = vld [vmem:[#allocation5 + $0x28] sm:$0xff]
    %v2123 = vld [vmem:[#allocation5 + $0x30] sm:$0xff]
    %v2124 = vld [vmem:[#allocation5 + $0x38] sm:$0xff]
    %vm2125 = vcmp.gt.f32.partialorder %v2117, 20.0
    %vm2126 = vcmp.gt.f32.partialorder %v2118, 20.0
    %vm2127 = vcmp.gt.f32.partialorder %v2119, 20.0
    %vm2128 = vcmp.gt.f32.partialorder %v2120, 20.0
    %vm2129 = vcmp.gt.f32.partialorder %v2121, 20.0
    %vm2130 = vcmp.gt.f32.partialorder %v2122, 20.0
    %vm2131 = vcmp.gt.f32.partialorder %v2123, 20.0
    %vm2132 = vcmp.gt.f32.partialorder %v2124, 20.0
    %v2133 = vmin.f32 %v2117, 20.0
    %v2134 = vmin.f32 %v2118, 20.0
    %v2135 = vmin.f32 %v2119, 20.0
    %v2136 = vmin.f32 %v2120, 20.0
    %v2137 = vmin.f32 %v2121, 20.0
    %v2138 = vmin.f32 %v2122, 20.0
    %v2139 = vmin.f32 %v2123, 20.0
    %v2140 = vmin.f32 %v2124, 20.0
    %v2141 = vmul.f32 %v2133, 1.442695
    %v2142 = vpow.pop %v2141
    %v2143 = vmul.f32 %v2134, 1.442695
    %v2144 = vpow.pop %v2143
    %v2145 = vmul.f32 %v2135, 1.442695
    %v2146 = vpow.pop %v2145
    %v2147 = vmul.f32 %v2136, 1.442695
    %v2148 = vpow.pop %v2147
    %v2149 = vmul.f32 %v2137, 1.442695
    %v2150 = vpow.pop %v2149
    %v2151 = vmul.f32 %v2138, 1.442695
    %v2152 = vpow.pop %v2151
    %v2153 = vmul.f32 %v2139, 1.442695
    %v2154 = vpow.pop %v2153
    %v2155 = vmul.f32 %v2140, 1.442695
    %v2156 = vpow.pop %v2155
    %v2157 = vadd.f32 %v2142, 1.0
    %v2158 = vlog2.pop %v2157
    %v2159 = vmul.f32 %v2158, 0.6931472
    %v2160 = vmul.f32 -0.5, %v2142
    %v2161 = vadd.f32 %v2160, 1.0
    %v2162 = vmul.f32 %v2161, %v2142
    %v2163 = vand.u32 2147483647, %v2142
    %vm2164 = vcmp.lt.f32.partialorder %v2163, 0.0004427343
    %v2165 = vsel %vm2164, %v2162, %v2159
    %v2166 = vadd.f32 %v2144, 1.0
    %v2167 = vlog2.pop %v2166
    %v2168 = vmul.f32 %v2167, 0.6931472
    %v2169 = vmul.f32 -0.5, %v2144
    %v2170 = vadd.f32 %v2169, 1.0
    %v2171 = vmul.f32 %v2170, %v2144
    %v2172 = vand.u32 2147483647, %v2144
    %vm2173 = vcmp.lt.f32.partialorder %v2172, 0.0004427343
    %v2174 = vsel %vm2173, %v2171, %v2168
    %v2175 = vadd.f32 %v2146, 1.0
    %v2176 = vlog2.pop %v2175
    %v2177 = vmul.f32 %v2176, 0.6931472
    %v2178 = vmul.f32 -0.5, %v2146
    %v2179 = vadd.f32 %v2178, 1.0
    %v2180 = vmul.f32 %v2179, %v2146
    %v2181 = vand.u32 2147483647, %v2146
    %vm2182 = vcmp.lt.f32.partialorder %v2181, 0.0004427343
    %v2183 = vsel %vm2182, %v2180, %v2177
    %v2184 = vadd.f32 %v2148, 1.0
    %v2185 = vlog2.pop %v2184
    %v2186 = vmul.f32 %v2185, 0.6931472
    %v2187 = vmul.f32 -0.5, %v2148
    %v2188 = vadd.f32 %v2187, 1.0
    %v2189 = vmul.f32 %v2188, %v2148
    %v2190 = vand.u32 2147483647, %v2148
    %vm2191 = vcmp.lt.f32.partialorder %v2190, 0.0004427343
    %v2192 = vsel %vm2191, %v2189, %v2186
    %v2193 = vadd.f32 %v2150, 1.0
    %v2194 = vlog2.pop %v2193
    %v2195 = vmul.f32 %v2194, 0.6931472
    %v2196 = vmul.f32 -0.5, %v2150
    %v2197 = vadd.f32 %v2196, 1.0
    %v2198 = vmul.f32 %v2197, %v2150
    %v2199 = vand.u32 2147483647, %v2150
    %vm2200 = vcmp.lt.f32.partialorder %v2199, 0.0004427343
    %v2201 = vsel %vm2200, %v2198, %v2195
    %v2202 = vadd.f32 %v2152, 1.0
    %v2203 = vlog2.pop %v2202
    %v2204 = vmul.f32 %v2203, 0.6931472
    %v2205 = vmul.f32 -0.5, %v2152
    %v2206 = vadd.f32 %v2205, 1.0
    %v2207 = vmul.f32 %v2206, %v2152
    %v2208 = vand.u32 2147483647, %v2152
    %vm2209 = vcmp.lt.f32.partialorder %v2208, 0.0004427343
    %v2210 = vsel %vm2209, %v2207, %v2204
    %v2211 = vadd.f32 %v2154, 1.0
    %v2212 = vlog2.pop %v2211
    %v2213 = vmul.f32 %v2212, 0.6931472
    %v2214 = vmul.f32 -0.5, %v2154
    %v2215 = vadd.f32 %v2214, 1.0
    %v2216 = vmul.f32 %v2215, %v2154
    %v2217 = vand.u32 2147483647, %v2154
    %vm2218 = vcmp.lt.f32.partialorder %v2217, 0.0004427343
    %v2219 = vsel %vm2218, %v2216, %v2213
    %v2220 = vadd.f32 %v2156, 1.0
    %v2221 = vlog2.pop %v2220
    %v2222 = vmul.f32 %v2221, 0.6931472
    %v2223 = vmul.f32 -0.5, %v2156
    %v2224 = vadd.f32 %v2223, 1.0
    %v2225 = vmul.f32 %v2224, %v2156
    %v2226 = vand.u32 2147483647, %v2156
    %vm2227 = vcmp.lt.f32.partialorder %v2226, 0.0004427343
    %v2228 = vsel %vm2227, %v2225, %v2222
    %v2229 = vsel %vm2125, %v2117, %v2165
    %v2230 = vsel %vm2126, %v2118, %v2174
    %v2231 = vsel %vm2127, %v2119, %v2183
    %v2232 = vsel %vm2128, %v2120, %v2192
    %v2233 = vsel %vm2129, %v2121, %v2201
    %v2234 = vsel %vm2130, %v2122, %v2210
    %v2235 = vsel %vm2131, %v2123, %v2219
    %v2236 = vsel %vm2132, %v2124, %v2228
    %v2237 = vld [vmem:[#allocation10] sm:$0xff]
    %v2238 = vld [vmem:[#allocation10 + $0x8] sm:$0xff]
    %v2239 = vld [vmem:[#allocation10 + $0x10] sm:$0xff]
    %v2240 = vld [vmem:[#allocation10 + $0x18] sm:$0xff]
    %v2241 = vld [vmem:[#allocation10 + $0x20] sm:$0xff]
    %v2242 = vld [vmem:[#allocation10 + $0x28] sm:$0xff]
    %v2243 = vld [vmem:[#allocation10 + $0x30] sm:$0xff]
    %v2244 = vld [vmem:[#allocation10 + $0x38] sm:$0xff]
    %v2245 = vld [vmem:[#allocation10 + $0x40] sm:$0xff]
    %v2246 = vld [vmem:[#allocation10 + $0x48] sm:$0xff]
    %v2247 = vld [vmem:[#allocation10 + $0x50] sm:$0xff]
    %v2248 = vld [vmem:[#allocation10 + $0x58] sm:$0xff]
    %v2249 = vld [vmem:[#allocation10 + $0x60] sm:$0xff]
    %v2250 = vld [vmem:[#allocation10 + $0x68] sm:$0xff]
    %v2251 = vld [vmem:[#allocation10 + $0x70] sm:$0xff]
    %v2252 = vld [vmem:[#allocation10 + $0x78] sm:$0xff]
    %v2253 = vld [vmem:[%s5] sm:$0x1]
    %v2255 = vperm.slane %v2253, 0
    %2257 = vmatpush.msra.mxu0 %v2252
    %2258 = vmatpush.msra.mxu0 %v2251
    %2259 = vmatpush.msra.mxu0 %v2250
    %2260 = vmatpush.msra.mxu0 %v2249
    %2261 = vmatpush.msra.mxu0 %v2248
    %2262 = vmatpush.msra.mxu0 %v2247
    %2263 = vmatpush.msra.mxu0 %v2246
    %2264 = vmatpush.msra.mxu0 %v2245
    %2265 = vmatpush.msra.mxu0 %v2244
    %2266 = vmatpush.msra.mxu0 %v2243
    %2267 = vmatpush.msra.mxu0 %v2242
    %2268 = vmatpush.msra.mxu0 %v2241
    %2269 = vmatpush.msra.mxu0 %v2240
    %2270 = vmatpush.msra.mxu0 %v2239
    %2271 = vmatpush.msra.mxu0 %v2238
    %2272 = vmatpush.msra.mxu0 %v2237
    %2273 = vmatmul.f32.gmra.mxu0 %v2229
    %v2274 = vpop.f32.mrf.mxu0
    %v2275 = vadd.f32 %v2255, %v2274
    %2276 = vmatmul.f32.gmra.mxu0 %v2230
    %v2277 = vpop.f32.mrf.mxu0
    %v2278 = vadd.f32 %v2255, %v2277
    %2279 = vmatmul.f32.gmra.mxu0 %v2231
    %v2280 = vpop.f32.mrf.mxu0
    %v2281 = vadd.f32 %v2255, %v2280
    %2282 = vmatmul.f32.gmra.mxu0 %v2232
    %v2283 = vpop.f32.mrf.mxu0
    %v2284 = vadd.f32 %v2255, %v2283
    %2285 = vmatmul.f32.gmra.mxu0 %v2233
    %v2286 = vpop.f32.mrf.mxu0
    %v2287 = vadd.f32 %v2255, %v2286
    %2288 = vmatmul.f32.gmra.mxu0 %v2234
    %v2289 = vpop.f32.mrf.mxu0
    %v2290 = vadd.f32 %v2255, %v2289
    %2291 = vmatmul.f32.gmra.mxu0 %v2235
    %v2292 = vpop.f32.mrf.mxu0
    %v2293 = vadd.f32 %v2255, %v2292
    %2294 = vmatmul.f32.gmra.mxu0 %v2236
    %v2295 = vpop.f32.mrf.mxu0
    %v2296 = vadd.f32 %v2255, %v2295
    %2297 = vdwg.mxu0
    %2298 = vst [vmem:[%s6] sm:$0xff] %v2275
    %2299 = vst [vmem:[%s6 + $0x8] sm:$0xff] %v2278
    %2300 = vst [vmem:[%s6 + $0x10] sm:$0xff] %v2281
    %2301 = vst [vmem:[%s6 + $0x18] sm:$0xff] %v2284
    %2302 = vst [vmem:[%s6 + $0x20] sm:$0xff] %v2287
    %2303 = vst [vmem:[%s6 + $0x28] sm:$0xff] %v2290
    %2304 = vst [vmem:[%s6 + $0x30] sm:$0xff] %v2293
    %2305 = vst [vmem:[%s6 + $0x38] sm:$0xff] %v2296
    // Predicated region
    $region42: #{_lambda_.3} parent=1 // pred_check
      _
    $region43: #{_lambda_.3} parent=1 // pred_check_branch
      %2307 = sbr.rel (0) target = $region45
    $region44: #{_lambda_.3} parent=1 // pred_region
      _
    $region45: #{_lambda_.3} parent=1 // pred_fallthru
      _
    // Predicated region
    $region46: #{_lambda_.3} parent=1 // pred_check
      _
    $region47: #{_lambda_.3} parent=1 // pred_check_branch
      %2309 = sbr.rel (0) target = $region49
    $region48: #{_lambda_.3} parent=1 // pred_region
      _
    $region49: #{_lambda_.3} parent=1 // pred_fallthru
      _
    %2310 = vsyncpa [#allocation7], 1
    %2311 = vsyncpa [#allocation9], 1

// kernel: _lambda_.2
$region0: #{_lambda_.2}
  #allocation0 [shape = 'u32[]', space=smem, size = 0x4, offset = 0x4, fixed_abs, tag = 'smem constant byte address 0x4 - core index']
  #allocation1 [shape = 'u32[72,128]{1,0:T(1,128)}', space=vmem, size = 0x9000, scoped, tag = 'internal scratch']
  #allocation2 [shape = 'f32[8,128]{1,0:T(8,128)}', space=vmem, size = 0x1000, scoped, tag = 'scratch operand']
  #allocation3 [shape = 'f32[8,128]{1,0:T(8,128)}', space=vmem, size = 0x1000, scoped, tag = 'scratch operand']
  #allocation4 [shape = 'f32[64,512]{1,0:T(8,128)}', space=vmem, size = 0x20000, scoped, tag = 'scratch operand']
  %s0 = inlined_call_operand.vmem [shape: f32[8,8,128], index: 0, kind: input, shape index: {}]
  %s1 = inlined_call_operand.hbm [shape: f32[128,512], index: 1, kind: input, shape index: {}]
  %s2 = inlined_call_operand.hbm [shape: f32[128,512], index: 2, kind: input, shape index: {}]
  %s3 = inlined_call_operand.vmem [shape: f32[1,512], index: 3, kind: input, shape index: {}]
  %s4 = inlined_call_operand.vmem [shape: f32[8,8,128], index: 4, kind: output, shape index: {}]
  %s5 = sld [smem:[#allocation0]]
  $region38: #{_lambda_.2} parent=0
    _
  %s7 = ssub.s32 1, %s5
  %s8 = scalar_select 0, %s7, %s5
  $region1: #{_lambda_.2} parent=0
    #allocation5 [shape = 'u8[262144]{0}', space=vmem, size = 0x40000, scoped, tag = 'input window, operand 1, single buffered']
    #allocation6 [shape = 's32[1]{0}', space=sflag, size = 0x4, scoped, tag = 'scoped memory for _lambda_.2']
    #allocation7 [shape = 'u8[262144]{0}', space=vmem, size = 0x40000, scoped, tag = 'input window, operand 2, single buffered']
    #allocation8 [shape = 's32[1]{0}', space=sflag, size = 0x4, scoped, tag = 'scoped memory for _lambda_.2']
    %9 = vsyncpa [#allocation6], 0
    %10 = vsyncpa [#allocation8], 0
    // Predicated region
    $region2: #{_lambda_.2} parent=1 // pred_check
      _
    $region3: #{_lambda_.2} parent=1 // pred_check_branch
      %12 = sbr.rel (0) target = $region5
    $region4: #{_lambda_.2} parent=1 // pred_region
      _
    $region5: #{_lambda_.2} parent=1 // pred_fallthru
      _
    // Predicated region
    $region6: #{_lambda_.2} parent=1 // pred_check
      _
    $region7: #{_lambda_.2} parent=1 // pred_check_branch
      %14 = sbr.rel (0) target = $region9
    $region8: #{_lambda_.2} parent=1 // pred_region
      %16 = vsyncadd [#allocation6], 0
      %s17 = sshll.u32 %s1, 4
      %s18 = int_to_ptr.hbm [resolvable:$true] %s17
      %s19 = sshll.u32 [#allocation5], 4
      %s20 = int_to_ptr.vmem [resolvable:$true] %s19
      %25 = dma.hbm_to_vmem [thread:$0]  %s18, 8192, %s20, [#allocation6], 512, 512, 32
    $region9: #{_lambda_.2} parent=1 // pred_fallthru
      _
    // Predicated region
    $region10: #{_lambda_.2} parent=1 // pred_check
      _
    $region11: #{_lambda_.2} parent=1 // pred_check_branch
      %27 = sbr.rel (0) target = $region13
    $region12: #{_lambda_.2} parent=1 // pred_region
      %29 = vsyncadd [#allocation8], 0
      %s30 = sshll.u32 %s2, 4
      %s31 = int_to_ptr.hbm [resolvable:$true] %s30
      %s32 = sshll.u32 [#allocation7], 4
      %s33 = int_to_ptr.vmem [resolvable:$true] %s32
      %38 = dma.hbm_to_vmem [thread:$0]  %s31, 8192, %s33, [#allocation8], 512, 512, 32
    $region13: #{_lambda_.2} parent=1 // pred_fallthru
      _
    // Predicated region
    $region14: #{_lambda_.2} parent=1 // pred_check
      _
    $region15: #{_lambda_.2} parent=1 // pred_check_branch
      %40 = sbr.rel (0) target = $region17
    $region16: #{_lambda_.2} parent=1 // pred_region
      _
    $region17: #{_lambda_.2} parent=1 // pred_fallthru
      _
    // Predicated region
    $region18: #{_lambda_.2} parent=1 // pred_check
      _
    $region19: #{_lambda_.2} parent=1 // pred_check_branch
      %42 = sbr.rel (0) target = $region21
    $region20: #{_lambda_.2} parent=1 // pred_region
      %44 = dma.done [#allocation6], 8192
    $region21: #{_lambda_.2} parent=1 // pred_fallthru
      _
    // Predicated region
    $region22: #{_lambda_.2} parent=1 // pred_check
      _
    $region23: #{_lambda_.2} parent=1 // pred_check_branch
      %46 = sbr.rel (0) target = $region25
    $region24: #{_lambda_.2} parent=1 // pred_region
      %48 = dma.done [#allocation8], 8192
    $region25: #{_lambda_.2} parent=1 // pred_fallthru
      _
    %p49 = scmp.eq.s32.totalorder 0, 0
    // Predicated region
    $region26: #{_lambda_.2} parent=1 // pred_check
      %p50 = pneg %p49
    $region27: #{_lambda_.2} parent=1 // pred_check_branch
      %52 = sbr.rel (%p50) target = $region29
    $region28: #{_lambda_.2} parent=1 // pred_region
      %53 = vst [vmem:[#allocation2] sm:$0xff] 0.0
      %54 = vst [vmem:[#allocation3] sm:$0xff] 0.0
    $region29: #{_lambda_.2} parent=1 // pred_fallthru
      _
    %v55 = vld [vmem:[%s0] sm:$0xff]
    %v56 = vld [vmem:[%s0 + $0x8] sm:$0xff]
    %v57 = vld [vmem:[%s0 + $0x10] sm:$0xff]
    %v58 = vld [vmem:[%s0 + $0x18] sm:$0xff]
    %v59 = vld [vmem:[%s0 + $0x20] sm:$0xff]
    %v60 = vld [vmem:[%s0 + $0x28] sm:$0xff]
    %v61 = vld [vmem:[%s0 + $0x30] sm:$0xff]
    %v62 = vld [vmem:[%s0 + $0x38] sm:$0xff]
    %v63 = vld [vmem:[#allocation5] sm:$0xff]
    %v64 = vld [vmem:[#allocation5 + $0x8] sm:$0xff]
    %v65 = vld [vmem:[#allocation5 + $0x10] sm:$0xff]
    %v66 = vld [vmem:[#allocation5 + $0x18] sm:$0xff]
    %v67 = vld [vmem:[#allocation5 + $0x20] sm:$0xff]
    %v68 = vld [vmem:[#allocation5 + $0x28] sm:$0xff]
    %v69 = vld [vmem:[#allocation5 + $0x30] sm:$0xff]
    %v70 = vld [vmem:[#allocation5 + $0x38] sm:$0xff]
    %v71 = vld [vmem:[#allocation5 + $0x40] sm:$0xff]
    %v72 = vld [vmem:[#allocation5 + $0x48] sm:$0xff]
    %v73 = vld [vmem:[#allocation5 + $0x50] sm:$0xff]
    %v74 = vld [vmem:[#allocation5 + $0x58] sm:$0xff]
    %v75 = vld [vmem:[#allocation5 + $0x60] sm:$0xff]
    %v76 = vld [vmem:[#allocation5 + $0x68] sm:$0xff]
    %v77 = vld [vmem:[#allocation5 + $0x70] sm:$0xff]
    %v78 = vld [vmem:[#allocation5 + $0x78] sm:$0xff]
    %v79 = vld [vmem:[#allocation5 + $0x80] sm:$0xff]
    %v80 = vld [vmem:[#allocation5 + $0x88] sm:$0xff]
    %v81 = vld [vmem:[#allocation5 + $0x90] sm:$0xff]
    %v82 = vld [vmem:[#allocation5 + $0x98] sm:$0xff]
    %v83 = vld [vmem:[#allocation5 + $0xa0] sm:$0xff]
    %v84 = vld [vmem:[#allocation5 + $0xa8] sm:$0xff]
    %v85 = vld [vmem:[#allocation5 + $0xb0] sm:$0xff]
    %v86 = vld [vmem:[#allocation5 + $0xb8] sm:$0xff]
    %v87 = vld [vmem:[#allocation5 + $0xc0] sm:$0xff]
    %v88 = vld [vmem:[#allocation5 + $0xc8] sm:$0xff]
    %v89 = vld [vmem:[#allocation5 + $0xd0] sm:$0xff]
    %v90 = vld [vmem:[#allocation5 + $0xd8] sm:$0xff]
    %v91 = vld [vmem:[#allocation5 + $0xe0] sm:$0xff]
    %v92 = vld [vmem:[#allocation5 + $0xe8] sm:$0xff]
    %v93 = vld [vmem:[#allocation5 + $0xf0] sm:$0xff]
    %v94 = vld [vmem:[#allocation5 + $0xf8] sm:$0xff]
    %v95 = vld [vmem:[#allocation5 + $0x100] sm:$0xff]
    %v96 = vld [vmem:[#allocation5 + $0x108] sm:$0xff]
    %v97 = vld [vmem:[#allocation5 + $0x110] sm:$0xff]
    %v98 = vld [vmem:[#allocation5 + $0x118] sm:$0xff]
    %v99 = vld [vmem:[#allocation5 + $0x120] sm:$0xff]
    %v100 = vld [vmem:[#allocation5 + $0x128] sm:$0xff]
    %v101 = vld [vmem:[#allocation5 + $0x130] sm:$0xff]
    %v102 = vld [vmem:[#allocation5 + $0x138] sm:$0xff]
    %v103 = vld [vmem:[#allocation5 + $0x140] sm:$0xff]
    %v104 = vld [vmem:[#allocation5 + $0x148] sm:$0xff]
    %v105 = vld [vmem:[#allocation5 + $0x150] sm:$0xff]
    %v106 = vld [vmem:[#allocation5 + $0x158] sm:$0xff]
    %v107 = vld [vmem:[#allocation5 + $0x160] sm:$0xff]
    %v108 = vld [vmem:[#allocation5 + $0x168] sm:$0xff]
    %v109 = vld [vmem:[#allocation5 + $0x170] sm:$0xff]
    %v110 = vld [vmem:[#allocation5 + $0x178] sm:$0xff]
    %v111 = vld [vmem:[#allocation5 + $0x180] sm:$0xff]
    %v112 = vld [vmem:[#allocation5 + $0x188] sm:$0xff]
    %v113 = vld [vmem:[#allocation5 + $0x190] sm:$0xff]
    %v114 = vld [vmem:[#allocation5 + $0x198] sm:$0xff]
    %v115 = vld [vmem:[#allocation5 + $0x1a0] sm:$0xff]
    %v116 = vld [vmem:[#allocation5 + $0x1a8] sm:$0xff]
    %v117 = vld [vmem:[#allocation5 + $0x1b0] sm:$0xff]
    %v118 = vld [vmem:[#allocation5 + $0x1b8] sm:$0xff]
    %v119 = vld [vmem:[#allocation5 + $0x1c0] sm:$0xff]
    %v120 = vld [vmem:[#allocation5 + $0x1c8] sm:$0xff]
    %v121 = vld [vmem:[#allocation5 + $0x1d0] sm:$0xff]
    %v122 = vld [vmem:[#allocation5 + $0x1d8] sm:$0xff]
    %v123 = vld [vmem:[#allocation5 + $0x1e0] sm:$0xff]
    %v124 = vld [vmem:[#allocation5 + $0x1e8] sm:$0xff]
    %v125 = vld [vmem:[#allocation5 + $0x1f0] sm:$0xff]
    %v126 = vld [vmem:[#allocation5 + $0x1f8] sm:$0xff]
    %v127 = vld [vmem:[%s3] sm:$0xf]
    %v129 = vperm.slane %v127, 0
    %v130 = vperm.slane %v127, 1
    %v131 = vperm.slane %v127, 2
    %v132 = vperm.slane %v127, 3
    %137 = vmatpush.msra.mxu0 %v123
    %138 = vmatpush.msra.mxu0 %v119
    %139 = vmatpush.msra.mxu0 %v115
    %140 = vmatpush.msra.mxu0 %v111
    %141 = vmatpush.msra.mxu0 %v107
    %142 = vmatpush.msra.mxu0 %v103
    %143 = vmatpush.msra.mxu0 %v99
    %144 = vmatpush.msra.mxu0 %v95
    %145 = vmatpush.msra.mxu0 %v91
    %146 = vmatpush.msra.mxu0 %v87
    %147 = vmatpush.msra.mxu0 %v83
    %148 = vmatpush.msra.mxu0 %v79
    %149 = vmatpush.msra.mxu0 %v75
    %150 = vmatpush.msra.mxu0 %v71
    %151 = vmatpush.msra.mxu0 %v67
    %152 = vmatpush.msra.mxu0 %v63
    %153 = vmatmul.f32.gmra.mxu0 %v55
    %v154 = vpop.f32.mrf.mxu0
    %v155 = vadd.f32 %v129, %v154
    %156 = vmatmul.f32.gmra.mxu0 %v56
    %v157 = vpop.f32.mrf.mxu0
    %v158 = vadd.f32 %v129, %v157
    %159 = vmatmul.f32.gmra.mxu0 %v57
    %v160 = vpop.f32.mrf.mxu0
    %v161 = vadd.f32 %v129, %v160
    %162 = vmatmul.f32.gmra.mxu0 %v58
    %v163 = vpop.f32.mrf.mxu0
    %v164 = vadd.f32 %v129, %v163
    %165 = vmatmul.f32.gmra.mxu0 %v59
    %v166 = vpop.f32.mrf.mxu0
    %v167 = vadd.f32 %v129, %v166
    %168 = vmatmul.f32.gmra.mxu0 %v60
    %v169 = vpop.f32.mrf.mxu0
    %v170 = vadd.f32 %v129, %v169
    %171 = vmatmul.f32.gmra.mxu0 %v61
    %v172 = vpop.f32.mrf.mxu0
    %v173 = vadd.f32 %v129, %v172
    %174 = vmatmul.f32.gmra.mxu0 %v62
    %v175 = vpop.f32.mrf.mxu0
    %v176 = vadd.f32 %v129, %v175
    %177 = vdwg.mxu0
    %178 = vmatpush.msra.mxu0 %v124
    %179 = vmatpush.msra.mxu0 %v120
    %180 = vmatpush.msra.mxu0 %v116
    %181 = vmatpush.msra.mxu0 %v112
    %182 = vmatpush.msra.mxu0 %v108
    %183 = vmatpush.msra.mxu0 %v104
    %184 = vmatpush.msra.mxu0 %v100
    %185 = vmatpush.msra.mxu0 %v96
    %186 = vmatpush.msra.mxu0 %v92
    %187 = vmatpush.msra.mxu0 %v88
    %188 = vmatpush.msra.mxu0 %v84
    %189 = vmatpush.msra.mxu0 %v80
    %190 = vmatpush.msra.mxu0 %v76
    %191 = vmatpush.msra.mxu0 %v72
    %192 = vmatpush.msra.mxu0 %v68
    %193 = vmatpush.msra.mxu0 %v64
    %194 = vmatmul.f32.gmra.mxu0 %v55
    %v195 = vpop.f32.mrf.mxu0
    %v196 = vadd.f32 %v130, %v195
    %197 = vmatmul.f32.gmra.mxu0 %v56
    %v198 = vpop.f32.mrf.mxu0
    %v199 = vadd.f32 %v130, %v198
    %200 = vmatmul.f32.gmra.mxu0 %v57
    %v201 = vpop.f32.mrf.mxu0
    %v202 = vadd.f32 %v130, %v201
    %203 = vmatmul.f32.gmra.mxu0 %v58
    %v204 = vpop.f32.mrf.mxu0
    %v205 = vadd.f32 %v130, %v204
    %206 = vmatmul.f32.gmra.mxu0 %v59
    %v207 = vpop.f32.mrf.mxu0
    %v208 = vadd.f32 %v130, %v207
    %209 = vmatmul.f32.gmra.mxu0 %v60
    %v210 = vpop.f32.mrf.mxu0
    %v211 = vadd.f32 %v130, %v210
    %212 = vmatmul.f32.gmra.mxu0 %v61
    %v213 = vpop.f32.mrf.mxu0
    %v214 = vadd.f32 %v130, %v213
    %215 = vmatmul.f32.gmra.mxu0 %v62
    %v216 = vpop.f32.mrf.mxu0
    %v217 = vadd.f32 %v130, %v216
    %218 = vdwg.mxu0
    %219 = vmatpush.msra.mxu0 %v125
    %220 = vmatpush.msra.mxu0 %v121
    %221 = vmatpush.msra.mxu0 %v117
    %222 = vmatpush.msra.mxu0 %v113
    %223 = vmatpush.msra.mxu0 %v109
    %224 = vmatpush.msra.mxu0 %v105
    %225 = vmatpush.msra.mxu0 %v101
    %226 = vmatpush.msra.mxu0 %v97
    %227 = vmatpush.msra.mxu0 %v93
    %228 = vmatpush.msra.mxu0 %v89
    %229 = vmatpush.msra.mxu0 %v85
    %230 = vmatpush.msra.mxu0 %v81
    %231 = vmatpush.msra.mxu0 %v77
    %232 = vmatpush.msra.mxu0 %v73
    %233 = vmatpush.msra.mxu0 %v69
    %234 = vmatpush.msra.mxu0 %v65
    %235 = vmatmul.f32.gmra.mxu0 %v55
    %v236 = vpop.f32.mrf.mxu0
    %v237 = vadd.f32 %v131, %v236
    %238 = vmatmul.f32.gmra.mxu0 %v56
    %v239 = vpop.f32.mrf.mxu0
    %v240 = vadd.f32 %v131, %v239
    %241 = vmatmul.f32.gmra.mxu0 %v57
    %v242 = vpop.f32.mrf.mxu0
    %v243 = vadd.f32 %v131, %v242
    %244 = vmatmul.f32.gmra.mxu0 %v58
    %v245 = vpop.f32.mrf.mxu0
    %v246 = vadd.f32 %v131, %v245
    %247 = vmatmul.f32.gmra.mxu0 %v59
    %v248 = vpop.f32.mrf.mxu0
    %v249 = vadd.f32 %v131, %v248
    %250 = vmatmul.f32.gmra.mxu0 %v60
    %v251 = vpop.f32.mrf.mxu0
    %v252 = vadd.f32 %v131, %v251
    %253 = vmatmul.f32.gmra.mxu0 %v61
    %v254 = vpop.f32.mrf.mxu0
    %v255 = vadd.f32 %v131, %v254
    %256 = vmatmul.f32.gmra.mxu0 %v62
    %v257 = vpop.f32.mrf.mxu0
    %v258 = vadd.f32 %v131, %v257
    %259 = vdwg.mxu0
    %260 = vmatpush.msra.mxu0 %v126
    %261 = vmatpush.msra.mxu0 %v122
    %262 = vmatpush.msra.mxu0 %v118
    %263 = vmatpush.msra.mxu0 %v114
    %264 = vmatpush.msra.mxu0 %v110
    %265 = vmatpush.msra.mxu0 %v106
    %266 = vmatpush.msra.mxu0 %v102
    %267 = vmatpush.msra.mxu0 %v98
    %268 = vmatpush.msra.mxu0 %v94
    %269 = vmatpush.msra.mxu0 %v90
    %270 = vmatpush.msra.mxu0 %v86
    %271 = vmatpush.msra.mxu0 %v82
    %272 = vmatpush.msra.mxu0 %v78
    %273 = vmatpush.msra.mxu0 %v74
    %274 = vmatpush.msra.mxu0 %v70
    %275 = vmatpush.msra.mxu0 %v66
    %276 = vmatmul.f32.gmra.mxu0 %v55
    %v277 = vpop.f32.mrf.mxu0
    %v278 = vadd.f32 %v132, %v277
    %279 = vmatmul.f32.gmra.mxu0 %v56
    %v280 = vpop.f32.mrf.mxu0
    %v281 = vadd.f32 %v132, %v280
    %282 = vmatmul.f32.gmra.mxu0 %v57
    %v283 = vpop.f32.mrf.mxu0
    %v284 = vadd.f32 %v132, %v283
    %285 = vmatmul.f32.gmra.mxu0 %v58
    %v286 = vpop.f32.mrf.mxu0
    %v287 = vadd.f32 %v132, %v286
    %288 = vmatmul.f32.gmra.mxu0 %v59
    %v289 = vpop.f32.mrf.mxu0
    %v290 = vadd.f32 %v132, %v289
    %291 = vmatmul.f32.gmra.mxu0 %v60
    %v292 = vpop.f32.mrf.mxu0
    %v293 = vadd.f32 %v132, %v292
    %294 = vmatmul.f32.gmra.mxu0 %v61
    %v295 = vpop.f32.mrf.mxu0
    %v296 = vadd.f32 %v132, %v295
    %297 = vmatmul.f32.gmra.mxu0 %v62
    %v298 = vpop.f32.mrf.mxu0
    %v299 = vadd.f32 %v132, %v298
    %300 = vdwg.mxu0
    %301 = vst [vmem:[#allocation4] sm:$0xff] %v155
    %302 = vst [vmem:[#allocation4 + $0x8] sm:$0xff] %v196
    %303 = vst [vmem:[#allocation4 + $0x10] sm:$0xff] %v237
    %304 = vst [vmem:[#allocation4 + $0x18] sm:$0xff] %v278
    %305 = vst [vmem:[#allocation4 + $0x20] sm:$0xff] %v158
    %306 = vst [vmem:[#allocation4 + $0x28] sm:$0xff] %v199
    %307 = vst [vmem:[#allocation4 + $0x30] sm:$0xff] %v240
    %308 = vst [vmem:[#allocation4 + $0x38] sm:$0xff] %v281
    %309 = vst [vmem:[#allocation4 + $0x40] sm:$0xff] %v161
    %310 = vst [vmem:[#allocation4 + $0x48] sm:$0xff] %v202
    %311 = vst [vmem:[#allocation4 + $0x50] sm:$0xff] %v243
    %312 = vst [vmem:[#allocation4 + $0x58] sm:$0xff] %v284
    %313 = vst [vmem:[#allocation4 + $0x60] sm:$0xff] %v164
    %314 = vst [vmem:[#allocation4 + $0x68] sm:$0xff] %v205
    %315 = vst [vmem:[#allocation4 + $0x70] sm:$0xff] %v246
    %316 = vst [vmem:[#allocation4 + $0x78] sm:$0xff] %v287
    %317 = vst [vmem:[#allocation4 + $0x80] sm:$0xff] %v167
    %318 = vst [vmem:[#allocation4 + $0x88] sm:$0xff] %v208
    %319 = vst [vmem:[#allocation4 + $0x90] sm:$0xff] %v249
    %320 = vst [vmem:[#allocation4 + $0x98] sm:$0xff] %v290
    %321 = vst [vmem:[#allocation4 + $0xa0] sm:$0xff] %v170
    %322 = vst [vmem:[#allocation4 + $0xa8] sm:$0xff] %v211
    %323 = vst [vmem:[#allocation4 + $0xb0] sm:$0xff] %v252
    %324 = vst [vmem:[#allocation4 + $0xb8] sm:$0xff] %v293
    %325 = vst [vmem:[#allocation4 + $0xc0] sm:$0xff] %v173
    %326 = vst [vmem:[#allocation4 + $0xc8] sm:$0xff] %v214
    %327 = vst [vmem:[#allocation4 + $0xd0] sm:$0xff] %v255
    %328 = vst [vmem:[#allocation4 + $0xd8] sm:$0xff] %v296
    %329 = vst [vmem:[#allocation4 + $0xe0] sm:$0xff] %v176
    %330 = vst [vmem:[#allocation4 + $0xe8] sm:$0xff] %v217
    %331 = vst [vmem:[#allocation4 + $0xf0] sm:$0xff] %v258
    %332 = vst [vmem:[#allocation4 + $0xf8] sm:$0xff] %v299
    %v333 = vld [vmem:[#allocation2] sm:$0xff]
    %v334 = vld [vmem:[#allocation3] sm:$0xff]
    %s335 = smul.u32 0, 4
    %s336 = smul.addr %s335, 8
    %s337 = scalar_lea.vmem [#allocation4], %s336
    %v338 = vld [vmem:[%s337] sm:$0xff]
    %v339 = vld [vmem:[%s337 + $0x8] sm:$0xff]
    %v340 = vld [vmem:[%s337 + $0x10] sm:$0xff]
    %v341 = vld [vmem:[%s337 + $0x18] sm:$0xff]
    %v342 = vld [vmem:[#allocation7] sm:$0xff]
    %v343 = vld [vmem:[#allocation7 + $0x8] sm:$0xff]
    %v344 = vld [vmem:[#allocation7 + $0x10] sm:$0xff]
    %v345 = vld [vmem:[#allocation7 + $0x18] sm:$0xff]
    %v346 = vld [vmem:[#allocation7 + $0x20] sm:$0xff]
    %v347 = vld [vmem:[#allocation7 + $0x28] sm:$0xff]
    %v348 = vld [vmem:[#allocation7 + $0x30] sm:$0xff]
    %v349 = vld [vmem:[#allocation7 + $0x38] sm:$0xff]
    %v350 = vld [vmem:[#allocation7 + $0x40] sm:$0xff]
    %v351 = vld [vmem:[#allocation7 + $0x48] sm:$0xff]
    %v352 = vld [vmem:[#allocation7 + $0x50] sm:$0xff]
    %v353 = vld [vmem:[#allocation7 + $0x58] sm:$0xff]
    %v354 = vld [vmem:[#allocation7 + $0x60] sm:$0xff]
    %v355 = vld [vmem:[#allocation7 + $0x68] sm:$0xff]
    %v356 = vld [vmem:[#allocation7 + $0x70] sm:$0xff]
    %v357 = vld [vmem:[#allocation7 + $0x78] sm:$0xff]
    %v358 = vld [vmem:[#allocation7 + $0x80] sm:$0xff]
    %v359 = vld [vmem:[#allocation7 + $0x88] sm:$0xff]
    %v360 = vld [vmem:[#allocation7 + $0x90] sm:$0xff]
    %v361 = vld [vmem:[#allocation7 + $0x98] sm:$0xff]
    %v362 = vld [vmem:[#allocation7 + $0xa0] sm:$0xff]
    %v363 = vld [vmem:[#allocation7 + $0xa8] sm:$0xff]
    %v364 = vld [vmem:[#allocation7 + $0xb0] sm:$0xff]
    %v365 = vld [vmem:[#allocation7 + $0xb8] sm:$0xff]
    %v366 = vld [vmem:[#allocation7 + $0xc0] sm:$0xff]
    %v367 = vld [vmem:[#allocation7 + $0xc8] sm:$0xff]
    %v368 = vld [vmem:[#allocation7 + $0xd0] sm:$0xff]
    %v369 = vld [vmem:[#allocation7 + $0xd8] sm:$0xff]
    %v370 = vld [vmem:[#allocation7 + $0xe0] sm:$0xff]
    %v371 = vld [vmem:[#allocation7 + $0xe8] sm:$0xff]
    %v372 = vld [vmem:[#allocation7 + $0xf0] sm:$0xff]
    %v373 = vld [vmem:[#allocation7 + $0xf8] sm:$0xff]
    %v374 = vld [vmem:[#allocation7 + $0x100] sm:$0xff]
    %v375 = vld [vmem:[#allocation7 + $0x108] sm:$0xff]
    %v376 = vld [vmem:[#allocation7 + $0x110] sm:$0xff]
    %v377 = vld [vmem:[#allocation7 + $0x118] sm:$0xff]
    %v378 = vld [vmem:[#allocation7 + $0x120] sm:$0xff]
    %v379 = vld [vmem:[#allocation7 + $0x128] sm:$0xff]
    %v380 = vld [vmem:[#allocation7 + $0x130] sm:$0xff]
    %v381 = vld [vmem:[#allocation7 + $0x138] sm:$0xff]
    %v382 = vld [vmem:[#allocation7 + $0x140] sm:$0xff]
    %v383 = vld [vmem:[#allocation7 + $0x148] sm:$0xff]
    %v384 = vld [vmem:[#allocation7 + $0x150] sm:$0xff]
    %v385 = vld [vmem:[#allocation7 + $0x158] sm:$0xff]
    %v386 = vld [vmem:[#allocation7 + $0x160] sm:$0xff]
    %v387 = vld [vmem:[#allocation7 + $0x168] sm:$0xff]
    %v388 = vld [vmem:[#allocation7 + $0x170] sm:$0xff]
    %v389 = vld [vmem:[#allocation7 + $0x178] sm:$0xff]
    %v390 = vld [vmem:[#allocation7 + $0x180] sm:$0xff]
    %v391 = vld [vmem:[#allocation7 + $0x188] sm:$0xff]
    %v392 = vld [vmem:[#allocation7 + $0x190] sm:$0xff]
    %v393 = vld [vmem:[#allocation7 + $0x198] sm:$0xff]
    %v394 = vld [vmem:[#allocation7 + $0x1a0] sm:$0xff]
    %v395 = vld [vmem:[#allocation7 + $0x1a8] sm:$0xff]
    %v396 = vld [vmem:[#allocation7 + $0x1b0] sm:$0xff]
    %v397 = vld [vmem:[#allocation7 + $0x1b8] sm:$0xff]
    %v398 = vld [vmem:[#allocation7 + $0x1c0] sm:$0xff]
    %v399 = vld [vmem:[#allocation7 + $0x1c8] sm:$0xff]
    %v400 = vld [vmem:[#allocation7 + $0x1d0] sm:$0xff]
    %v401 = vld [vmem:[#allocation7 + $0x1d8] sm:$0xff]
    %v402 = vld [vmem:[#allocation7 + $0x1e0] sm:$0xff]
    %v403 = vld [vmem:[#allocation7 + $0x1e8] sm:$0xff]
    %v404 = vld [vmem:[#allocation7 + $0x1f0] sm:$0xff]
    %v405 = vld [vmem:[#allocation7 + $0x1f8] sm:$0xff]
    %406 = vmatpush.msra.mxu0 %v402
    %407 = vmatpush.msra.mxu0 %v398
    %408 = vmatpush.msra.mxu0 %v394
    %409 = vmatpush.msra.mxu0 %v390
    %410 = vmatpush.msra.mxu0 %v386
    %411 = vmatpush.msra.mxu0 %v382
    %412 = vmatpush.msra.mxu0 %v378
    %413 = vmatpush.msra.mxu0 %v374
    %414 = vmatpush.msra.mxu0 %v370
    %415 = vmatpush.msra.mxu0 %v366
    %416 = vmatpush.msra.mxu0 %v362
    %417 = vmatpush.msra.mxu0 %v358
    %418 = vmatpush.msra.mxu0 %v354
    %419 = vmatpush.msra.mxu0 %v350
    %420 = vmatpush.msra.mxu0 %v346
    %421 = vmatpush.msra.mxu0 %v342
    %422 = vmatmul.f32.gmra.mxu0 %v333
    %v423 = vpop.f32.mrf.mxu0
    %v424 = vadd.f32 0.0, %v423
    %425 = vdwg.mxu0
    %426 = vmatpush.msra.mxu0 %v403
    %427 = vmatpush.msra.mxu0 %v399
    %428 = vmatpush.msra.mxu0 %v395
    %429 = vmatpush.msra.mxu0 %v391
    %430 = vmatpush.msra.mxu0 %v387
    %431 = vmatpush.msra.mxu0 %v383
    %432 = vmatpush.msra.mxu0 %v379
    %433 = vmatpush.msra.mxu0 %v375
    %434 = vmatpush.msra.mxu0 %v371
    %435 = vmatpush.msra.mxu0 %v367
    %436 = vmatpush.msra.mxu0 %v363
    %437 = vmatpush.msra.mxu0 %v359
    %438 = vmatpush.msra.mxu0 %v355
    %439 = vmatpush.msra.mxu0 %v351
    %440 = vmatpush.msra.mxu0 %v347
    %441 = vmatpush.msra.mxu0 %v343
    %442 = vmatmul.f32.gmra.mxu0 %v333
    %v443 = vpop.f32.mrf.mxu0
    %v444 = vadd.f32 0.0, %v443
    %445 = vdwg.mxu0
    %446 = vmatpush.msra.mxu0 %v404
    %447 = vmatpush.msra.mxu0 %v400
    %448 = vmatpush.msra.mxu0 %v396
    %449 = vmatpush.msra.mxu0 %v392
    %450 = vmatpush.msra.mxu0 %v388
    %451 = vmatpush.msra.mxu0 %v384
    %452 = vmatpush.msra.mxu0 %v380
    %453 = vmatpush.msra.mxu0 %v376
    %454 = vmatpush.msra.mxu0 %v372
    %455 = vmatpush.msra.mxu0 %v368
    %456 = vmatpush.msra.mxu0 %v364
    %457 = vmatpush.msra.mxu0 %v360
    %458 = vmatpush.msra.mxu0 %v356
    %459 = vmatpush.msra.mxu0 %v352
    %460 = vmatpush.msra.mxu0 %v348
    %461 = vmatpush.msra.mxu0 %v344
    %462 = vmatmul.f32.gmra.mxu0 %v333
    %v463 = vpop.f32.mrf.mxu0
    %v464 = vadd.f32 0.0, %v463
    %465 = vdwg.mxu0
    %466 = vmatpush.msra.mxu0 %v405
    %467 = vmatpush.msra.mxu0 %v401
    %468 = vmatpush.msra.mxu0 %v397
    %469 = vmatpush.msra.mxu0 %v393
    %470 = vmatpush.msra.mxu0 %v389
    %471 = vmatpush.msra.mxu0 %v385
    %472 = vmatpush.msra.mxu0 %v381
    %473 = vmatpush.msra.mxu0 %v377
    %474 = vmatpush.msra.mxu0 %v373
    %475 = vmatpush.msra.mxu0 %v369
    %476 = vmatpush.msra.mxu0 %v365
    %477 = vmatpush.msra.mxu0 %v361
    %478 = vmatpush.msra.mxu0 %v357
    %479 = vmatpush.msra.mxu0 %v353
    %480 = vmatpush.msra.mxu0 %v349
    %481 = vmatpush.msra.mxu0 %v345
    %482 = vmatmul.f32.gmra.mxu0 %v333
    %v483 = vpop.f32.mrf.mxu0
    %v484 = vadd.f32 0.0, %v483
    %485 = vdwg.mxu0
    %v486 = vadd.f32 %v338, %v424
    %v487 = vadd.f32 %v339, %v444
    %v488 = vadd.f32 %v340, %v464
    %v489 = vadd.f32 %v341, %v484
    %v490 = vxor.u32 %v486, 2147483648
    %v491 = vmul.f32 %v490, 1.442695
    %v492 = vpow.pop %v491
    %v493 = vadd.f32 %v492, 1.0
    %v494 = vrcp.pop %v493
    %v495 = vmul.f32 %v493, %v494
    %v496 = vsub.f32 1.0, %v495
    %v497 = vmul.f32 %v494, %v496
    %v498 = vadd.f32 %v494, %v497
    %vm499 = vweird.f32 %v493
    %vm500 = vweird.f32 %v494
    %vm501 = vmor %vm499, %vm500
    %v502 = vsel %vm501, %v494, %v498
    %v503 = vand.u32 2147483647, %v493
    %vm504 = vcmp.eq.f32.partialorder %v503, 8.507059e+37
    %v505 = vand.u32 %v493, 2147483648
    %v506 = vor.u32 1.1754944e-38, %v505
    %v507 = vsel %vm504, %v506, %v502
    %v508 = vmul.f32 1.0, %v507
    %v509 = vxor.u32 %v487, 2147483648
    %v510 = vmul.f32 %v509, 1.442695
    %v511 = vpow.pop %v510
    %v512 = vadd.f32 %v511, 1.0
    %v513 = vrcp.pop %v512
    %v514 = vmul.f32 %v512, %v513
    %v515 = vsub.f32 1.0, %v514
    %v516 = vmul.f32 %v513, %v515
    %v517 = vadd.f32 %v513, %v516
    %vm518 = vweird.f32 %v512
    %vm519 = vweird.f32 %v513
    %vm520 = vmor %vm518, %vm519
    %v521 = vsel %vm520, %v513, %v517
    %v522 = vand.u32 2147483647, %v512
    %vm523 = vcmp.eq.f32.partialorder %v522, 8.507059e+37
    %v524 = vand.u32 %v512, 2147483648
    %v525 = vor.u32 1.1754944e-38, %v524
    %v526 = vsel %vm523, %v525, %v521
    %v527 = vmul.f32 1.0, %v526
    %v528 = vtanh.pop %v488
    %v529 = vxor.u32 %v489, 2147483648
    %v530 = vmul.f32 %v529, 1.442695
    %v531 = vpow.pop %v530
    %v532 = vadd.f32 %v531, 1.0
    %v533 = vrcp.pop %v532
    %v534 = vmul.f32 %v532, %v533
    %v535 = vsub.f32 1.0, %v534
    %v536 = vmul.f32 %v533, %v535
    %v537 = vadd.f32 %v533, %v536
    %vm538 = vweird.f32 %v532
    %vm539 = vweird.f32 %v533
    %vm540 = vmor %vm538, %vm539
    %v541 = vsel %vm540, %v533, %v537
    %v542 = vand.u32 2147483647, %v532
    %vm543 = vcmp.eq.f32.partialorder %v542, 8.507059e+37
    %v544 = vand.u32 %v532, 2147483648
    %v545 = vor.u32 1.1754944e-38, %v544
    %v546 = vsel %vm543, %v545, %v541
    %v547 = vmul.f32 1.0, %v546
    %v548 = vmul.f32 %v527, %v334
    %v549 = vmul.f32 %v508, %v528
    %v550 = vadd.f32 %v548, %v549
    %v551 = vtanh.pop %v550
    %v552 = vmul.f32 %v547, %v551
    %553 = vst [vmem:[%s4] sm:$0xff] %v552
    %s554 = smul.u32 1, 4
    %s555 = smul.addr %s554, 8
    %s556 = scalar_lea.vmem [#allocation4], %s555
    %v557 = vld [vmem:[%s556] sm:$0xff]
    %v558 = vld [vmem:[%s556 + $0x8] sm:$0xff]
    %v559 = vld [vmem:[%s556 + $0x10] sm:$0xff]
    %v560 = vld [vmem:[%s556 + $0x18] sm:$0xff]
    %v561 = vld [vmem:[#allocation7] sm:$0xff]
    %v562 = vld [vmem:[#allocation7 + $0x8] sm:$0xff]
    %v563 = vld [vmem:[#allocation7 + $0x10] sm:$0xff]
    %v564 = vld [vmem:[#allocation7 + $0x18] sm:$0xff]
    %v565 = vld [vmem:[#allocation7 + $0x20] sm:$0xff]
    %v566 = vld [vmem:[#allocation7 + $0x28] sm:$0xff]
    %v567 = vld [vmem:[#allocation7 + $0x30] sm:$0xff]
    %v568 = vld [vmem:[#allocation7 + $0x38] sm:$0xff]
    %v569 = vld [vmem:[#allocation7 + $0x40] sm:$0xff]
    %v570 = vld [vmem:[#allocation7 + $0x48] sm:$0xff]
    %v571 = vld [vmem:[#allocation7 + $0x50] sm:$0xff]
    %v572 = vld [vmem:[#allocation7 + $0x58] sm:$0xff]
    %v573 = vld [vmem:[#allocation7 + $0x60] sm:$0xff]
    %v574 = vld [vmem:[#allocation7 + $0x68] sm:$0xff]
    %v575 = vld [vmem:[#allocation7 + $0x70] sm:$0xff]
    %v576 = vld [vmem:[#allocation7 + $0x78] sm:$0xff]
    %v577 = vld [vmem:[#allocation7 + $0x80] sm:$0xff]
    %v578 = vld [vmem:[#allocation7 + $0x88] sm:$0xff]
    %v579 = vld [vmem:[#allocation7 + $0x90] sm:$0xff]
    %v580 = vld [vmem:[#allocation7 + $0x98] sm:$0xff]
    %v581 = vld [vmem:[#allocation7 + $0xa0] sm:$0xff]
    %v582 = vld [vmem:[#allocation7 + $0xa8] sm:$0xff]
    %v583 = vld [vmem:[#allocation7 + $0xb0] sm:$0xff]
    %v584 = vld [vmem:[#allocation7 + $0xb8] sm:$0xff]
    %v585 = vld [vmem:[#allocation7 + $0xc0] sm:$0xff]
    %v586 = vld [vmem:[#allocation7 + $0xc8] sm:$0xff]
    %v587 = vld [vmem:[#allocation7 + $0xd0] sm:$0xff]
    %v588 = vld [vmem:[#allocation7 + $0xd8] sm:$0xff]
    %v589 = vld [vmem:[#allocation7 + $0xe0] sm:$0xff]
    %v590 = vld [vmem:[#allocation7 + $0xe8] sm:$0xff]
    %v591 = vld [vmem:[#allocation7 + $0xf0] sm:$0xff]
    %v592 = vld [vmem:[#allocation7 + $0xf8] sm:$0xff]
    %v593 = vld [vmem:[#allocation7 + $0x100] sm:$0xff]
    %v594 = vld [vmem:[#allocation7 + $0x108] sm:$0xff]
    %v595 = vld [vmem:[#allocation7 + $0x110] sm:$0xff]
    %v596 = vld [vmem:[#allocation7 + $0x118] sm:$0xff]
    %v597 = vld [vmem:[#allocation7 + $0x120] sm:$0xff]
    %v598 = vld [vmem:[#allocation7 + $0x128] sm:$0xff]
    %v599 = vld [vmem:[#allocation7 + $0x130] sm:$0xff]
    %v600 = vld [vmem:[#allocation7 + $0x138] sm:$0xff]
    %v601 = vld [vmem:[#allocation7 + $0x140] sm:$0xff]
    %v602 = vld [vmem:[#allocation7 + $0x148] sm:$0xff]
    %v603 = vld [vmem:[#allocation7 + $0x150] sm:$0xff]
    %v604 = vld [vmem:[#allocation7 + $0x158] sm:$0xff]
    %v605 = vld [vmem:[#allocation7 + $0x160] sm:$0xff]
    %v606 = vld [vmem:[#allocation7 + $0x168] sm:$0xff]
    %v607 = vld [vmem:[#allocation7 + $0x170] sm:$0xff]
    %v608 = vld [vmem:[#allocation7 + $0x178] sm:$0xff]
    %v609 = vld [vmem:[#allocation7 + $0x180] sm:$0xff]
    %v610 = vld [vmem:[#allocation7 + $0x188] sm:$0xff]
    %v611 = vld [vmem:[#allocation7 + $0x190] sm:$0xff]
    %v612 = vld [vmem:[#allocation7 + $0x198] sm:$0xff]
    %v613 = vld [vmem:[#allocation7 + $0x1a0] sm:$0xff]
    %v614 = vld [vmem:[#allocation7 + $0x1a8] sm:$0xff]
    %v615 = vld [vmem:[#allocation7 + $0x1b0] sm:$0xff]
    %v616 = vld [vmem:[#allocation7 + $0x1b8] sm:$0xff]
    %v617 = vld [vmem:[#allocation7 + $0x1c0] sm:$0xff]
    %v618 = vld [vmem:[#allocation7 + $0x1c8] sm:$0xff]
    %v619 = vld [vmem:[#allocation7 + $0x1d0] sm:$0xff]
    %v620 = vld [vmem:[#allocation7 + $0x1d8] sm:$0xff]
    %v621 = vld [vmem:[#allocation7 + $0x1e0] sm:$0xff]
    %v622 = vld [vmem:[#allocation7 + $0x1e8] sm:$0xff]
    %v623 = vld [vmem:[#allocation7 + $0x1f0] sm:$0xff]
    %v624 = vld [vmem:[#allocation7 + $0x1f8] sm:$0xff]
    %625 = vmatpush.msra.mxu0 %v621
    %626 = vmatpush.msra.mxu0 %v617
    %627 = vmatpush.msra.mxu0 %v613
    %628 = vmatpush.msra.mxu0 %v609
    %629 = vmatpush.msra.mxu0 %v605
    %630 = vmatpush.msra.mxu0 %v601
    %631 = vmatpush.msra.mxu0 %v597
    %632 = vmatpush.msra.mxu0 %v593
    %633 = vmatpush.msra.mxu0 %v589
    %634 = vmatpush.msra.mxu0 %v585
    %635 = vmatpush.msra.mxu0 %v581
    %636 = vmatpush.msra.mxu0 %v577
    %637 = vmatpush.msra.mxu0 %v573
    %638 = vmatpush.msra.mxu0 %v569
    %639 = vmatpush.msra.mxu0 %v565
    %640 = vmatpush.msra.mxu0 %v561
    %641 = vmatmul.f32.gmra.mxu0 %v552
    %v642 = vpop.f32.mrf.mxu0
    %v643 = vadd.f32 0.0, %v642
    %644 = vdwg.mxu0
    %645 = vmatpush.msra.mxu0 %v622
    %646 = vmatpush.msra.mxu0 %v618
    %647 = vmatpush.msra.mxu0 %v614
    %648 = vmatpush.msra.mxu0 %v610
    %649 = vmatpush.msra.mxu0 %v606
    %650 = vmatpush.msra.mxu0 %v602
    %651 = vmatpush.msra.mxu0 %v598
    %652 = vmatpush.msra.mxu0 %v594
    %653 = vmatpush.msra.mxu0 %v590
    %654 = vmatpush.msra.mxu0 %v586
    %655 = vmatpush.msra.mxu0 %v582
    %656 = vmatpush.msra.mxu0 %v578
    %657 = vmatpush.msra.mxu0 %v574
    %658 = vmatpush.msra.mxu0 %v570
    %659 = vmatpush.msra.mxu0 %v566
    %660 = vmatpush.msra.mxu0 %v562
    %661 = vmatmul.f32.gmra.mxu0 %v552
    %v662 = vpop.f32.mrf.mxu0
    %v663 = vadd.f32 0.0, %v662
    %664 = vdwg.mxu0
    %665 = vmatpush.msra.mxu0 %v623
    %666 = vmatpush.msra.mxu0 %v619
    %667 = vmatpush.msra.mxu0 %v615
    %668 = vmatpush.msra.mxu0 %v611
    %669 = vmatpush.msra.mxu0 %v607
    %670 = vmatpush.msra.mxu0 %v603
    %671 = vmatpush.msra.mxu0 %v599
    %672 = vmatpush.msra.mxu0 %v595
    %673 = vmatpush.msra.mxu0 %v591
    %674 = vmatpush.msra.mxu0 %v587
    %675 = vmatpush.msra.mxu0 %v583
    %676 = vmatpush.msra.mxu0 %v579
    %677 = vmatpush.msra.mxu0 %v575
    %678 = vmatpush.msra.mxu0 %v571
    %679 = vmatpush.msra.mxu0 %v567
    %680 = vmatpush.msra.mxu0 %v563
    %681 = vmatmul.f32.gmra.mxu0 %v552
    %v682 = vpop.f32.mrf.mxu0
    %v683 = vadd.f32 0.0, %v682
    %684 = vdwg.mxu0
    %685 = vmatpush.msra.mxu0 %v624
    %686 = vmatpush.msra.mxu0 %v620
    %687 = vmatpush.msra.mxu0 %v616
    %688 = vmatpush.msra.mxu0 %v612
    %689 = vmatpush.msra.mxu0 %v608
    %690 = vmatpush.msra.mxu0 %v604
    %691 = vmatpush.msra.mxu0 %v600
    %692 = vmatpush.msra.mxu0 %v596
    %693 = vmatpush.msra.mxu0 %v592
    %694 = vmatpush.msra.mxu0 %v588
    %695 = vmatpush.msra.mxu0 %v584
    %696 = vmatpush.msra.mxu0 %v580
    %697 = vmatpush.msra.mxu0 %v576
    %698 = vmatpush.msra.mxu0 %v572
    %699 = vmatpush.msra.mxu0 %v568
    %700 = vmatpush.msra.mxu0 %v564
    %701 = vmatmul.f32.gmra.mxu0 %v552
    %v702 = vpop.f32.mrf.mxu0
    %v703 = vadd.f32 0.0, %v702
    %704 = vdwg.mxu0
    %v705 = vadd.f32 %v557, %v643
    %v706 = vadd.f32 %v558, %v663
    %v707 = vadd.f32 %v559, %v683
    %v708 = vadd.f32 %v560, %v703
    %v709 = vxor.u32 %v705, 2147483648
    %v710 = vmul.f32 %v709, 1.442695
    %v711 = vpow.pop %v710
    %v712 = vadd.f32 %v711, 1.0
    %v713 = vrcp.pop %v712
    %v714 = vmul.f32 %v712, %v713
    %v715 = vsub.f32 1.0, %v714
    %v716 = vmul.f32 %v713, %v715
    %v717 = vadd.f32 %v713, %v716
    %vm718 = vweird.f32 %v712
    %vm719 = vweird.f32 %v713
    %vm720 = vmor %vm718, %vm719
    %v721 = vsel %vm720, %v713, %v717
    %v722 = vand.u32 2147483647, %v712
    %vm723 = vcmp.eq.f32.partialorder %v722, 8.507059e+37
    %v724 = vand.u32 %v712, 2147483648
    %v725 = vor.u32 1.1754944e-38, %v724
    %v726 = vsel %vm723, %v725, %v721
    %v727 = vmul.f32 1.0, %v726
    %v728 = vxor.u32 %v706, 2147483648
    %v729 = vmul.f32 %v728, 1.442695
    %v730 = vpow.pop %v729
    %v731 = vadd.f32 %v730, 1.0
    %v732 = vrcp.pop %v731
    %v733 = vmul.f32 %v731, %v732
    %v734 = vsub.f32 1.0, %v733
    %v735 = vmul.f32 %v732, %v734
    %v736 = vadd.f32 %v732, %v735
    %vm737 = vweird.f32 %v731
    %vm738 = vweird.f32 %v732
    %vm739 = vmor %vm737, %vm738
    %v740 = vsel %vm739, %v732, %v736
    %v741 = vand.u32 2147483647, %v731
    %vm742 = vcmp.eq.f32.partialorder %v741, 8.507059e+37
    %v743 = vand.u32 %v731, 2147483648
    %v744 = vor.u32 1.1754944e-38, %v743
    %v745 = vsel %vm742, %v744, %v740
    %v746 = vmul.f32 1.0, %v745
    %v747 = vtanh.pop %v707
    %v748 = vxor.u32 %v708, 2147483648
    %v749 = vmul.f32 %v748, 1.442695
    %v750 = vpow.pop %v749
    %v751 = vadd.f32 %v750, 1.0
    %v752 = vrcp.pop %v751
    %v753 = vmul.f32 %v751, %v752
    %v754 = vsub.f32 1.0, %v753
    %v755 = vmul.f32 %v752, %v754
    %v756 = vadd.f32 %v752, %v755
    %vm757 = vweird.f32 %v751
    %vm758 = vweird.f32 %v752
    %vm759 = vmor %vm757, %vm758
    %v760 = vsel %vm759, %v752, %v756
    %v761 = vand.u32 2147483647, %v751
    %vm762 = vcmp.eq.f32.partialorder %v761, 8.507059e+37
    %v763 = vand.u32 %v751, 2147483648
    %v764 = vor.u32 1.1754944e-38, %v763
    %v765 = vsel %vm762, %v764, %v760
    %v766 = vmul.f32 1.0, %v765
    %v767 = vmul.f32 %v746, %v550
    %v768 = vmul.f32 %v727, %v747
    %v769 = vadd.f32 %v767, %v768
    %v770 = vtanh.pop %v769
    %v771 = vmul.f32 %v766, %v770
    %s772 = scalar_lea.vmem %s4, 8
    %773 = vst [vmem:[%s772] sm:$0xff] %v771
    %s774 = smul.u32 2, 4
    %s775 = smul.addr %s774, 8
    %s776 = scalar_lea.vmem [#allocation4], %s775
    %v777 = vld [vmem:[%s776] sm:$0xff]
    %v778 = vld [vmem:[%s776 + $0x8] sm:$0xff]
    %v779 = vld [vmem:[%s776 + $0x10] sm:$0xff]
    %v780 = vld [vmem:[%s776 + $0x18] sm:$0xff]
    %v781 = vld [vmem:[#allocation7] sm:$0xff]
    %v782 = vld [vmem:[#allocation7 + $0x8] sm:$0xff]
    %v783 = vld [vmem:[#allocation7 + $0x10] sm:$0xff]
    %v784 = vld [vmem:[#allocation7 + $0x18] sm:$0xff]
    %v785 = vld [vmem:[#allocation7 + $0x20] sm:$0xff]
    %v786 = vld [vmem:[#allocation7 + $0x28] sm:$0xff]
    %v787 = vld [vmem:[#allocation7 + $0x30] sm:$0xff]
    %v788 = vld [vmem:[#allocation7 + $0x38] sm:$0xff]
    %v789 = vld [vmem:[#allocation7 + $0x40] sm:$0xff]
    %v790 = vld [vmem:[#allocation7 + $0x48] sm:$0xff]
    %v791 = vld [vmem:[#allocation7 + $0x50] sm:$0xff]
    %v792 = vld [vmem:[#allocation7 + $0x58] sm:$0xff]
    %v793 = vld [vmem:[#allocation7 + $0x60] sm:$0xff]
    %v794 = vld [vmem:[#allocation7 + $0x68] sm:$0xff]
    %v795 = vld [vmem:[#allocation7 + $0x70] sm:$0xff]
    %v796 = vld [vmem:[#allocation7 + $0x78] sm:$0xff]
    %v797 = vld [vmem:[#allocation7 + $0x80] sm:$0xff]
    %v798 = vld [vmem:[#allocation7 + $0x88] sm:$0xff]
    %v799 = vld [vmem:[#allocation7 + $0x90] sm:$0xff]
    %v800 = vld [vmem:[#allocation7 + $0x98] sm:$0xff]
    %v801 = vld [vmem:[#allocation7 + $0xa0] sm:$0xff]
    %v802 = vld [vmem:[#allocation7 + $0xa8] sm:$0xff]
    %v803 = vld [vmem:[#allocation7 + $0xb0] sm:$0xff]
    %v804 = vld [vmem:[#allocation7 + $0xb8] sm:$0xff]
    %v805 = vld [vmem:[#allocation7 + $0xc0] sm:$0xff]
    %v806 = vld [vmem:[#allocation7 + $0xc8] sm:$0xff]
    %v807 = vld [vmem:[#allocation7 + $0xd0] sm:$0xff]
    %v808 = vld [vmem:[#allocation7 + $0xd8] sm:$0xff]
    %v809 = vld [vmem:[#allocation7 + $0xe0] sm:$0xff]
    %v810 = vld [vmem:[#allocation7 + $0xe8] sm:$0xff]
    %v811 = vld [vmem:[#allocation7 + $0xf0] sm:$0xff]
    %v812 = vld [vmem:[#allocation7 + $0xf8] sm:$0xff]
    %v813 = vld [vmem:[#allocation7 + $0x100] sm:$0xff]
    %v814 = vld [vmem:[#allocation7 + $0x108] sm:$0xff]
    %v815 = vld [vmem:[#allocation7 + $0x110] sm:$0xff]
    %v816 = vld [vmem:[#allocation7 + $0x118] sm:$0xff]
    %v817 = vld [vmem:[#allocation7 + $0x120] sm:$0xff]
    %v818 = vld [vmem:[#allocation7 + $0x128] sm:$0xff]
    %v819 = vld [vmem:[#allocation7 + $0x130] sm:$0xff]
    %v820 = vld [vmem:[#allocation7 + $0x138] sm:$0xff]
    %v821 = vld [vmem:[#allocation7 + $0x140] sm:$0xff]
    %v822 = vld [vmem:[#allocation7 + $0x148] sm:$0xff]
    %v823 = vld [vmem:[#allocation7 + $0x150] sm:$0xff]
    %v824 = vld [vmem:[#allocation7 + $0x158] sm:$0xff]
    %v825 = vld [vmem:[#allocation7 + $0x160] sm:$0xff]
    %v826 = vld [vmem:[#allocation7 + $0x168] sm:$0xff]
    %v827 = vld [vmem:[#allocation7 + $0x170] sm:$0xff]
    %v828 = vld [vmem:[#allocation7 + $0x178] sm:$0xff]
    %v829 = vld [vmem:[#allocation7 + $0x180] sm:$0xff]
    %v830 = vld [vmem:[#allocation7 + $0x188] sm:$0xff]
    %v831 = vld [vmem:[#allocation7 + $0x190] sm:$0xff]
    %v832 = vld [vmem:[#allocation7 + $0x198] sm:$0xff]
    %v833 = vld [vmem:[#allocation7 + $0x1a0] sm:$0xff]
    %v834 = vld [vmem:[#allocation7 + $0x1a8] sm:$0xff]
    %v835 = vld [vmem:[#allocation7 + $0x1b0] sm:$0xff]
    %v836 = vld [vmem:[#allocation7 + $0x1b8] sm:$0xff]
    %v837 = vld [vmem:[#allocation7 + $0x1c0] sm:$0xff]
    %v838 = vld [vmem:[#allocation7 + $0x1c8] sm:$0xff]
    %v839 = vld [vmem:[#allocation7 + $0x1d0] sm:$0xff]
    %v840 = vld [vmem:[#allocation7 + $0x1d8] sm:$0xff]
    %v841 = vld [vmem:[#allocation7 + $0x1e0] sm:$0xff]
    %v842 = vld [vmem:[#allocation7 + $0x1e8] sm:$0xff]
    %v843 = vld [vmem:[#allocation7 + $0x1f0] sm:$0xff]
    %v844 = vld [vmem:[#allocation7 + $0x1f8] sm:$0xff]
    %845 = vmatpush.msra.mxu0 %v841
    %846 = vmatpush.msra.mxu0 %v837
    %847 = vmatpush.msra.mxu0 %v833
    %848 = vmatpush.msra.mxu0 %v829
    %849 = vmatpush.msra.mxu0 %v825
    %850 = vmatpush.msra.mxu0 %v821
    %851 = vmatpush.msra.mxu0 %v817
    %852 = vmatpush.msra.mxu0 %v813
    %853 = vmatpush.msra.mxu0 %v809
    %854 = vmatpush.msra.mxu0 %v805
    %855 = vmatpush.msra.mxu0 %v801
    %856 = vmatpush.msra.mxu0 %v797
    %857 = vmatpush.msra.mxu0 %v793
    %858 = vmatpush.msra.mxu0 %v789
    %859 = vmatpush.msra.mxu0 %v785
    %860 = vmatpush.msra.mxu0 %v781
    %861 = vmatmul.f32.gmra.mxu0 %v771
    %v862 = vpop.f32.mrf.mxu0
    %v863 = vadd.f32 0.0, %v862
    %864 = vdwg.mxu0
    %865 = vmatpush.msra.mxu0 %v842
    %866 = vmatpush.msra.mxu0 %v838
    %867 = vmatpush.msra.mxu0 %v834
    %868 = vmatpush.msra.mxu0 %v830
    %869 = vmatpush.msra.mxu0 %v826
    %870 = vmatpush.msra.mxu0 %v822
    %871 = vmatpush.msra.mxu0 %v818
    %872 = vmatpush.msra.mxu0 %v814
    %873 = vmatpush.msra.mxu0 %v810
    %874 = vmatpush.msra.mxu0 %v806
    %875 = vmatpush.msra.mxu0 %v802
    %876 = vmatpush.msra.mxu0 %v798
    %877 = vmatpush.msra.mxu0 %v794
    %878 = vmatpush.msra.mxu0 %v790
    %879 = vmatpush.msra.mxu0 %v786
    %880 = vmatpush.msra.mxu0 %v782
    %881 = vmatmul.f32.gmra.mxu0 %v771
    %v882 = vpop.f32.mrf.mxu0
    %v883 = vadd.f32 0.0, %v882
    %884 = vdwg.mxu0
    %885 = vmatpush.msra.mxu0 %v843
    %886 = vmatpush.msra.mxu0 %v839
    %887 = vmatpush.msra.mxu0 %v835
    %888 = vmatpush.msra.mxu0 %v831
    %889 = vmatpush.msra.mxu0 %v827
    %890 = vmatpush.msra.mxu0 %v823
    %891 = vmatpush.msra.mxu0 %v819
    %892 = vmatpush.msra.mxu0 %v815
    %893 = vmatpush.msra.mxu0 %v811
    %894 = vmatpush.msra.mxu0 %v807
    %895 = vmatpush.msra.mxu0 %v803
    %896 = vmatpush.msra.mxu0 %v799
    %897 = vmatpush.msra.mxu0 %v795
    %898 = vmatpush.msra.mxu0 %v791
    %899 = vmatpush.msra.mxu0 %v787
    %900 = vmatpush.msra.mxu0 %v783
    %901 = vmatmul.f32.gmra.mxu0 %v771
    %v902 = vpop.f32.mrf.mxu0
    %v903 = vadd.f32 0.0, %v902
    %904 = vdwg.mxu0
    %905 = vmatpush.msra.mxu0 %v844
    %906 = vmatpush.msra.mxu0 %v840
    %907 = vmatpush.msra.mxu0 %v836
    %908 = vmatpush.msra.mxu0 %v832
    %909 = vmatpush.msra.mxu0 %v828
    %910 = vmatpush.msra.mxu0 %v824
    %911 = vmatpush.msra.mxu0 %v820
    %912 = vmatpush.msra.mxu0 %v816
    %913 = vmatpush.msra.mxu0 %v812
    %914 = vmatpush.msra.mxu0 %v808
    %915 = vmatpush.msra.mxu0 %v804
    %916 = vmatpush.msra.mxu0 %v800
    %917 = vmatpush.msra.mxu0 %v796
    %918 = vmatpush.msra.mxu0 %v792
    %919 = vmatpush.msra.mxu0 %v788
    %920 = vmatpush.msra.mxu0 %v784
    %921 = vmatmul.f32.gmra.mxu0 %v771
    %v922 = vpop.f32.mrf.mxu0
    %v923 = vadd.f32 0.0, %v922
    %924 = vdwg.mxu0
    %v925 = vadd.f32 %v777, %v863
    %v926 = vadd.f32 %v778, %v883
    %v927 = vadd.f32 %v779, %v903
    %v928 = vadd.f32 %v780, %v923
    %v929 = vxor.u32 %v925, 2147483648
    %v930 = vmul.f32 %v929, 1.442695
    %v931 = vpow.pop %v930
    %v932 = vadd.f32 %v931, 1.0
    %v933 = vrcp.pop %v932
    %v934 = vmul.f32 %v932, %v933
    %v935 = vsub.f32 1.0, %v934
    %v936 = vmul.f32 %v933, %v935
    %v937 = vadd.f32 %v933, %v936
    %vm938 = vweird.f32 %v932
    %vm939 = vweird.f32 %v933
    %vm940 = vmor %vm938, %vm939
    %v941 = vsel %vm940, %v933, %v937
    %v942 = vand.u32 2147483647, %v932
    %vm943 = vcmp.eq.f32.partialorder %v942, 8.507059e+37
    %v944 = vand.u32 %v932, 2147483648
    %v945 = vor.u32 1.1754944e-38, %v944
    %v946 = vsel %vm943, %v945, %v941
    %v947 = vmul.f32 1.0, %v946
    %v948 = vxor.u32 %v926, 2147483648
    %v949 = vmul.f32 %v948, 1.442695
    %v950 = vpow.pop %v949
    %v951 = vadd.f32 %v950, 1.0
    %v952 = vrcp.pop %v951
    %v953 = vmul.f32 %v951, %v952
    %v954 = vsub.f32 1.0, %v953
    %v955 = vmul.f32 %v952, %v954
    %v956 = vadd.f32 %v952, %v955
    %vm957 = vweird.f32 %v951
    %vm958 = vweird.f32 %v952
    %vm959 = vmor %vm957, %vm958
    %v960 = vsel %vm959, %v952, %v956
    %v961 = vand.u32 2147483647, %v951
    %vm962 = vcmp.eq.f32.partialorder %v961, 8.507059e+37
    %v963 = vand.u32 %v951, 2147483648
    %v964 = vor.u32 1.1754944e-38, %v963
    %v965 = vsel %vm962, %v964, %v960
    %v966 = vmul.f32 1.0, %v965
    %v967 = vtanh.pop %v927
    %v968 = vxor.u32 %v928, 2147483648
    %v969 = vmul.f32 %v968, 1.442695
    %v970 = vpow.pop %v969
    %v971 = vadd.f32 %v970, 1.0
    %v972 = vrcp.pop %v971
    %v973 = vmul.f32 %v971, %v972
    %v974 = vsub.f32 1.0, %v973
    %v975 = vmul.f32 %v972, %v974
    %v976 = vadd.f32 %v972, %v975
    %vm977 = vweird.f32 %v971
    %vm978 = vweird.f32 %v972
    %vm979 = vmor %vm977, %vm978
    %v980 = vsel %vm979, %v972, %v976
    %v981 = vand.u32 2147483647, %v971
    %vm982 = vcmp.eq.f32.partialorder %v981, 8.507059e+37
    %v983 = vand.u32 %v971, 2147483648
    %v984 = vor.u32 1.1754944e-38, %v983
    %v985 = vsel %vm982, %v984, %v980
    %v986 = vmul.f32 1.0, %v985
    %v987 = vmul.f32 %v966, %v769
    %v988 = vmul.f32 %v947, %v967
    %v989 = vadd.f32 %v987, %v988
    %v990 = vtanh.pop %v989
    %v991 = vmul.f32 %v986, %v990
    %s992 = scalar_lea.vmem %s4, 16
    %993 = vst [vmem:[%s992] sm:$0xff] %v991
    %s994 = smul.u32 3, 4
    %s995 = smul.addr %s994, 8
    %s996 = scalar_lea.vmem [#allocation4], %s995
    %v997 = vld [vmem:[%s996] sm:$0xff]
    %v998 = vld [vmem:[%s996 + $0x8] sm:$0xff]
    %v999 = vld [vmem:[%s996 + $0x10] sm:$0xff]
    %v1000 = vld [vmem:[%s996 + $0x18] sm:$0xff]
    %v1001 = vld [vmem:[#allocation7] sm:$0xff]
    %v1002 = vld [vmem:[#allocation7 + $0x8] sm:$0xff]
    %v1003 = vld [vmem:[#allocation7 + $0x10] sm:$0xff]
    %v1004 = vld [vmem:[#allocation7 + $0x18] sm:$0xff]
    %v1005 = vld [vmem:[#allocation7 + $0x20] sm:$0xff]
    %v1006 = vld [vmem:[#allocation7 + $0x28] sm:$0xff]
    %v1007 = vld [vmem:[#allocation7 + $0x30] sm:$0xff]
    %v1008 = vld [vmem:[#allocation7 + $0x38] sm:$0xff]
    %v1009 = vld [vmem:[#allocation7 + $0x40] sm:$0xff]
    %v1010 = vld [vmem:[#allocation7 + $0x48] sm:$0xff]
    %v1011 = vld [vmem:[#allocation7 + $0x50] sm:$0xff]
    %v1012 = vld [vmem:[#allocation7 + $0x58] sm:$0xff]
    %v1013 = vld [vmem:[#allocation7 + $0x60] sm:$0xff]
    %v1014 = vld [vmem:[#allocation7 + $0x68] sm:$0xff]
    %v1015 = vld [vmem:[#allocation7 + $0x70] sm:$0xff]
    %v1016 = vld [vmem:[#allocation7 + $0x78] sm:$0xff]
    %v1017 = vld [vmem:[#allocation7 + $0x80] sm:$0xff]
    %v1018 = vld [vmem:[#allocation7 + $0x88] sm:$0xff]
    %v1019 = vld [vmem:[#allocation7 + $0x90] sm:$0xff]
    %v1020 = vld [vmem:[#allocation7 + $0x98] sm:$0xff]
    %v1021 = vld [vmem:[#allocation7 + $0xa0] sm:$0xff]
    %v1022 = vld [vmem:[#allocation7 + $0xa8] sm:$0xff]
    %v1023 = vld [vmem:[#allocation7 + $0xb0] sm:$0xff]
    %v1024 = vld [vmem:[#allocation7 + $0xb8] sm:$0xff]
    %v1025 = vld [vmem:[#allocation7 + $0xc0] sm:$0xff]
    %v1026 = vld [vmem:[#allocation7 + $0xc8] sm:$0xff]
    %v1027 = vld [vmem:[#allocation7 + $0xd0] sm:$0xff]
    %v1028 = vld [vmem:[#allocation7 + $0xd8] sm:$0xff]
    %v1029 = vld [vmem:[#allocation7 + $0xe0] sm:$0xff]
    %v1030 = vld [vmem:[#allocation7 + $0xe8] sm:$0xff]
    %v1031 = vld [vmem:[#allocation7 + $0xf0] sm:$0xff]
    %v1032 = vld [vmem:[#allocation7 + $0xf8] sm:$0xff]
    %v1033 = vld [vmem:[#allocation7 + $0x100] sm:$0xff]
    %v1034 = vld [vmem:[#allocation7 + $0x108] sm:$0xff]
    %v1035 = vld [vmem:[#allocation7 + $0x110] sm:$0xff]
    %v1036 = vld [vmem:[#allocation7 + $0x118] sm:$0xff]
    %v1037 = vld [vmem:[#allocation7 + $0x120] sm:$0xff]
    %v1038 = vld [vmem:[#allocation7 + $0x128] sm:$0xff]
    %v1039 = vld [vmem:[#allocation7 + $0x130] sm:$0xff]
    %v1040 = vld [vmem:[#allocation7 + $0x138] sm:$0xff]
    %v1041 = vld [vmem:[#allocation7 + $0x140] sm:$0xff]
    %v1042 = vld [vmem:[#allocation7 + $0x148] sm:$0xff]
    %v1043 = vld [vmem:[#allocation7 + $0x150] sm:$0xff]
    %v1044 = vld [vmem:[#allocation7 + $0x158] sm:$0xff]
    %v1045 = vld [vmem:[#allocation7 + $0x160] sm:$0xff]
    %v1046 = vld [vmem:[#allocation7 + $0x168] sm:$0xff]
    %v1047 = vld [vmem:[#allocation7 + $0x170] sm:$0xff]
    %v1048 = vld [vmem:[#allocation7 + $0x178] sm:$0xff]
    %v1049 = vld [vmem:[#allocation7 + $0x180] sm:$0xff]
    %v1050 = vld [vmem:[#allocation7 + $0x188] sm:$0xff]
    %v1051 = vld [vmem:[#allocation7 + $0x190] sm:$0xff]
    %v1052 = vld [vmem:[#allocation7 + $0x198] sm:$0xff]
    %v1053 = vld [vmem:[#allocation7 + $0x1a0] sm:$0xff]
    %v1054 = vld [vmem:[#allocation7 + $0x1a8] sm:$0xff]
    %v1055 = vld [vmem:[#allocation7 + $0x1b0] sm:$0xff]
    %v1056 = vld [vmem:[#allocation7 + $0x1b8] sm:$0xff]
    %v1057 = vld [vmem:[#allocation7 + $0x1c0] sm:$0xff]
    %v1058 = vld [vmem:[#allocation7 + $0x1c8] sm:$0xff]
    %v1059 = vld [vmem:[#allocation7 + $0x1d0] sm:$0xff]
    %v1060 = vld [vmem:[#allocation7 + $0x1d8] sm:$0xff]
    %v1061 = vld [vmem:[#allocation7 + $0x1e0] sm:$0xff]
    %v1062 = vld [vmem:[#allocation7 + $0x1e8] sm:$0xff]
    %v1063 = vld [vmem:[#allocation7 + $0x1f0] sm:$0xff]
    %v1064 = vld [vmem:[#allocation7 + $0x1f8] sm:$0xff]
    %1065 = vmatpush.msra.mxu0 %v1061
    %1066 = vmatpush.msra.mxu0 %v1057
    %1067 = vmatpush.msra.mxu0 %v1053
    %1068 = vmatpush.msra.mxu0 %v1049
    %1069 = vmatpush.msra.mxu0 %v1045
    %1070 = vmatpush.msra.mxu0 %v1041
    %1071 = vmatpush.msra.mxu0 %v1037
    %1072 = vmatpush.msra.mxu0 %v1033
    %1073 = vmatpush.msra.mxu0 %v1029
    %1074 = vmatpush.msra.mxu0 %v1025
    %1075 = vmatpush.msra.mxu0 %v1021
    %1076 = vmatpush.msra.mxu0 %v1017
    %1077 = vmatpush.msra.mxu0 %v1013
    %1078 = vmatpush.msra.mxu0 %v1009
    %1079 = vmatpush.msra.mxu0 %v1005
    %1080 = vmatpush.msra.mxu0 %v1001
    %1081 = vmatmul.f32.gmra.mxu0 %v991
    %v1082 = vpop.f32.mrf.mxu0
    %v1083 = vadd.f32 0.0, %v1082
    %1084 = vdwg.mxu0
    %1085 = vmatpush.msra.mxu0 %v1062
    %1086 = vmatpush.msra.mxu0 %v1058
    %1087 = vmatpush.msra.mxu0 %v1054
    %1088 = vmatpush.msra.mxu0 %v1050
    %1089 = vmatpush.msra.mxu0 %v1046
    %1090 = vmatpush.msra.mxu0 %v1042
    %1091 = vmatpush.msra.mxu0 %v1038
    %1092 = vmatpush.msra.mxu0 %v1034
    %1093 = vmatpush.msra.mxu0 %v1030
    %1094 = vmatpush.msra.mxu0 %v1026
    %1095 = vmatpush.msra.mxu0 %v1022
    %1096 = vmatpush.msra.mxu0 %v1018
    %1097 = vmatpush.msra.mxu0 %v1014
    %1098 = vmatpush.msra.mxu0 %v1010
    %1099 = vmatpush.msra.mxu0 %v1006
    %1100 = vmatpush.msra.mxu0 %v1002
    %1101 = vmatmul.f32.gmra.mxu0 %v991
    %v1102 = vpop.f32.mrf.mxu0
    %v1103 = vadd.f32 0.0, %v1102
    %1104 = vdwg.mxu0
    %1105 = vmatpush.msra.mxu0 %v1063
    %1106 = vmatpush.msra.mxu0 %v1059
    %1107 = vmatpush.msra.mxu0 %v1055
    %1108 = vmatpush.msra.mxu0 %v1051
    %1109 = vmatpush.msra.mxu0 %v1047
    %1110 = vmatpush.msra.mxu0 %v1043
    %1111 = vmatpush.msra.mxu0 %v1039
    %1112 = vmatpush.msra.mxu0 %v1035
    %1113 = vmatpush.msra.mxu0 %v1031
    %1114 = vmatpush.msra.mxu0 %v1027
    %1115 = vmatpush.msra.mxu0 %v1023
    %1116 = vmatpush.msra.mxu0 %v1019
    %1117 = vmatpush.msra.mxu0 %v1015
    %1118 = vmatpush.msra.mxu0 %v1011
    %1119 = vmatpush.msra.mxu0 %v1007
    %1120 = vmatpush.msra.mxu0 %v1003
    %1121 = vmatmul.f32.gmra.mxu0 %v991
    %v1122 = vpop.f32.mrf.mxu0
    %v1123 = vadd.f32 0.0, %v1122
    %1124 = vdwg.mxu0
    %1125 = vmatpush.msra.mxu0 %v1064
    %1126 = vmatpush.msra.mxu0 %v1060
    %1127 = vmatpush.msra.mxu0 %v1056
    %1128 = vmatpush.msra.mxu0 %v1052
    %1129 = vmatpush.msra.mxu0 %v1048
    %1130 = vmatpush.msra.mxu0 %v1044
    %1131 = vmatpush.msra.mxu0 %v1040
    %1132 = vmatpush.msra.mxu0 %v1036
    %1133 = vmatpush.msra.mxu0 %v1032
    %1134 = vmatpush.msra.mxu0 %v1028
    %1135 = vmatpush.msra.mxu0 %v1024
    %1136 = vmatpush.msra.mxu0 %v1020
    %1137 = vmatpush.msra.mxu0 %v1016
    %1138 = vmatpush.msra.mxu0 %v1012
    %1139 = vmatpush.msra.mxu0 %v1008
    %1140 = vmatpush.msra.mxu0 %v1004
    %1141 = vmatmul.f32.gmra.mxu0 %v991
    %v1142 = vpop.f32.mrf.mxu0
    %v1143 = vadd.f32 0.0, %v1142
    %1144 = vdwg.mxu0
    %v1145 = vadd.f32 %v997, %v1083
    %v1146 = vadd.f32 %v998, %v1103
    %v1147 = vadd.f32 %v999, %v1123
    %v1148 = vadd.f32 %v1000, %v1143
    %v1149 = vxor.u32 %v1145, 2147483648
    %v1150 = vmul.f32 %v1149, 1.442695
    %v1151 = vpow.pop %v1150
    %v1152 = vadd.f32 %v1151, 1.0
    %v1153 = vrcp.pop %v1152
    %v1154 = vmul.f32 %v1152, %v1153
    %v1155 = vsub.f32 1.0, %v1154
    %v1156 = vmul.f32 %v1153, %v1155
    %v1157 = vadd.f32 %v1153, %v1156
    %vm1158 = vweird.f32 %v1152
    %vm1159 = vweird.f32 %v1153
    %vm1160 = vmor %vm1158, %vm1159
    %v1161 = vsel %vm1160, %v1153, %v1157
    %v1162 = vand.u32 2147483647, %v1152
    %vm1163 = vcmp.eq.f32.partialorder %v1162, 8.507059e+37
    %v1164 = vand.u32 %v1152, 2147483648
    %v1165 = vor.u32 1.1754944e-38, %v1164
    %v1166 = vsel %vm1163, %v1165, %v1161
    %v1167 = vmul.f32 1.0, %v1166
    %v1168 = vxor.u32 %v1146, 2147483648
    %v1169 = vmul.f32 %v1168, 1.442695
    %v1170 = vpow.pop %v1169
    %v1171 = vadd.f32 %v1170, 1.0
    %v1172 = vrcp.pop %v1171
    %v1173 = vmul.f32 %v1171, %v1172
    %v1174 = vsub.f32 1.0, %v1173
    %v1175 = vmul.f32 %v1172, %v1174
    %v1176 = vadd.f32 %v1172, %v1175
    %vm1177 = vweird.f32 %v1171
    %vm1178 = vweird.f32 %v1172
    %vm1179 = vmor %vm1177, %vm1178
    %v1180 = vsel %vm1179, %v1172, %v1176
    %v1181 = vand.u32 2147483647, %v1171
    %vm1182 = vcmp.eq.f32.partialorder %v1181, 8.507059e+37
    %v1183 = vand.u32 %v1171, 2147483648
    %v1184 = vor.u32 1.1754944e-38, %v1183
    %v1185 = vsel %vm1182, %v1184, %v1180
    %v1186 = vmul.f32 1.0, %v1185
    %v1187 = vtanh.pop %v1147
    %v1188 = vxor.u32 %v1148, 2147483648
    %v1189 = vmul.f32 %v1188, 1.442695
    %v1190 = vpow.pop %v1189
    %v1191 = vadd.f32 %v1190, 1.0
    %v1192 = vrcp.pop %v1191
    %v1193 = vmul.f32 %v1191, %v1192
    %v1194 = vsub.f32 1.0, %v1193
    %v1195 = vmul.f32 %v1192, %v1194
    %v1196 = vadd.f32 %v1192, %v1195
    %vm1197 = vweird.f32 %v1191
    %vm1198 = vweird.f32 %v1192
    %vm1199 = vmor %vm1197, %vm1198
    %v1200 = vsel %vm1199, %v1192, %v1196
    %v1201 = vand.u32 2147483647, %v1191
    %vm1202 = vcmp.eq.f32.partialorder %v1201, 8.507059e+37
    %v1203 = vand.u32 %v1191, 2147483648
    %v1204 = vor.u32 1.1754944e-38, %v1203
    %v1205 = vsel %vm1202, %v1204, %v1200
    %v1206 = vmul.f32 1.0, %v1205
    %v1207 = vmul.f32 %v1186, %v989
    %v1208 = vmul.f32 %v1167, %v1187
    %v1209 = vadd.f32 %v1207, %v1208
    %v1210 = vtanh.pop %v1209
    %v1211 = vmul.f32 %v1206, %v1210
    %s1212 = scalar_lea.vmem %s4, 24
    %1213 = vst [vmem:[%s1212] sm:$0xff] %v1211
    %s1214 = smul.u32 4, 4
    %s1215 = smul.addr %s1214, 8
    %s1216 = scalar_lea.vmem [#allocation4], %s1215
    %v1217 = vld [vmem:[%s1216] sm:$0xff]
    %v1218 = vld [vmem:[%s1216 + $0x8] sm:$0xff]
    %v1219 = vld [vmem:[%s1216 + $0x10] sm:$0xff]
    %v1220 = vld [vmem:[%s1216 + $0x18] sm:$0xff]
    %v1221 = vld [vmem:[#allocation7] sm:$0xff]
    %v1222 = vld [vmem:[#allocation7 + $0x8] sm:$0xff]
    %v1223 = vld [vmem:[#allocation7 + $0x10] sm:$0xff]
    %v1224 = vld [vmem:[#allocation7 + $0x18] sm:$0xff]
    %v1225 = vld [vmem:[#allocation7 + $0x20] sm:$0xff]
    %v1226 = vld [vmem:[#allocation7 + $0x28] sm:$0xff]
    %v1227 = vld [vmem:[#allocation7 + $0x30] sm:$0xff]
    %v1228 = vld [vmem:[#allocation7 + $0x38] sm:$0xff]
    %v1229 = vld [vmem:[#allocation7 + $0x40] sm:$0xff]
    %v1230 = vld [vmem:[#allocation7 + $0x48] sm:$0xff]
    %v1231 = vld [vmem:[#allocation7 + $0x50] sm:$0xff]
    %v1232 = vld [vmem:[#allocation7 + $0x58] sm:$0xff]
    %v1233 = vld [vmem:[#allocation7 + $0x60] sm:$0xff]
    %v1234 = vld [vmem:[#allocation7 + $0x68] sm:$0xff]
    %v1235 = vld [vmem:[#allocation7 + $0x70] sm:$0xff]
    %v1236 = vld [vmem:[#allocation7 + $0x78] sm:$0xff]
    %v1237 = vld [vmem:[#allocation7 + $0x80] sm:$0xff]
    %v1238 = vld [vmem:[#allocation7 + $0x88] sm:$0xff]
    %v1239 = vld [vmem:[#allocation7 + $0x90] sm:$0xff]
    %v1240 = vld [vmem:[#allocation7 + $0x98] sm:$0xff]
    %v1241 = vld [vmem:[#allocation7 + $0xa0] sm:$0xff]
    %v1242 = vld [vmem:[#allocation7 + $0xa8] sm:$0xff]
    %v1243 = vld [vmem:[#allocation7 + $0xb0] sm:$0xff]
    %v1244 = vld [vmem:[#allocation7 + $0xb8] sm:$0xff]
    %v1245 = vld [vmem:[#allocation7 + $0xc0] sm:$0xff]
    %v1246 = vld [vmem:[#allocation7 + $0xc8] sm:$0xff]
    %v1247 = vld [vmem:[#allocation7 + $0xd0] sm:$0xff]
    %v1248 = vld [vmem:[#allocation7 + $0xd8] sm:$0xff]
    %v1249 = vld [vmem:[#allocation7 + $0xe0] sm:$0xff]
    %v1250 = vld [vmem:[#allocation7 + $0xe8] sm:$0xff]
    %v1251 = vld [vmem:[#allocation7 + $0xf0] sm:$0xff]
    %v1252 = vld [vmem:[#allocation7 + $0xf8] sm:$0xff]
    %v1253 = vld [vmem:[#allocation7 + $0x100] sm:$0xff]
    %v1254 = vld [vmem:[#allocation7 + $0x108] sm:$0xff]
    %v1255 = vld [vmem:[#allocation7 + $0x110] sm:$0xff]
    %v1256 = vld [vmem:[#allocation7 + $0x118] sm:$0xff]
    %v1257 = vld [vmem:[#allocation7 + $0x120] sm:$0xff]
    %v1258 = vld [vmem:[#allocation7 + $0x128] sm:$0xff]
    %v1259 = vld [vmem:[#allocation7 + $0x130] sm:$0xff]
    %v1260 = vld [vmem:[#allocation7 + $0x138] sm:$0xff]
    %v1261 = vld [vmem:[#allocation7 + $0x140] sm:$0xff]
    %v1262 = vld [vmem:[#allocation7 + $0x148] sm:$0xff]
    %v1263 = vld [vmem:[#allocation7 + $0x150] sm:$0xff]
    %v1264 = vld [vmem:[#allocation7 + $0x158] sm:$0xff]
    %v1265 = vld [vmem:[#allocation7 + $0x160] sm:$0xff]
    %v1266 = vld [vmem:[#allocation7 + $0x168] sm:$0xff]
    %v1267 = vld [vmem:[#allocation7 + $0x170] sm:$0xff]
    %v1268 = vld [vmem:[#allocation7 + $0x178] sm:$0xff]
    %v1269 = vld [vmem:[#allocation7 + $0x180] sm:$0xff]
    %v1270 = vld [vmem:[#allocation7 + $0x188] sm:$0xff]
    %v1271 = vld [vmem:[#allocation7 + $0x190] sm:$0xff]
    %v1272 = vld [vmem:[#allocation7 + $0x198] sm:$0xff]
    %v1273 = vld [vmem:[#allocation7 + $0x1a0] sm:$0xff]
    %v1274 = vld [vmem:[#allocation7 + $0x1a8] sm:$0xff]
    %v1275 = vld [vmem:[#allocation7 + $0x1b0] sm:$0xff]
    %v1276 = vld [vmem:[#allocation7 + $0x1b8] sm:$0xff]
    %v1277 = vld [vmem:[#allocation7 + $0x1c0] sm:$0xff]
    %v1278 = vld [vmem:[#allocation7 + $0x1c8] sm:$0xff]
    %v1279 = vld [vmem:[#allocation7 + $0x1d0] sm:$0xff]
    %v1280 = vld [vmem:[#allocation7 + $0x1d8] sm:$0xff]
    %v1281 = vld [vmem:[#allocation7 + $0x1e0] sm:$0xff]
    %v1282 = vld [vmem:[#allocation7 + $0x1e8] sm:$0xff]
    %v1283 = vld [vmem:[#allocation7 + $0x1f0] sm:$0xff]
    %v1284 = vld [vmem:[#allocation7 + $0x1f8] sm:$0xff]
    %1285 = vmatpush.msra.mxu0 %v1281
    %1286 = vmatpush.msra.mxu0 %v1277
    %1287 = vmatpush.msra.mxu0 %v1273
    %1288 = vmatpush.msra.mxu0 %v1269
    %1289 = vmatpush.msra.mxu0 %v1265
    %1290 = vmatpush.msra.mxu0 %v1261
    %1291 = vmatpush.msra.mxu0 %v1257
    %1292 = vmatpush.msra.mxu0 %v1253
    %1293 = vmatpush.msra.mxu0 %v1249
    %1294 = vmatpush.msra.mxu0 %v1245
    %1295 = vmatpush.msra.mxu0 %v1241
    %1296 = vmatpush.msra.mxu0 %v1237
    %1297 = vmatpush.msra.mxu0 %v1233
    %1298 = vmatpush.msra.mxu0 %v1229
    %1299 = vmatpush.msra.mxu0 %v1225
    %1300 = vmatpush.msra.mxu0 %v1221
    %1301 = vmatmul.f32.gmra.mxu0 %v1211
    %v1302 = vpop.f32.mrf.mxu0
    %v1303 = vadd.f32 0.0, %v1302
    %1304 = vdwg.mxu0
    %1305 = vmatpush.msra.mxu0 %v1282
    %1306 = vmatpush.msra.mxu0 %v1278
    %1307 = vmatpush.msra.mxu0 %v1274
    %1308 = vmatpush.msra.mxu0 %v1270
    %1309 = vmatpush.msra.mxu0 %v1266
    %1310 = vmatpush.msra.mxu0 %v1262
    %1311 = vmatpush.msra.mxu0 %v1258
    %1312 = vmatpush.msra.mxu0 %v1254
    %1313 = vmatpush.msra.mxu0 %v1250
    %1314 = vmatpush.msra.mxu0 %v1246
    %1315 = vmatpush.msra.mxu0 %v1242
    %1316 = vmatpush.msra.mxu0 %v1238
    %1317 = vmatpush.msra.mxu0 %v1234
    %1318 = vmatpush.msra.mxu0 %v1230
    %1319 = vmatpush.msra.mxu0 %v1226
    %1320 = vmatpush.msra.mxu0 %v1222
    %1321 = vmatmul.f32.gmra.mxu0 %v1211
    %v1322 = vpop.f32.mrf.mxu0
    %v1323 = vadd.f32 0.0, %v1322
    %1324 = vdwg.mxu0
    %1325 = vmatpush.msra.mxu0 %v1283
    %1326 = vmatpush.msra.mxu0 %v1279
    %1327 = vmatpush.msra.mxu0 %v1275
    %1328 = vmatpush.msra.mxu0 %v1271
    %1329 = vmatpush.msra.mxu0 %v1267
    %1330 = vmatpush.msra.mxu0 %v1263
    %1331 = vmatpush.msra.mxu0 %v1259
    %1332 = vmatpush.msra.mxu0 %v1255
    %1333 = vmatpush.msra.mxu0 %v1251
    %1334 = vmatpush.msra.mxu0 %v1247
    %1335 = vmatpush.msra.mxu0 %v1243
    %1336 = vmatpush.msra.mxu0 %v1239
    %1337 = vmatpush.msra.mxu0 %v1235
    %1338 = vmatpush.msra.mxu0 %v1231
    %1339 = vmatpush.msra.mxu0 %v1227
    %1340 = vmatpush.msra.mxu0 %v1223
    %1341 = vmatmul.f32.gmra.mxu0 %v1211
    %v1342 = vpop.f32.mrf.mxu0
    %v1343 = vadd.f32 0.0, %v1342
    %1344 = vdwg.mxu0
    %1345 = vmatpush.msra.mxu0 %v1284
    %1346 = vmatpush.msra.mxu0 %v1280
    %1347 = vmatpush.msra.mxu0 %v1276
    %1348 = vmatpush.msra.mxu0 %v1272
    %1349 = vmatpush.msra.mxu0 %v1268
    %1350 = vmatpush.msra.mxu0 %v1264
    %1351 = vmatpush.msra.mxu0 %v1260
    %1352 = vmatpush.msra.mxu0 %v1256
    %1353 = vmatpush.msra.mxu0 %v1252
    %1354 = vmatpush.msra.mxu0 %v1248
    %1355 = vmatpush.msra.mxu0 %v1244
    %1356 = vmatpush.msra.mxu0 %v1240
    %1357 = vmatpush.msra.mxu0 %v1236
    %1358 = vmatpush.msra.mxu0 %v1232
    %1359 = vmatpush.msra.mxu0 %v1228
    %1360 = vmatpush.msra.mxu0 %v1224
    %1361 = vmatmul.f32.gmra.mxu0 %v1211
    %v1362 = vpop.f32.mrf.mxu0
    %v1363 = vadd.f32 0.0, %v1362
    %1364 = vdwg.mxu0
    %v1365 = vadd.f32 %v1217, %v1303
    %v1366 = vadd.f32 %v1218, %v1323
    %v1367 = vadd.f32 %v1219, %v1343
    %v1368 = vadd.f32 %v1220, %v1363
    %v1369 = vxor.u32 %v1365, 2147483648
    %v1370 = vmul.f32 %v1369, 1.442695
    %v1371 = vpow.pop %v1370
    %v1372 = vadd.f32 %v1371, 1.0
    %v1373 = vrcp.pop %v1372
    %v1374 = vmul.f32 %v1372, %v1373
    %v1375 = vsub.f32 1.0, %v1374
    %v1376 = vmul.f32 %v1373, %v1375
    %v1377 = vadd.f32 %v1373, %v1376
    %vm1378 = vweird.f32 %v1372
    %vm1379 = vweird.f32 %v1373
    %vm1380 = vmor %vm1378, %vm1379
    %v1381 = vsel %vm1380, %v1373, %v1377
    %v1382 = vand.u32 2147483647, %v1372
    %vm1383 = vcmp.eq.f32.partialorder %v1382, 8.507059e+37
    %v1384 = vand.u32 %v1372, 2147483648
    %v1385 = vor.u32 1.1754944e-38, %v1384
    %v1386 = vsel %vm1383, %v1385, %v1381
    %v1387 = vmul.f32 1.0, %v1386
    %v1388 = vxor.u32 %v1366, 2147483648
    %v1389 = vmul.f32 %v1388, 1.442695
    %v1390 = vpow.pop %v1389
    %v1391 = vadd.f32 %v1390, 1.0
    %v1392 = vrcp.pop %v1391
    %v1393 = vmul.f32 %v1391, %v1392
    %v1394 = vsub.f32 1.0, %v1393
    %v1395 = vmul.f32 %v1392, %v1394
    %v1396 = vadd.f32 %v1392, %v1395
    %vm1397 = vweird.f32 %v1391
    %vm1398 = vweird.f32 %v1392
    %vm1399 = vmor %vm1397, %vm1398
    %v1400 = vsel %vm1399, %v1392, %v1396
    %v1401 = vand.u32 2147483647, %v1391
    %vm1402 = vcmp.eq.f32.partialorder %v1401, 8.507059e+37
    %v1403 = vand.u32 %v1391, 2147483648
    %v1404 = vor.u32 1.1754944e-38, %v1403
    %v1405 = vsel %vm1402, %v1404, %v1400
    %v1406 = vmul.f32 1.0, %v1405
    %v1407 = vtanh.pop %v1367
    %v1408 = vxor.u32 %v1368, 2147483648
    %v1409 = vmul.f32 %v1408, 1.442695
    %v1410 = vpow.pop %v1409
    %v1411 = vadd.f32 %v1410, 1.0
    %v1412 = vrcp.pop %v1411
    %v1413 = vmul.f32 %v1411, %v1412
    %v1414 = vsub.f32 1.0, %v1413
    %v1415 = vmul.f32 %v1412, %v1414
    %v1416 = vadd.f32 %v1412, %v1415
    %vm1417 = vweird.f32 %v1411
    %vm1418 = vweird.f32 %v1412
    %vm1419 = vmor %vm1417, %vm1418
    %v1420 = vsel %vm1419, %v1412, %v1416
    %v1421 = vand.u32 2147483647, %v1411
    %vm1422 = vcmp.eq.f32.partialorder %v1421, 8.507059e+37
    %v1423 = vand.u32 %v1411, 2147483648
    %v1424 = vor.u32 1.1754944e-38, %v1423
    %v1425 = vsel %vm1422, %v1424, %v1420
    %v1426 = vmul.f32 1.0, %v1425
    %v1427 = vmul.f32 %v1406, %v1209
    %v1428 = vmul.f32 %v1387, %v1407
    %v1429 = vadd.f32 %v1427, %v1428
    %v1430 = vtanh.pop %v1429
    %v1431 = vmul.f32 %v1426, %v1430
    %s1432 = scalar_lea.vmem %s4, 32
    %1433 = vst [vmem:[%s1432] sm:$0xff] %v1431
    %s1434 = smul.u32 5, 4
    %s1435 = smul.addr %s1434, 8
    %s1436 = scalar_lea.vmem [#allocation4], %s1435
    %v1437 = vld [vmem:[%s1436] sm:$0xff]
    %v1438 = vld [vmem:[%s1436 + $0x8] sm:$0xff]
    %v1439 = vld [vmem:[%s1436 + $0x10] sm:$0xff]
    %v1440 = vld [vmem:[%s1436 + $0x18] sm:$0xff]
    %v1441 = vld [vmem:[#allocation7] sm:$0xff]
    %v1442 = vld [vmem:[#allocation7 + $0x8] sm:$0xff]
    %v1443 = vld [vmem:[#allocation7 + $0x10] sm:$0xff]
    %v1444 = vld [vmem:[#allocation7 + $0x18] sm:$0xff]
    %v1445 = vld [vmem:[#allocation7 + $0x20] sm:$0xff]
    %v1446 = vld [vmem:[#allocation7 + $0x28] sm:$0xff]
    %v1447 = vld [vmem:[#allocation7 + $0x30] sm:$0xff]
    %v1448 = vld [vmem:[#allocation7 + $0x38] sm:$0xff]
    %v1449 = vld [vmem:[#allocation7 + $0x40] sm:$0xff]
    %v1450 = vld [vmem:[#allocation7 + $0x48] sm:$0xff]
    %v1451 = vld [vmem:[#allocation7 + $0x50] sm:$0xff]
    %v1452 = vld [vmem:[#allocation7 + $0x58] sm:$0xff]
    %v1453 = vld [vmem:[#allocation7 + $0x60] sm:$0xff]
    %v1454 = vld [vmem:[#allocation7 + $0x68] sm:$0xff]
    %v1455 = vld [vmem:[#allocation7 + $0x70] sm:$0xff]
    %v1456 = vld [vmem:[#allocation7 + $0x78] sm:$0xff]
    %v1457 = vld [vmem:[#allocation7 + $0x80] sm:$0xff]
    %v1458 = vld [vmem:[#allocation7 + $0x88] sm:$0xff]
    %v1459 = vld [vmem:[#allocation7 + $0x90] sm:$0xff]
    %v1460 = vld [vmem:[#allocation7 + $0x98] sm:$0xff]
    %v1461 = vld [vmem:[#allocation7 + $0xa0] sm:$0xff]
    %v1462 = vld [vmem:[#allocation7 + $0xa8] sm:$0xff]
    %v1463 = vld [vmem:[#allocation7 + $0xb0] sm:$0xff]
    %v1464 = vld [vmem:[#allocation7 + $0xb8] sm:$0xff]
    %v1465 = vld [vmem:[#allocation7 + $0xc0] sm:$0xff]
    %v1466 = vld [vmem:[#allocation7 + $0xc8] sm:$0xff]
    %v1467 = vld [vmem:[#allocation7 + $0xd0] sm:$0xff]
    %v1468 = vld [vmem:[#allocation7 + $0xd8] sm:$0xff]
    %v1469 = vld [vmem:[#allocation7 + $0xe0] sm:$0xff]
    %v1470 = vld [vmem:[#allocation7 + $0xe8] sm:$0xff]
    %v1471 = vld [vmem:[#allocation7 + $0xf0] sm:$0xff]
    %v1472 = vld [vmem:[#allocation7 + $0xf8] sm:$0xff]
    %v1473 = vld [vmem:[#allocation7 + $0x100] sm:$0xff]
    %v1474 = vld [vmem:[#allocation7 + $0x108] sm:$0xff]
    %v1475 = vld [vmem:[#allocation7 + $0x110] sm:$0xff]
    %v1476 = vld [vmem:[#allocation7 + $0x118] sm:$0xff]
    %v1477 = vld [vmem:[#allocation7 + $0x120] sm:$0xff]
    %v1478 = vld [vmem:[#allocation7 + $0x128] sm:$0xff]
    %v1479 = vld [vmem:[#allocation7 + $0x130] sm:$0xff]
    %v1480 = vld [vmem:[#allocation7 + $0x138] sm:$0xff]
    %v1481 = vld [vmem:[#allocation7 + $0x140] sm:$0xff]
    %v1482 = vld [vmem:[#allocation7 + $0x148] sm:$0xff]
    %v1483 = vld [vmem:[#allocation7 + $0x150] sm:$0xff]
    %v1484 = vld [vmem:[#allocation7 + $0x158] sm:$0xff]
    %v1485 = vld [vmem:[#allocation7 + $0x160] sm:$0xff]
    %v1486 = vld [vmem:[#allocation7 + $0x168] sm:$0xff]
    %v1487 = vld [vmem:[#allocation7 + $0x170] sm:$0xff]
    %v1488 = vld [vmem:[#allocation7 + $0x178] sm:$0xff]
    %v1489 = vld [vmem:[#allocation7 + $0x180] sm:$0xff]
    %v1490 = vld [vmem:[#allocation7 + $0x188] sm:$0xff]
    %v1491 = vld [vmem:[#allocation7 + $0x190] sm:$0xff]
    %v1492 = vld [vmem:[#allocation7 + $0x198] sm:$0xff]
    %v1493 = vld [vmem:[#allocation7 + $0x1a0] sm:$0xff]
    %v1494 = vld [vmem:[#allocation7 + $0x1a8] sm:$0xff]
    %v1495 = vld [vmem:[#allocation7 + $0x1b0] sm:$0xff]
    %v1496 = vld [vmem:[#allocation7 + $0x1b8] sm:$0xff]
    %v1497 = vld [vmem:[#allocation7 + $0x1c0] sm:$0xff]
    %v1498 = vld [vmem:[#allocation7 + $0x1c8] sm:$0xff]
    %v1499 = vld [vmem:[#allocation7 + $0x1d0] sm:$0xff]
    %v1500 = vld [vmem:[#allocation7 + $0x1d8] sm:$0xff]
    %v1501 = vld [vmem:[#allocation7 + $0x1e0] sm:$0xff]
    %v1502 = vld [vmem:[#allocation7 + $0x1e8] sm:$0xff]
    %v1503 = vld [vmem:[#allocation7 + $0x1f0] sm:$0xff]
    %v1504 = vld [vmem:[#allocation7 + $0x1f8] sm:$0xff]
    %1505 = vmatpush.msra.mxu0 %v1501
    %1506 = vmatpush.msra.mxu0 %v1497
    %1507 = vmatpush.msra.mxu0 %v1493
    %1508 = vmatpush.msra.mxu0 %v1489
    %1509 = vmatpush.msra.mxu0 %v1485
    %1510 = vmatpush.msra.mxu0 %v1481
    %1511 = vmatpush.msra.mxu0 %v1477
    %1512 = vmatpush.msra.mxu0 %v1473
    %1513 = vmatpush.msra.mxu0 %v1469
    %1514 = vmatpush.msra.mxu0 %v1465
    %1515 = vmatpush.msra.mxu0 %v1461
    %1516 = vmatpush.msra.mxu0 %v1457
    %1517 = vmatpush.msra.mxu0 %v1453
    %1518 = vmatpush.msra.mxu0 %v1449
    %1519 = vmatpush.msra.mxu0 %v1445
    %1520 = vmatpush.msra.mxu0 %v1441
    %1521 = vmatmul.f32.gmra.mxu0 %v1431
    %v1522 = vpop.f32.mrf.mxu0
    %v1523 = vadd.f32 0.0, %v1522
    %1524 = vdwg.mxu0
    %1525 = vmatpush.msra.mxu0 %v1502
    %1526 = vmatpush.msra.mxu0 %v1498
    %1527 = vmatpush.msra.mxu0 %v1494
    %1528 = vmatpush.msra.mxu0 %v1490
    %1529 = vmatpush.msra.mxu0 %v1486
    %1530 = vmatpush.msra.mxu0 %v1482
    %1531 = vmatpush.msra.mxu0 %v1478
    %1532 = vmatpush.msra.mxu0 %v1474
    %1533 = vmatpush.msra.mxu0 %v1470
    %1534 = vmatpush.msra.mxu0 %v1466
    %1535 = vmatpush.msra.mxu0 %v1462
    %1536 = vmatpush.msra.mxu0 %v1458
    %1537 = vmatpush.msra.mxu0 %v1454
    %1538 = vmatpush.msra.mxu0 %v1450
    %1539 = vmatpush.msra.mxu0 %v1446
    %1540 = vmatpush.msra.mxu0 %v1442
    %1541 = vmatmul.f32.gmra.mxu0 %v1431
    %v1542 = vpop.f32.mrf.mxu0
    %v1543 = vadd.f32 0.0, %v1542
    %1544 = vdwg.mxu0
    %1545 = vmatpush.msra.mxu0 %v1503
    %1546 = vmatpush.msra.mxu0 %v1499
    %1547 = vmatpush.msra.mxu0 %v1495
    %1548 = vmatpush.msra.mxu0 %v1491
    %1549 = vmatpush.msra.mxu0 %v1487
    %1550 = vmatpush.msra.mxu0 %v1483
    %1551 = vmatpush.msra.mxu0 %v1479
    %1552 = vmatpush.msra.mxu0 %v1475
    %1553 = vmatpush.msra.mxu0 %v1471
    %1554 = vmatpush.msra.mxu0 %v1467
    %1555 = vmatpush.msra.mxu0 %v1463
    %1556 = vmatpush.msra.mxu0 %v1459
    %1557 = vmatpush.msra.mxu0 %v1455
    %1558 = vmatpush.msra.mxu0 %v1451
    %1559 = vmatpush.msra.mxu0 %v1447
    %1560 = vmatpush.msra.mxu0 %v1443
    %1561 = vmatmul.f32.gmra.mxu0 %v1431
    %v1562 = vpop.f32.mrf.mxu0
    %v1563 = vadd.f32 0.0, %v1562
    %1564 = vdwg.mxu0
    %1565 = vmatpush.msra.mxu0 %v1504
    %1566 = vmatpush.msra.mxu0 %v1500
    %1567 = vmatpush.msra.mxu0 %v1496
    %1568 = vmatpush.msra.mxu0 %v1492
    %1569 = vmatpush.msra.mxu0 %v1488
    %1570 = vmatpush.msra.mxu0 %v1484
    %1571 = vmatpush.msra.mxu0 %v1480
    %1572 = vmatpush.msra.mxu0 %v1476
    %1573 = vmatpush.msra.mxu0 %v1472
    %1574 = vmatpush.msra.mxu0 %v1468
    %1575 = vmatpush.msra.mxu0 %v1464
    %1576 = vmatpush.msra.mxu0 %v1460
    %1577 = vmatpush.msra.mxu0 %v1456
    %1578 = vmatpush.msra.mxu0 %v1452
    %1579 = vmatpush.msra.mxu0 %v1448
    %1580 = vmatpush.msra.mxu0 %v1444
    %1581 = vmatmul.f32.gmra.mxu0 %v1431
    %v1582 = vpop.f32.mrf.mxu0
    %v1583 = vadd.f32 0.0, %v1582
    %1584 = vdwg.mxu0
    %v1585 = vadd.f32 %v1437, %v1523
    %v1586 = vadd.f32 %v1438, %v1543
    %v1587 = vadd.f32 %v1439, %v1563
    %v1588 = vadd.f32 %v1440, %v1583
    %v1589 = vxor.u32 %v1585, 2147483648
    %v1590 = vmul.f32 %v1589, 1.442695
    %v1591 = vpow.pop %v1590
    %v1592 = vadd.f32 %v1591, 1.0
    %v1593 = vrcp.pop %v1592
    %v1594 = vmul.f32 %v1592, %v1593
    %v1595 = vsub.f32 1.0, %v1594
    %v1596 = vmul.f32 %v1593, %v1595
    %v1597 = vadd.f32 %v1593, %v1596
    %vm1598 = vweird.f32 %v1592
    %vm1599 = vweird.f32 %v1593
    %vm1600 = vmor %vm1598, %vm1599
    %v1601 = vsel %vm1600, %v1593, %v1597
    %v1602 = vand.u32 2147483647, %v1592
    %vm1603 = vcmp.eq.f32.partialorder %v1602, 8.507059e+37
    %v1604 = vand.u32 %v1592, 2147483648
    %v1605 = vor.u32 1.1754944e-38, %v1604
    %v1606 = vsel %vm1603, %v1605, %v1601
    %v1607 = vmul.f32 1.0, %v1606
    %v1608 = vxor.u32 %v1586, 2147483648
    %v1609 = vmul.f32 %v1608, 1.442695
    %v1610 = vpow.pop %v1609
    %v1611 = vadd.f32 %v1610, 1.0
    %v1612 = vrcp.pop %v1611
    %v1613 = vmul.f32 %v1611, %v1612
    %v1614 = vsub.f32 1.0, %v1613
    %v1615 = vmul.f32 %v1612, %v1614
    %v1616 = vadd.f32 %v1612, %v1615
    %vm1617 = vweird.f32 %v1611
    %vm1618 = vweird.f32 %v1612
    %vm1619 = vmor %vm1617, %vm1618
    %v1620 = vsel %vm1619, %v1612, %v1616
    %v1621 = vand.u32 2147483647, %v1611
    %vm1622 = vcmp.eq.f32.partialorder %v1621, 8.507059e+37
    %v1623 = vand.u32 %v1611, 2147483648
    %v1624 = vor.u32 1.1754944e-38, %v1623
    %v1625 = vsel %vm1622, %v1624, %v1620
    %v1626 = vmul.f32 1.0, %v1625
    %v1627 = vtanh.pop %v1587
    %v1628 = vxor.u32 %v1588, 2147483648
    %v1629 = vmul.f32 %v1628, 1.442695
    %v1630 = vpow.pop %v1629
    %v1631 = vadd.f32 %v1630, 1.0
    %v1632 = vrcp.pop %v1631
    %v1633 = vmul.f32 %v1631, %v1632
    %v1634 = vsub.f32 1.0, %v1633
    %v1635 = vmul.f32 %v1632, %v1634
    %v1636 = vadd.f32 %v1632, %v1635
    %vm1637 = vweird.f32 %v1631
    %vm1638 = vweird.f32 %v1632
    %vm1639 = vmor %vm1637, %vm1638
    %v1640 = vsel %vm1639, %v1632, %v1636
    %v1641 = vand.u32 2147483647, %v1631
    %vm1642 = vcmp.eq.f32.partialorder %v1641, 8.507059e+37
    %v1643 = vand.u32 %v1631, 2147483648
    %v1644 = vor.u32 1.1754944e-38, %v1643
    %v1645 = vsel %vm1642, %v1644, %v1640
    %v1646 = vmul.f32 1.0, %v1645
    %v1647 = vmul.f32 %v1626, %v1429
    %v1648 = vmul.f32 %v1607, %v1627
    %v1649 = vadd.f32 %v1647, %v1648
    %v1650 = vtanh.pop %v1649
    %v1651 = vmul.f32 %v1646, %v1650
    %s1652 = scalar_lea.vmem %s4, 40
    %1653 = vst [vmem:[%s1652] sm:$0xff] %v1651
    %s1654 = smul.u32 6, 4
    %s1655 = smul.addr %s1654, 8
    %s1656 = scalar_lea.vmem [#allocation4], %s1655
    %v1657 = vld [vmem:[%s1656] sm:$0xff]
    %v1658 = vld [vmem:[%s1656 + $0x8] sm:$0xff]
    %v1659 = vld [vmem:[%s1656 + $0x10] sm:$0xff]
    %v1660 = vld [vmem:[%s1656 + $0x18] sm:$0xff]
    %v1661 = vld [vmem:[#allocation7] sm:$0xff]
    %v1662 = vld [vmem:[#allocation7 + $0x8] sm:$0xff]
    %v1663 = vld [vmem:[#allocation7 + $0x10] sm:$0xff]
    %v1664 = vld [vmem:[#allocation7 + $0x18] sm:$0xff]
    %v1665 = vld [vmem:[#allocation7 + $0x20] sm:$0xff]
    %v1666 = vld [vmem:[#allocation7 + $0x28] sm:$0xff]
    %v1667 = vld [vmem:[#allocation7 + $0x30] sm:$0xff]
    %v1668 = vld [vmem:[#allocation7 + $0x38] sm:$0xff]
    %v1669 = vld [vmem:[#allocation7 + $0x40] sm:$0xff]
    %v1670 = vld [vmem:[#allocation7 + $0x48] sm:$0xff]
    %v1671 = vld [vmem:[#allocation7 + $0x50] sm:$0xff]
    %v1672 = vld [vmem:[#allocation7 + $0x58] sm:$0xff]
    %v1673 = vld [vmem:[#allocation7 + $0x60] sm:$0xff]
    %v1674 = vld [vmem:[#allocation7 + $0x68] sm:$0xff]
    %v1675 = vld [vmem:[#allocation7 + $0x70] sm:$0xff]
    %v1676 = vld [vmem:[#allocation7 + $0x78] sm:$0xff]
    %v1677 = vld [vmem:[#allocation7 + $0x80] sm:$0xff]
    %v1678 = vld [vmem:[#allocation7 + $0x88] sm:$0xff]
    %v1679 = vld [vmem:[#allocation7 + $0x90] sm:$0xff]
    %v1680 = vld [vmem:[#allocation7 + $0x98] sm:$0xff]
    %v1681 = vld [vmem:[#allocation7 + $0xa0] sm:$0xff]
    %v1682 = vld [vmem:[#allocation7 + $0xa8] sm:$0xff]
    %v1683 = vld [vmem:[#allocation7 + $0xb0] sm:$0xff]
    %v1684 = vld [vmem:[#allocation7 + $0xb8] sm:$0xff]
    %v1685 = vld [vmem:[#allocation7 + $0xc0] sm:$0xff]
    %v1686 = vld [vmem:[#allocation7 + $0xc8] sm:$0xff]
    %v1687 = vld [vmem:[#allocation7 + $0xd0] sm:$0xff]
    %v1688 = vld [vmem:[#allocation7 + $0xd8] sm:$0xff]
    %v1689 = vld [vmem:[#allocation7 + $0xe0] sm:$0xff]
    %v1690 = vld [vmem:[#allocation7 + $0xe8] sm:$0xff]
    %v1691 = vld [vmem:[#allocation7 + $0xf0] sm:$0xff]
    %v1692 = vld [vmem:[#allocation7 + $0xf8] sm:$0xff]
    %v1693 = vld [vmem:[#allocation7 + $0x100] sm:$0xff]
    %v1694 = vld [vmem:[#allocation7 + $0x108] sm:$0xff]
    %v1695 = vld [vmem:[#allocation7 + $0x110] sm:$0xff]
    %v1696 = vld [vmem:[#allocation7 + $0x118] sm:$0xff]
    %v1697 = vld [vmem:[#allocation7 + $0x120] sm:$0xff]
    %v1698 = vld [vmem:[#allocation7 + $0x128] sm:$0xff]
    %v1699 = vld [vmem:[#allocation7 + $0x130] sm:$0xff]
    %v1700 = vld [vmem:[#allocation7 + $0x138] sm:$0xff]
    %v1701 = vld [vmem:[#allocation7 + $0x140] sm:$0xff]
    %v1702 = vld [vmem:[#allocation7 + $0x148] sm:$0xff]
    %v1703 = vld [vmem:[#allocation7 + $0x150] sm:$0xff]
    %v1704 = vld [vmem:[#allocation7 + $0x158] sm:$0xff]
    %v1705 = vld [vmem:[#allocation7 + $0x160] sm:$0xff]
    %v1706 = vld [vmem:[#allocation7 + $0x168] sm:$0xff]
    %v1707 = vld [vmem:[#allocation7 + $0x170] sm:$0xff]
    %v1708 = vld [vmem:[#allocation7 + $0x178] sm:$0xff]
    %v1709 = vld [vmem:[#allocation7 + $0x180] sm:$0xff]
    %v1710 = vld [vmem:[#allocation7 + $0x188] sm:$0xff]
    %v1711 = vld [vmem:[#allocation7 + $0x190] sm:$0xff]
    %v1712 = vld [vmem:[#allocation7 + $0x198] sm:$0xff]
    %v1713 = vld [vmem:[#allocation7 + $0x1a0] sm:$0xff]
    %v1714 = vld [vmem:[#allocation7 + $0x1a8] sm:$0xff]
    %v1715 = vld [vmem:[#allocation7 + $0x1b0] sm:$0xff]
    %v1716 = vld [vmem:[#allocation7 + $0x1b8] sm:$0xff]
    %v1717 = vld [vmem:[#allocation7 + $0x1c0] sm:$0xff]
    %v1718 = vld [vmem:[#allocation7 + $0x1c8] sm:$0xff]
    %v1719 = vld [vmem:[#allocation7 + $0x1d0] sm:$0xff]
    %v1720 = vld [vmem:[#allocation7 + $0x1d8] sm:$0xff]
    %v1721 = vld [vmem:[#allocation7 + $0x1e0] sm:$0xff]
    %v1722 = vld [vmem:[#allocation7 + $0x1e8] sm:$0xff]
    %v1723 = vld [vmem:[#allocation7 + $0x1f0] sm:$0xff]
    %v1724 = vld [vmem:[#allocation7 + $0x1f8] sm:$0xff]
    %1725 = vmatpush.msra.mxu0 %v1721
    %1726 = vmatpush.msra.mxu0 %v1717
    %1727 = vmatpush.msra.mxu0 %v1713
    %1728 = vmatpush.msra.mxu0 %v1709
    %1729 = vmatpush.msra.mxu0 %v1705
    %1730 = vmatpush.msra.mxu0 %v1701
    %1731 = vmatpush.msra.mxu0 %v1697
    %1732 = vmatpush.msra.mxu0 %v1693
    %1733 = vmatpush.msra.mxu0 %v1689
    %1734 = vmatpush.msra.mxu0 %v1685
    %1735 = vmatpush.msra.mxu0 %v1681
    %1736 = vmatpush.msra.mxu0 %v1677
    %1737 = vmatpush.msra.mxu0 %v1673
    %1738 = vmatpush.msra.mxu0 %v1669
    %1739 = vmatpush.msra.mxu0 %v1665
    %1740 = vmatpush.msra.mxu0 %v1661
    %1741 = vmatmul.f32.gmra.mxu0 %v1651
    %v1742 = vpop.f32.mrf.mxu0
    %v1743 = vadd.f32 0.0, %v1742
    %1744 = vdwg.mxu0
    %1745 = vmatpush.msra.mxu0 %v1722
    %1746 = vmatpush.msra.mxu0 %v1718
    %1747 = vmatpush.msra.mxu0 %v1714
    %1748 = vmatpush.msra.mxu0 %v1710
    %1749 = vmatpush.msra.mxu0 %v1706
    %1750 = vmatpush.msra.mxu0 %v1702
    %1751 = vmatpush.msra.mxu0 %v1698
    %1752 = vmatpush.msra.mxu0 %v1694
    %1753 = vmatpush.msra.mxu0 %v1690
    %1754 = vmatpush.msra.mxu0 %v1686
    %1755 = vmatpush.msra.mxu0 %v1682
    %1756 = vmatpush.msra.mxu0 %v1678
    %1757 = vmatpush.msra.mxu0 %v1674
    %1758 = vmatpush.msra.mxu0 %v1670
    %1759 = vmatpush.msra.mxu0 %v1666
    %1760 = vmatpush.msra.mxu0 %v1662
    %1761 = vmatmul.f32.gmra.mxu0 %v1651
    %v1762 = vpop.f32.mrf.mxu0
    %v1763 = vadd.f32 0.0, %v1762
    %1764 = vdwg.mxu0
    %1765 = vmatpush.msra.mxu0 %v1723
    %1766 = vmatpush.msra.mxu0 %v1719
    %1767 = vmatpush.msra.mxu0 %v1715
    %1768 = vmatpush.msra.mxu0 %v1711
    %1769 = vmatpush.msra.mxu0 %v1707
    %1770 = vmatpush.msra.mxu0 %v1703
    %1771 = vmatpush.msra.mxu0 %v1699
    %1772 = vmatpush.msra.mxu0 %v1695
    %1773 = vmatpush.msra.mxu0 %v1691
    %1774 = vmatpush.msra.mxu0 %v1687
    %1775 = vmatpush.msra.mxu0 %v1683
    %1776 = vmatpush.msra.mxu0 %v1679
    %1777 = vmatpush.msra.mxu0 %v1675
    %1778 = vmatpush.msra.mxu0 %v1671
    %1779 = vmatpush.msra.mxu0 %v1667
    %1780 = vmatpush.msra.mxu0 %v1663
    %1781 = vmatmul.f32.gmra.mxu0 %v1651
    %v1782 = vpop.f32.mrf.mxu0
    %v1783 = vadd.f32 0.0, %v1782
    %1784 = vdwg.mxu0
    %1785 = vmatpush.msra.mxu0 %v1724
    %1786 = vmatpush.msra.mxu0 %v1720
    %1787 = vmatpush.msra.mxu0 %v1716
    %1788 = vmatpush.msra.mxu0 %v1712
    %1789 = vmatpush.msra.mxu0 %v1708
    %1790 = vmatpush.msra.mxu0 %v1704
    %1791 = vmatpush.msra.mxu0 %v1700
    %1792 = vmatpush.msra.mxu0 %v1696
    %1793 = vmatpush.msra.mxu0 %v1692
    %1794 = vmatpush.msra.mxu0 %v1688
    %1795 = vmatpush.msra.mxu0 %v1684
    %1796 = vmatpush.msra.mxu0 %v1680
    %1797 = vmatpush.msra.mxu0 %v1676
    %1798 = vmatpush.msra.mxu0 %v1672
    %1799 = vmatpush.msra.mxu0 %v1668
    %1800 = vmatpush.msra.mxu0 %v1664
    %1801 = vmatmul.f32.gmra.mxu0 %v1651
    %v1802 = vpop.f32.mrf.mxu0
    %v1803 = vadd.f32 0.0, %v1802
    %1804 = vdwg.mxu0
    %v1805 = vadd.f32 %v1657, %v1743
    %v1806 = vadd.f32 %v1658, %v1763
    %v1807 = vadd.f32 %v1659, %v1783
    %v1808 = vadd.f32 %v1660, %v1803
    %v1809 = vxor.u32 %v1805, 2147483648
    %v1810 = vmul.f32 %v1809, 1.442695
    %v1811 = vpow.pop %v1810
    %v1812 = vadd.f32 %v1811, 1.0
    %v1813 = vrcp.pop %v1812
    %v1814 = vmul.f32 %v1812, %v1813
    %v1815 = vsub.f32 1.0, %v1814
    %v1816 = vmul.f32 %v1813, %v1815
    %v1817 = vadd.f32 %v1813, %v1816
    %vm1818 = vweird.f32 %v1812
    %vm1819 = vweird.f32 %v1813
    %vm1820 = vmor %vm1818, %vm1819
    %v1821 = vsel %vm1820, %v1813, %v1817
    %v1822 = vand.u32 2147483647, %v1812
    %vm1823 = vcmp.eq.f32.partialorder %v1822, 8.507059e+37
    %v1824 = vand.u32 %v1812, 2147483648
    %v1825 = vor.u32 1.1754944e-38, %v1824
    %v1826 = vsel %vm1823, %v1825, %v1821
    %v1827 = vmul.f32 1.0, %v1826
    %v1828 = vxor.u32 %v1806, 2147483648
    %v1829 = vmul.f32 %v1828, 1.442695
    %v1830 = vpow.pop %v1829
    %v1831 = vadd.f32 %v1830, 1.0
    %v1832 = vrcp.pop %v1831
    %v1833 = vmul.f32 %v1831, %v1832
    %v1834 = vsub.f32 1.0, %v1833
    %v1835 = vmul.f32 %v1832, %v1834
    %v1836 = vadd.f32 %v1832, %v1835
    %vm1837 = vweird.f32 %v1831
    %vm1838 = vweird.f32 %v1832
    %vm1839 = vmor %vm1837, %vm1838
    %v1840 = vsel %vm1839, %v1832, %v1836
    %v1841 = vand.u32 2147483647, %v1831
    %vm1842 = vcmp.eq.f32.partialorder %v1841, 8.507059e+37
    %v1843 = vand.u32 %v1831, 2147483648
    %v1844 = vor.u32 1.1754944e-38, %v1843
    %v1845 = vsel %vm1842, %v1844, %v1840
    %v1846 = vmul.f32 1.0, %v1845
    %v1847 = vtanh.pop %v1807
    %v1848 = vxor.u32 %v1808, 2147483648
    %v1849 = vmul.f32 %v1848, 1.442695
    %v1850 = vpow.pop %v1849
    %v1851 = vadd.f32 %v1850, 1.0
    %v1852 = vrcp.pop %v1851
    %v1853 = vmul.f32 %v1851, %v1852
    %v1854 = vsub.f32 1.0, %v1853
    %v1855 = vmul.f32 %v1852, %v1854
    %v1856 = vadd.f32 %v1852, %v1855
    %vm1857 = vweird.f32 %v1851
    %vm1858 = vweird.f32 %v1852
    %vm1859 = vmor %vm1857, %vm1858
    %v1860 = vsel %vm1859, %v1852, %v1856
    %v1861 = vand.u32 2147483647, %v1851
    %vm1862 = vcmp.eq.f32.partialorder %v1861, 8.507059e+37
    %v1863 = vand.u32 %v1851, 2147483648
    %v1864 = vor.u32 1.1754944e-38, %v1863
    %v1865 = vsel %vm1862, %v1864, %v1860
    %v1866 = vmul.f32 1.0, %v1865
    %v1867 = vmul.f32 %v1846, %v1649
    %v1868 = vmul.f32 %v1827, %v1847
    %v1869 = vadd.f32 %v1867, %v1868
    %v1870 = vtanh.pop %v1869
    %v1871 = vmul.f32 %v1866, %v1870
    %s1872 = scalar_lea.vmem %s4, 48
    %1873 = vst [vmem:[%s1872] sm:$0xff] %v1871
    %s1874 = smul.u32 7, 4
    %s1875 = smul.addr %s1874, 8
    %s1876 = scalar_lea.vmem [#allocation4], %s1875
    %v1877 = vld [vmem:[%s1876] sm:$0xff]
    %v1878 = vld [vmem:[%s1876 + $0x8] sm:$0xff]
    %v1879 = vld [vmem:[%s1876 + $0x10] sm:$0xff]
    %v1880 = vld [vmem:[%s1876 + $0x18] sm:$0xff]
    %v1881 = vld [vmem:[#allocation7] sm:$0xff]
    %v1882 = vld [vmem:[#allocation7 + $0x8] sm:$0xff]
    %v1883 = vld [vmem:[#allocation7 + $0x10] sm:$0xff]
    %v1884 = vld [vmem:[#allocation7 + $0x18] sm:$0xff]
    %v1885 = vld [vmem:[#allocation7 + $0x20] sm:$0xff]
    %v1886 = vld [vmem:[#allocation7 + $0x28] sm:$0xff]
    %v1887 = vld [vmem:[#allocation7 + $0x30] sm:$0xff]
    %v1888 = vld [vmem:[#allocation7 + $0x38] sm:$0xff]
    %v1889 = vld [vmem:[#allocation7 + $0x40] sm:$0xff]
    %v1890 = vld [vmem:[#allocation7 + $0x48] sm:$0xff]
    %v1891 = vld [vmem:[#allocation7 + $0x50] sm:$0xff]
    %v1892 = vld [vmem:[#allocation7 + $0x58] sm:$0xff]
    %v1893 = vld [vmem:[#allocation7 + $0x60] sm:$0xff]
    %v1894 = vld [vmem:[#allocation7 + $0x68] sm:$0xff]
    %v1895 = vld [vmem:[#allocation7 + $0x70] sm:$0xff]
    %v1896 = vld [vmem:[#allocation7 + $0x78] sm:$0xff]
    %v1897 = vld [vmem:[#allocation7 + $0x80] sm:$0xff]
    %v1898 = vld [vmem:[#allocation7 + $0x88] sm:$0xff]
    %v1899 = vld [vmem:[#allocation7 + $0x90] sm:$0xff]
    %v1900 = vld [vmem:[#allocation7 + $0x98] sm:$0xff]
    %v1901 = vld [vmem:[#allocation7 + $0xa0] sm:$0xff]
    %v1902 = vld [vmem:[#allocation7 + $0xa8] sm:$0xff]
    %v1903 = vld [vmem:[#allocation7 + $0xb0] sm:$0xff]
    %v1904 = vld [vmem:[#allocation7 + $0xb8] sm:$0xff]
    %v1905 = vld [vmem:[#allocation7 + $0xc0] sm:$0xff]
    %v1906 = vld [vmem:[#allocation7 + $0xc8] sm:$0xff]
    %v1907 = vld [vmem:[#allocation7 + $0xd0] sm:$0xff]
    %v1908 = vld [vmem:[#allocation7 + $0xd8] sm:$0xff]
    %v1909 = vld [vmem:[#allocation7 + $0xe0] sm:$0xff]
    %v1910 = vld [vmem:[#allocation7 + $0xe8] sm:$0xff]
    %v1911 = vld [vmem:[#allocation7 + $0xf0] sm:$0xff]
    %v1912 = vld [vmem:[#allocation7 + $0xf8] sm:$0xff]
    %v1913 = vld [vmem:[#allocation7 + $0x100] sm:$0xff]
    %v1914 = vld [vmem:[#allocation7 + $0x108] sm:$0xff]
    %v1915 = vld [vmem:[#allocation7 + $0x110] sm:$0xff]
    %v1916 = vld [vmem:[#allocation7 + $0x118] sm:$0xff]
    %v1917 = vld [vmem:[#allocation7 + $0x120] sm:$0xff]
    %v1918 = vld [vmem:[#allocation7 + $0x128] sm:$0xff]
    %v1919 = vld [vmem:[#allocation7 + $0x130] sm:$0xff]
    %v1920 = vld [vmem:[#allocation7 + $0x138] sm:$0xff]
    %v1921 = vld [vmem:[#allocation7 + $0x140] sm:$0xff]
    %v1922 = vld [vmem:[#allocation7 + $0x148] sm:$0xff]
    %v1923 = vld [vmem:[#allocation7 + $0x150] sm:$0xff]
    %v1924 = vld [vmem:[#allocation7 + $0x158] sm:$0xff]
    %v1925 = vld [vmem:[#allocation7 + $0x160] sm:$0xff]
    %v1926 = vld [vmem:[#allocation7 + $0x168] sm:$0xff]
    %v1927 = vld [vmem:[#allocation7 + $0x170] sm:$0xff]
    %v1928 = vld [vmem:[#allocation7 + $0x178] sm:$0xff]
    %v1929 = vld [vmem:[#allocation7 + $0x180] sm:$0xff]
    %v1930 = vld [vmem:[#allocation7 + $0x188] sm:$0xff]
    %v1931 = vld [vmem:[#allocation7 + $0x190] sm:$0xff]
    %v1932 = vld [vmem:[#allocation7 + $0x198] sm:$0xff]
    %v1933 = vld [vmem:[#allocation7 + $0x1a0] sm:$0xff]
    %v1934 = vld [vmem:[#allocation7 + $0x1a8] sm:$0xff]
    %v1935 = vld [vmem:[#allocation7 + $0x1b0] sm:$0xff]
    %v1936 = vld [vmem:[#allocation7 + $0x1b8] sm:$0xff]
    %v1937 = vld [vmem:[#allocation7 + $0x1c0] sm:$0xff]
    %v1938 = vld [vmem:[#allocation7 + $0x1c8] sm:$0xff]
    %v1939 = vld [vmem:[#allocation7 + $0x1d0] sm:$0xff]
    %v1940 = vld [vmem:[#allocation7 + $0x1d8] sm:$0xff]
    %v1941 = vld [vmem:[#allocation7 + $0x1e0] sm:$0xff]
    %v1942 = vld [vmem:[#allocation7 + $0x1e8] sm:$0xff]
    %v1943 = vld [vmem:[#allocation7 + $0x1f0] sm:$0xff]
    %v1944 = vld [vmem:[#allocation7 + $0x1f8] sm:$0xff]
    %1945 = vmatpush.msra.mxu0 %v1941
    %1946 = vmatpush.msra.mxu0 %v1937
    %1947 = vmatpush.msra.mxu0 %v1933
    %1948 = vmatpush.msra.mxu0 %v1929
    %1949 = vmatpush.msra.mxu0 %v1925
    %1950 = vmatpush.msra.mxu0 %v1921
    %1951 = vmatpush.msra.mxu0 %v1917
    %1952 = vmatpush.msra.mxu0 %v1913
    %1953 = vmatpush.msra.mxu0 %v1909
    %1954 = vmatpush.msra.mxu0 %v1905
    %1955 = vmatpush.msra.mxu0 %v1901
    %1956 = vmatpush.msra.mxu0 %v1897
    %1957 = vmatpush.msra.mxu0 %v1893
    %1958 = vmatpush.msra.mxu0 %v1889
    %1959 = vmatpush.msra.mxu0 %v1885
    %1960 = vmatpush.msra.mxu0 %v1881
    %1961 = vmatmul.f32.gmra.mxu0 %v1871
    %v1962 = vpop.f32.mrf.mxu0
    %v1963 = vadd.f32 0.0, %v1962
    %1964 = vdwg.mxu0
    %1965 = vmatpush.msra.mxu0 %v1942
    %1966 = vmatpush.msra.mxu0 %v1938
    %1967 = vmatpush.msra.mxu0 %v1934
    %1968 = vmatpush.msra.mxu0 %v1930
    %1969 = vmatpush.msra.mxu0 %v1926
    %1970 = vmatpush.msra.mxu0 %v1922
    %1971 = vmatpush.msra.mxu0 %v1918
    %1972 = vmatpush.msra.mxu0 %v1914
    %1973 = vmatpush.msra.mxu0 %v1910
    %1974 = vmatpush.msra.mxu0 %v1906
    %1975 = vmatpush.msra.mxu0 %v1902
    %1976 = vmatpush.msra.mxu0 %v1898
    %1977 = vmatpush.msra.mxu0 %v1894
    %1978 = vmatpush.msra.mxu0 %v1890
    %1979 = vmatpush.msra.mxu0 %v1886
    %1980 = vmatpush.msra.mxu0 %v1882
    %1981 = vmatmul.f32.gmra.mxu0 %v1871
    %v1982 = vpop.f32.mrf.mxu0
    %v1983 = vadd.f32 0.0, %v1982
    %1984 = vdwg.mxu0
    %1985 = vmatpush.msra.mxu0 %v1943
    %1986 = vmatpush.msra.mxu0 %v1939
    %1987 = vmatpush.msra.mxu0 %v1935
    %1988 = vmatpush.msra.mxu0 %v1931
    %1989 = vmatpush.msra.mxu0 %v1927
    %1990 = vmatpush.msra.mxu0 %v1923
    %1991 = vmatpush.msra.mxu0 %v1919
    %1992 = vmatpush.msra.mxu0 %v1915
    %1993 = vmatpush.msra.mxu0 %v1911
    %1994 = vmatpush.msra.mxu0 %v1907
    %1995 = vmatpush.msra.mxu0 %v1903
    %1996 = vmatpush.msra.mxu0 %v1899
    %1997 = vmatpush.msra.mxu0 %v1895
    %1998 = vmatpush.msra.mxu0 %v1891
    %1999 = vmatpush.msra.mxu0 %v1887
    %2000 = vmatpush.msra.mxu0 %v1883
    %2001 = vmatmul.f32.gmra.mxu0 %v1871
    %v2002 = vpop.f32.mrf.mxu0
    %v2003 = vadd.f32 0.0, %v2002
    %2004 = vdwg.mxu0
    %2005 = vmatpush.msra.mxu0 %v1944
    %2006 = vmatpush.msra.mxu0 %v1940
    %2007 = vmatpush.msra.mxu0 %v1936
    %2008 = vmatpush.msra.mxu0 %v1932
    %2009 = vmatpush.msra.mxu0 %v1928
    %2010 = vmatpush.msra.mxu0 %v1924
    %2011 = vmatpush.msra.mxu0 %v1920
    %2012 = vmatpush.msra.mxu0 %v1916
    %2013 = vmatpush.msra.mxu0 %v1912
    %2014 = vmatpush.msra.mxu0 %v1908
    %2015 = vmatpush.msra.mxu0 %v1904
    %2016 = vmatpush.msra.mxu0 %v1900
    %2017 = vmatpush.msra.mxu0 %v1896
    %2018 = vmatpush.msra.mxu0 %v1892
    %2019 = vmatpush.msra.mxu0 %v1888
    %2020 = vmatpush.msra.mxu0 %v1884
    %2021 = vmatmul.f32.gmra.mxu0 %v1871
    %v2022 = vpop.f32.mrf.mxu0
    %v2023 = vadd.f32 0.0, %v2022
    %2024 = vdwg.mxu0
    %v2025 = vadd.f32 %v1877, %v1963
    %v2026 = vadd.f32 %v1878, %v1983
    %v2027 = vadd.f32 %v1879, %v2003
    %v2028 = vadd.f32 %v1880, %v2023
    %v2029 = vxor.u32 %v2025, 2147483648
    %v2030 = vmul.f32 %v2029, 1.442695
    %v2031 = vpow.pop %v2030
    %v2032 = vadd.f32 %v2031, 1.0
    %v2033 = vrcp.pop %v2032
    %v2034 = vmul.f32 %v2032, %v2033
    %v2035 = vsub.f32 1.0, %v2034
    %v2036 = vmul.f32 %v2033, %v2035
    %v2037 = vadd.f32 %v2033, %v2036
    %vm2038 = vweird.f32 %v2032
    %vm2039 = vweird.f32 %v2033
    %vm2040 = vmor %vm2038, %vm2039
    %v2041 = vsel %vm2040, %v2033, %v2037
    %v2042 = vand.u32 2147483647, %v2032
    %vm2043 = vcmp.eq.f32.partialorder %v2042, 8.507059e+37
    %v2044 = vand.u32 %v2032, 2147483648
    %v2045 = vor.u32 1.1754944e-38, %v2044
    %v2046 = vsel %vm2043, %v2045, %v2041
    %v2047 = vmul.f32 1.0, %v2046
    %v2048 = vxor.u32 %v2026, 2147483648
    %v2049 = vmul.f32 %v2048, 1.442695
    %v2050 = vpow.pop %v2049
    %v2051 = vadd.f32 %v2050, 1.0
    %v2052 = vrcp.pop %v2051
    %v2053 = vmul.f32 %v2051, %v2052
    %v2054 = vsub.f32 1.0, %v2053
    %v2055 = vmul.f32 %v2052, %v2054
    %v2056 = vadd.f32 %v2052, %v2055
    %vm2057 = vweird.f32 %v2051
    %vm2058 = vweird.f32 %v2052
    %vm2059 = vmor %vm2057, %vm2058
    %v2060 = vsel %vm2059, %v2052, %v2056
    %v2061 = vand.u32 2147483647, %v2051
    %vm2062 = vcmp.eq.f32.partialorder %v2061, 8.507059e+37
    %v2063 = vand.u32 %v2051, 2147483648
    %v2064 = vor.u32 1.1754944e-38, %v2063
    %v2065 = vsel %vm2062, %v2064, %v2060
    %v2066 = vmul.f32 1.0, %v2065
    %v2067 = vtanh.pop %v2027
    %v2068 = vxor.u32 %v2028, 2147483648
    %v2069 = vmul.f32 %v2068, 1.442695
    %v2070 = vpow.pop %v2069
    %v2071 = vadd.f32 %v2070, 1.0
    %v2072 = vrcp.pop %v2071
    %v2073 = vmul.f32 %v2071, %v2072
    %v2074 = vsub.f32 1.0, %v2073
    %v2075 = vmul.f32 %v2072, %v2074
    %v2076 = vadd.f32 %v2072, %v2075
    %vm2077 = vweird.f32 %v2071
    %vm2078 = vweird.f32 %v2072
    %vm2079 = vmor %vm2077, %vm2078
    %v2080 = vsel %vm2079, %v2072, %v2076
    %v2081 = vand.u32 2147483647, %v2071
    %vm2082 = vcmp.eq.f32.partialorder %v2081, 8.507059e+37
    %v2083 = vand.u32 %v2071, 2147483648
    %v2084 = vor.u32 1.1754944e-38, %v2083
    %v2085 = vsel %vm2082, %v2084, %v2080
    %v2086 = vmul.f32 1.0, %v2085
    %v2087 = vmul.f32 %v2066, %v1869
    %v2088 = vmul.f32 %v2047, %v2067
    %v2089 = vadd.f32 %v2087, %v2088
    %v2090 = vtanh.pop %v2089
    %v2091 = vmul.f32 %v2086, %v2090
    %s2092 = scalar_lea.vmem %s4, 56
    %2093 = vst [vmem:[%s2092] sm:$0xff] %v2091
    %2094 = vst [vmem:[#allocation2] sm:$0xff] %v2091
    %2095 = vst [vmem:[#allocation3] sm:$0xff] %v2089
    // Predicated region
    $region30: #{_lambda_.2} parent=1 // pred_check
      _
    $region31: #{_lambda_.2} parent=1 // pred_check_branch
      %2097 = sbr.rel (0) target = $region33
    $region32: #{_lambda_.2} parent=1 // pred_region
      _
    $region33: #{_lambda_.2} parent=1 // pred_fallthru
      _
    // Predicated region
    $region34: #{_lambda_.2} parent=1 // pred_check
      _
    $region35: #{_lambda_.2} parent=1 // pred_check_branch
      %2099 = sbr.rel (0) target = $region37
    $region36: #{_lambda_.2} parent=1 // pred_region
      _
    $region37: #{_lambda_.2} parent=1 // pred_fallthru
      _
    %2100 = vsyncpa [#allocation6], 1
    %2101 = vsyncpa [#allocation8], 1

</llo_original>
